<compile_context>
chip_gen: v7x
topology: tpu7x:2x2x1
jax: 0.10.0
libtpu: 0.0.40
codegen_flags: <defaults>
</compile_context>

<pallas_src>
import numpy as np
import jax
import jax.numpy as jnp
from jax.experimental import pallas as pl
from jax.experimental.pallas import tpu as pltpu

EPS = 1e-8      # self.eps in the PyTorch module
_OFF = 127.5    # mean offset for a numerically stable one-pass variance (exact algebra)


# ----------------------------- Pallas kernels ---------------------------------------------

def _fg_stats_kernel(fg_ref, sum_ref, sumsq_ref):
    """Pass 1: per-(b, chunk, c, lane) partial sums of (fg - OFF) and (fg - OFF)^2."""
    @pl.when(pl.program_id(2) == 0)
    def _():
        sum_ref[...] = jnp.zeros_like(sum_ref)
        sumsq_ref[...] = jnp.zeros_like(sumsq_ref)

    x = fg_ref[...].astype(jnp.float32) - _OFF            # (1, C, rt, L)
    sum_ref[...] += jnp.sum(x, axis=2)[:, None]            # (1, 1, C, L): sublane reduce only
    sumsq_ref[...] += jnp.sum(x * x, axis=2)[:, None]


def _apply_kernel(coef_a_ref, coef_b_ref, fg_ref, bg_ref, alpha_ref, comp_ref, harm_ref):
    """Pass 2: harm = fg*A + B ; comp = (harm - bg/255)*alpha + bg/255."""
    fg = fg_ref[...].astype(jnp.float32)                   # (1, C, rt, L)
    a = alpha_ref[...].astype(jnp.float32)                 # (1, 1, rt, L) -> broadcast over C
    bg_s = bg_ref[...].astype(jnp.float32) * (1.0 / 255.0)
    harm = fg * coef_a_ref[...] + coef_b_ref[...]          # (1, C, 1, 1) broadcast
    harm_ref[...] = harm
    comp_ref[...] = (harm - bg_s) * a + bg_s               # == harm*a + bg_s*(1-a)


# ----------------------------- tiling heuristics -------------------------------------------

def _vmem_config():
    """(double-buffer tiling budget, vmem_limit_bytes) scaled per TPU generation."""
    try:
        cap = int(pltpu.get_tpu_info().vmem_capacity_bytes)
    except Exception:
        cap = 64 << 20
    if cap <= (64 << 20):          # v7x: 64 MiB VMEM per TensorCore
        return 8 << 20, 32 << 20
    return 16 << 20, 64 << 20      # v5e / v6e: 128 MiB physical


def _pick_layout(H, W):
    """Return (HW_pad, R, L): lane-dense layout with L a multiple of 128, R a multiple of 8.
    Ragged H*W is padded up to a multiple of 8*128 so stores stay unmasked."""
    HW = H * W
    for lanes in (512, 256, 128):
        if HW % lanes == 0 and (HW // lanes) % 8 == 0:
            return HW, HW // lanes, lanes
    HW_pad = ((HW + 1023) // 1024) * 1024
    for lanes in (512, 256, 128):
        if HW_pad % (8 * lanes) == 0:
            return HW_pad, HW_pad // lanes, lanes
    return HW_pad, HW_pad // 128, 128


def _pick_row_tile(R, per_row_bytes, vmem_budget, min_tiles=4, min_step_bytes=512 << 10):
    """Largest multiple-of-8 divisor of R whose double-buffered footprint fits the budget,
    preferring >= min_tiles grid steps (pipeline depth + megacore) while each step's DMA
    stays >= min_step_bytes."""
    cands = [d for d in range(8, R + 1, 8) if R % d == 0]
    if not cands:
        return R
    rt_max = max(8, vmem_budget // (2 * per_row_bytes))
    ok = [d for d in cands if d <= rt_max] or [cands[0]]
    rt = max(ok)
    for target in range(min_tiles, 1, -1):
        deeper = [d for d in ok if R // d >= target and d * per_row_bytes >= min_step_bytes]
        if deeper:
            return max(deeper)
    return rt


def _to_lane_dense(x, HW, HW_pad, R, L):
    """(B, C, ...) spatial-flatten to (B, C, R, L) in the caller's dtype; zero-pads ragged."""
    B, C = x.shape[0], x.shape[1]
    xf = x.reshape(B, C, HW)
    if HW_pad != HW:
        xf = jnp.pad(xf, ((0, 0), (0, 0), (0, HW_pad - HW)))
    return xf.reshape(B, C, R, L)


# ----------------------------- forward wrapper ----------------------------------------------

def patched_harmonizer_forward(fg_rgb, bg_rgb, alpha, grid_weights):
    """Returns (composite, fg_harm), both (B, C, H, W) float32 — same as the PyTorch forward."""
    B, C, H, W = fg_rgb.shape
    Hb, Wb = bg_rgb.shape[2], bg_rgb.shape[3]
    HW = H * W
    n = float(HW)
    nm1 = max(n - 1.0, 1.0)                    # unbiased divisor (guard degenerate 1px input)

    HW_pad, R, L = _pick_layout(H, W)
    pad = HW_pad - HW
    budget, vmem_limit = _vmem_config()

    # Inputs keep their native dtype; the f32 cast happens on the VPU inside the kernels.
    fg = _to_lane_dense(fg_rgb, HW, HW_pad, R, L)                       # (B, C, R, L)
    al = _to_lane_dense(alpha, HW, HW_pad, R, L)                        # (B, 1, R, L)

    # F.interpolate(bg_rgb, size=(H, W)), default mode='nearest': src = floor(dst * in / out).
    # ONE flat gather (no (B,C,H,Wb) intermediate), kept in the caller's dtype.
    hi = (np.arange(H) * Hb) // H
    wi = (np.arange(W) * Wb) // W
    flat_idx = (hi[:, None] * Wb + wi[None, :]).reshape(-1)
    bg_up = jnp.take(bg_rgb.reshape(B, C, Hb * Wb),
                     jnp.asarray(flat_idx, dtype=jnp.int32), axis=2)    # (B, C, HW)
    bg_up = _to_lane_dense(bg_up.reshape(B, C, H, W), HW, HW_pad, R, L)

    # Exact mean / unbiased std of the *upsampled* bg, from the small bg via replication
    # counts (no HW-sized HBM read for statistics), with the _OFF shift for f32 accuracy.
    cnt = (np.bincount(hi, minlength=Hb)[:, None]
           * np.bincount(wi, minlength=Wb)[None, :]).astype(np.float32)
    cnt = jnp.asarray(cnt)
    bgc = bg_rgb.astype(jnp.float32) - _OFF
    bg_s1 = jnp.sum(bgc * cnt, axis=(2, 3))                             # (B, C)
    bg_s2 = jnp.sum(bgc * bgc * cnt, axis=(2, 3))
    bg_mean = _OFF + bg_s1 / n
    bg_std = jnp.sqrt(jnp.maximum(bg_s2 - bg_s1 * bg_s1 / n, 0.0) / nm1)

    # ---- pass 1: pipelined per-(b, c) fg partial-sum reduction -------------------------------
    elt = fg.dtype.itemsize
    rt1 = _pick_row_tile(R, per_row_bytes=C * L * elt, vmem_budget=budget,
                         min_tiles=4, min_step_bytes=256 << 10)
    n1 = R // rt1
    if B == 1 and n1 >= 2 and n1 % 2 == 0:     # let both v7x TensorCores drive the fg read
        S, T1 = 2, n1 // 2
    else:
        S, T1 = 1, n1

    fg_sum, fg_sumsq = pl.pallas_call(
        _fg_stats_kernel,
        out_shape=(jax.ShapeDtypeStruct((B, S, C, L), jnp.float32),
                   jax.ShapeDtypeStruct((B, S, C, L), jnp.float32)),
        grid=(B, S, T1),
        in_specs=[pl.BlockSpec((1, C, rt1, L),
                               lambda b, s, t: (b, 0, s * T1 + t, 0))],
        out_specs=(pl.BlockSpec((1, 1, C, L), lambda b, s, t: (b, s, 0, 0)),
                   pl.BlockSpec((1, 1, C, L), lambda b, s, t: (b, s, 0, 0))),
        compiler_params=pltpu.CompilerParams(
            dimension_semantics=("parallel", "parallel", "arbitrary"),
            vmem_limit_bytes=vmem_limit),
        cost_estimate=pl.CostEstimate(
            flops=3 * B * C * HW_pad, transcendentals=0,
            bytes_accessed=B * C * HW_pad * elt + 2 * B * S * C * L * 4),
    )(fg)

    # ---- tiny finalize (B*C scalars) in plain JAX --------------------------------------------
    s1 = jnp.sum(fg_sum, axis=(1, 3)) + pad * _OFF            # undo zero-pad contribution
    s2 = jnp.sum(fg_sumsq, axis=(1, 3)) - pad * _OFF * _OFF
    fg_mean = _OFF + s1 / n
    fg_std = jnp.sqrt(jnp.maximum(s2 - s1 * s1 / n, 0.0) / nm1)

    w = grid_weights.astype(jnp.float32)
    # grid_count == 1: the single patch covers the whole image, so "local" == "global"
    # statistics and the w0/w1 blend collapses to (w0 + w1) * normalized.
    # TODO(synk): grid_count > 1 would need per-patch statistics; not implemented here.
    w_sum = w[0] + w[1]
    scale = bg_std / (fg_std + EPS)
    coef_a = (w_sum * scale)[:, :, None, None]                          # (B, C, 1, 1)
    coef_b = (w_sum * (bg_mean - fg_mean * scale))[:, :, None, None]    # (B, C, 1, 1)

    # ---- pass 2: pipelined, fully parallel apply + composite ---------------------------------
    per_row2 = (C * fg.dtype.itemsize + C * bg_up.dtype.itemsize
                + al.dtype.itemsize + 2 * C * 4) * L
    rt2 = _pick_row_tile(R, per_row_bytes=per_row2, vmem_budget=budget,
                         min_tiles=4, min_step_bytes=512 << 10)
    T2 = R // rt2

    comp, harm = pl.pallas_call(
        _apply_kernel,
        out_shape=(jax.ShapeDtypeStruct((B, C, R, L), jnp.float32),
                   jax.ShapeDtypeStruct((B, C, R, L), jnp.float32)),
        grid=(B, T2),
        in_specs=[
            pl.BlockSpec((1, C, 1, 1), lambda b, t: (b, 0, 0, 0)),      # A   (resident)
            pl.BlockSpec((1, C, 1, 1), lambda b, t: (b, 0, 0, 0)),      # Bc  (resident)
            pl.BlockSpec((1, C, rt2, L), lambda b, t: (b, 0, t, 0)),    # fg
            pl.BlockSpec((1, C, rt2, L), lambda b, t: (b, 0, t, 0)),    # bg (upsampled)
            pl.BlockSpec((1, 1, rt2, L), lambda b, t: (b, 0, t, 0)),    # alpha
        ],
        out_specs=(
            pl.BlockSpec((1, C, rt2, L), lambda b, t: (b, 0, t, 0)),    # composite
            pl.BlockSpec((1, C, rt2, L), lambda b, t: (b, 0, t, 0)),    # fg_harm
        ),
        compiler_params=pltpu.CompilerParams(
            dimension_semantics=("parallel", "parallel"),
            vmem_limit_bytes=vmem_limit),
        cost_estimate=pl.CostEstimate(
            flops=7 * B * C * HW_pad, transcendentals=0,
            bytes_accessed=HW_pad * (B * C * (fg.dtype.itemsize + bg_up.dtype.itemsize + 8)
                                     + B * al.dtype.itemsize)),
    )(coef_a, coef_b, fg, bg_up, al)
    # TODO(synk): callers that only need `composite` could drop the harm output (or emit it
    # in bf16) to save another image-sized HBM write.

    if pad:
        comp = comp.reshape(B, C, HW_pad)[:, :, :HW]
        harm = harm.reshape(B, C, HW_pad)[:, :, :HW]
    return comp.reshape(B, C, H, W), harm.reshape(B, C, H, W)


# ----------------------------- pure-JAX reference & test -----------------------------------

def _reference(fg_rgb, bg_rgb, alpha, w):
    """Matches the PyTorch forward (grid_count=1, masked_stats=False, unbiased variance)."""
    B, C, H, W = fg_rgb.shape
    hi = (np.arange(H) * bg_rgb.shape[2]) // H
    wi = (np.arange(W) * bg_rgb.shape[3]) // W
    bg = jnp.take(jnp.take(bg_rgb.astype(jnp.float32), hi, axis=2), wi, axis=3)
    fg = fg_rgb.astype(jnp.float32)
    fm = fg.mean(axis=(2, 3), keepdims=True)
    bm = bg.mean(axis=(2, 3), keepdims=True)
    fs = jnp.sqrt(fg.var(axis=(2, 3), keepdims=True, ddof=1))
    bs = jnp.sqrt(bg.var(axis=(2, 3), keepdims=True, ddof=1))
    norm = (fg - fm) * (bs / (fs + EPS)) + bm
    harm = w[0] * norm + w[1] * norm
    comp = harm * alpha + (bg / 255.0) * (1.0 - alpha)
    return comp, harm


def _run_case(key, B, C, H, W, Hb, Wb):
    k1, k2, k3 = jax.random.split(key, 3)
    fg_rgb = jax.random.uniform(k1, (B, C, H, W), jnp.float32) * 255.0
    bg_rgb = jax.random.uniform(k2, (B, C, Hb, Wb), jnp.float32) * 255.0
    alpha = jax.random.uniform(k3, (B, 1, H, W), jnp.float32)
    gw = jnp.array([0.9, 0.1], dtype=jnp.float32)   # default init_weights

    comp, harm = jax.jit(patched_harmonizer_forward)(fg_rgb, bg_rgb, alpha, gw)
    jax.block_until_ready((comp, harm))

    comp_ref, harm_ref = _reference(fg_rgb, bg_rgb, alpha, gw)
    assert bool(jnp.allclose(comp, comp_ref, rtol=1e-3, atol=2e-2)), \
        f"composite mismatch at shape {(B, C, H, W)}"
    assert bool(jnp.allclose(harm, harm_ref, rtol=1e-3, atol=2e-2)), \
        f"fg_harm mismatch at shape {(B, C, H, W)}"


if __name__ == "__main__":
    key = jax.random.PRNGKey(0)
    k1, k2, k3 = jax.random.split(key, 3)
    # multi-tile grid, non-integer upscale (weighted bg statistics path)
    _run_case(k1, B=2, C=3, H=256, W=256, Hb=100, Wb=120)
    # B == 1 -> pass-1 spatial-chunk "parallel" split (v7x megacore), integer 4x upscale
    _run_case(k2, B=1, C=3, H=256, W=256, Hb=64, Wb=64)
    # ragged H*W -> lane-dense zero-pad path with exact statistics correction
    _run_case(k3, B=1, C=3, H=41, W=47, Hb=17, Wb=23)
    print("KERNEL_OK")
</pallas_src>

<mosaic_0001>
module attributes {stable_mosaic.version = 11 : i64} {
  func.func @_fg_stats_kernel(%arg0: i32, %arg1: i32, %arg2: i32, %arg3: memref<1x3x64x512xf32, #tpu.memory_space<vmem>>, %arg4: memref<1x1x3x512xf32, #tpu.memory_space<vmem>>, %arg5: memref<1x1x3x512xf32, #tpu.memory_space<vmem>>) attributes {dimension_semantics = [#tpu.dimension_semantics<parallel>, #tpu.dimension_semantics<parallel>, #tpu.dimension_semantics<arbitrary>], iteration_bounds = array<i64: 2, 1, 2>, scalar_prefetch = 0 : i64, scratch_operands = 0 : i64, tpu.core_type = #tpu.core_type<tc>, window_params = [{transform_indices = @transform_0, window_bounds = array<i64: 1, 3, 64, 512>}, {transform_indices = @transform_1, window_bounds = array<i64: 1, 1, 3, 512>}, {transform_indices = @transform_2, window_bounds = array<i64: 1, 1, 3, 512>}]} {
    %c0_i32 = arith.constant 0 : i32
    %0 = arith.cmpi eq, %arg2, %c0_i32 : i32
    %1 = arith.extui %0 : i1 to i32
    %c0_i32_0 = arith.constant 0 : i32
    %2 = arith.cmpi ne, %1, %c0_i32_0 : i32
    scf.if %2 {
      %cst_22 = arith.constant 0.000000e+00 : f32
      %17 = vector.broadcast %cst_22 : f32 to vector<1x1x3x512xf32>
      %c0_23 = arith.constant 0 : index
      %c0_24 = arith.constant 0 : index
      %c0_25 = arith.constant 0 : index
      %c0_26 = arith.constant 0 : index
      %18 = vector.load %arg4[%c0_23, %c0_24, %c0_25, %c0_26] : memref<1x1x3x512xf32, #tpu.memory_space<vmem>>, vector<1x1x3x512xf32>
      tpu.vector_store %arg4[%c0_23, %c0_24, %c0_25, %c0_26], %17 {strides = array<i32>} : memref<1x1x3x512xf32, #tpu.memory_space<vmem>>, vector<1x1x3x512xf32>,
      %cst_27 = arith.constant 0.000000e+00 : f32
      %19 = vector.broadcast %cst_27 : f32 to vector<1x1x3x512xf32>
      %c0_28 = arith.constant 0 : index
      %c0_29 = arith.constant 0 : index
      %c0_30 = arith.constant 0 : index
      %c0_31 = arith.constant 0 : index
      %20 = vector.load %arg5[%c0_28, %c0_29, %c0_30, %c0_31] : memref<1x1x3x512xf32, #tpu.memory_space<vmem>>, vector<1x1x3x512xf32>
      tpu.vector_store %arg5[%c0_28, %c0_29, %c0_30, %c0_31], %19 {strides = array<i32>} : memref<1x1x3x512xf32, #tpu.memory_space<vmem>>, vector<1x1x3x512xf32>,
    } else {
    }
    %c0 = arith.constant 0 : index
    %c0_1 = arith.constant 0 : index
    %c0_2 = arith.constant 0 : index
    %c0_3 = arith.constant 0 : index
    %3 = vector.load %arg3[%c0, %c0_1, %c0_2, %c0_3] : memref<1x3x64x512xf32, #tpu.memory_space<vmem>>, vector<1x3x64x512xf32>
    %cst = arith.constant 1.275000e+02 : f32
    %4 = vector.broadcast %cst : f32 to vector<1x3x64x512xf32>
    %5 = arith.subf %3, %4 : vector<1x3x64x512xf32>
    %c0_4 = arith.constant 0 : index
    %c0_5 = arith.constant 0 : index
    %c0_6 = arith.constant 0 : index
    %c0_7 = arith.constant 0 : index
    %6 = vector.load %arg4[%c0_4, %c0_5, %c0_6, %c0_7] : memref<1x1x3x512xf32, #tpu.memory_space<vmem>>, vector<1x1x3x512xf32>
    %cst_8 = arith.constant dense<0.000000e+00> : vector<1x3x512xf32>
    %7 = vector.multi_reduction <add>, %5, %cst_8 [2] : vector<1x3x64x512xf32> to vector<1x3x512xf32>
    %8 = vector.shape_cast %7 : vector<1x3x512xf32> to vector<1x1x3x512xf32>
    %9 = arith.addf %6, %8 : vector<1x1x3x512xf32>
    %c0_9 = arith.constant 0 : index
    %c0_10 = arith.constant 0 : index
    %c0_11 = arith.constant 0 : index
    %c0_12 = arith.constant 0 : index
    %10 = vector.load %arg4[%c0_9, %c0_10, %c0_11, %c0_12] : memref<1x1x3x512xf32, #tpu.memory_space<vmem>>, vector<1x1x3x512xf32>
    tpu.vector_store %arg4[%c0_9, %c0_10, %c0_11, %c0_12], %9 {strides = array<i32>} : memref<1x1x3x512xf32, #tpu.memory_space<vmem>>, vector<1x1x3x512xf32>,
    %c0_13 = arith.constant 0 : index
    %c0_14 = arith.constant 0 : index
    %c0_15 = arith.constant 0 : index
    %c0_16 = arith.constant 0 : index
    %11 = vector.load %arg5[%c0_13, %c0_14, %c0_15, %c0_16] : memref<1x1x3x512xf32, #tpu.memory_space<vmem>>, vector<1x1x3x512xf32>
    %12 = arith.mulf %5, %5 : vector<1x3x64x512xf32>
    %cst_17 = arith.constant dense<0.000000e+00> : vector<1x3x512xf32>
    %13 = vector.multi_reduction <add>, %12, %cst_17 [2] : vector<1x3x64x512xf32> to vector<1x3x512xf32>
    %14 = vector.shape_cast %13 : vector<1x3x512xf32> to vector<1x1x3x512xf32>
    %15 = arith.addf %11, %14 : vector<1x1x3x512xf32>
    %c0_18 = arith.constant 0 : index
    %c0_19 = arith.constant 0 : index
    %c0_20 = arith.constant 0 : index
    %c0_21 = arith.constant 0 : index
    %16 = vector.load %arg5[%c0_18, %c0_19, %c0_20, %c0_21] : memref<1x1x3x512xf32, #tpu.memory_space<vmem>>, vector<1x1x3x512xf32>
    tpu.vector_store %arg5[%c0_18, %c0_19, %c0_20, %c0_21], %15 {strides = array<i32>} : memref<1x1x3x512xf32, #tpu.memory_space<vmem>>, vector<1x1x3x512xf32>,
    return
  }
  func.func @transform_0(%arg0: i32, %arg1: i32, %arg2: i32) -> (i32, i32, i32, i32) {
    %c2_i32 = arith.constant 2 : i32
    %0 = arith.muli %arg1, %c2_i32 : i32
    %1 = arith.addi %0, %arg2 : i32
    %c0_i32 = arith.constant 0 : i32
    %c0_i32_0 = arith.constant 0 : i32
    %c0_i32_1 = arith.constant 0 : i32
    return %arg0, %c0_i32, %1, %c0_i32_0 : i32, i32, i32, i32
  }
  func.func @transform_1(%arg0: i32, %arg1: i32, %arg2: i32) -> (i32, i32, i32, i32) {
    %c0_i32 = arith.constant 0 : i32
    %c0_i32_0 = arith.constant 0 : i32
    %c0_i32_1 = arith.constant 0 : i32
    return %arg0, %arg1, %c0_i32, %c0_i32_0 : i32, i32, i32, i32
  }
  func.func @transform_2(%arg0: i32, %arg1: i32, %arg2: i32) -> (i32, i32, i32, i32) {
    %c0_i32 = arith.constant 0 : i32
    %c0_i32_0 = arith.constant 0 : i32
    %c0_i32_1 = arith.constant 0 : i32
    return %arg0, %arg1, %c0_i32, %c0_i32_0 : i32, i32, i32, i32
  }
}

module attributes {stable_mosaic.version = 11 : i64} {
  func.func @_apply_kernel(%arg0: i32, %arg1: i32, %arg2: memref<1x3x1x1xf32, #tpu.memory_space<vmem>>, %arg3: memref<1x3x1x1xf32, #tpu.memory_space<vmem>>, %arg4: memref<1x3x32x512xf32, #tpu.memory_space<vmem>>, %arg5: memref<1x3x32x512xf32, #tpu.memory_space<vmem>>, %arg6: memref<1x1x32x512xf32, #tpu.memory_space<vmem>>, %arg7: memref<1x3x32x512xf32, #tpu.memory_space<vmem>>, %arg8: memref<1x3x32x512xf32, #tpu.memory_space<vmem>>) attributes {dimension_semantics = [#tpu.dimension_semantics<parallel>, #tpu.dimension_semantics<parallel>], iteration_bounds = array<i64: 2, 4>, scalar_prefetch = 0 : i64, scratch_operands = 0 : i64, tpu.core_type = #tpu.core_type<tc>, window_params = [{transform_indices = @transform_0, window_bounds = array<i64: 1, 3, 1, 1>}, {transform_indices = @transform_1, window_bounds = array<i64: 1, 3, 1, 1>}, {transform_indices = @transform_2, window_bounds = array<i64: 1, 3, 32, 512>}, {transform_indices = @transform_3, window_bounds = array<i64: 1, 3, 32, 512>}, {transform_indices = @transform_4, window_bounds = array<i64: 1, 1, 32, 512>}, {transform_indices = @transform_5, window_bounds = array<i64: 1, 3, 32, 512>}, {transform_indices = @transform_6, window_bounds = array<i64: 1, 3, 32, 512>}]} {
    %c0 = arith.constant 0 : index
    %c0_0 = arith.constant 0 : index
    %c0_1 = arith.constant 0 : index
    %c0_2 = arith.constant 0 : index
    %0 = vector.load %arg4[%c0, %c0_0, %c0_1, %c0_2] : memref<1x3x32x512xf32, #tpu.memory_space<vmem>>, vector<1x3x32x512xf32>
    %c0_3 = arith.constant 0 : index
    %c0_4 = arith.constant 0 : index
    %c0_5 = arith.constant 0 : index
    %c0_6 = arith.constant 0 : index
    %1 = vector.load %arg6[%c0_3, %c0_4, %c0_5, %c0_6] : memref<1x1x32x512xf32, #tpu.memory_space<vmem>>, vector<1x1x32x512xf32>
    %c0_7 = arith.constant 0 : index
    %c0_8 = arith.constant 0 : index
    %c0_9 = arith.constant 0 : index
    %c0_10 = arith.constant 0 : index
    %2 = vector.load %arg5[%c0_7, %c0_8, %c0_9, %c0_10] : memref<1x3x32x512xf32, #tpu.memory_space<vmem>>, vector<1x3x32x512xf32>
    %cst = arith.constant 0.00392156886 : f32
    %3 = vector.broadcast %cst : f32 to vector<1x3x32x512xf32>
    %4 = arith.mulf %2, %3 : vector<1x3x32x512xf32>
    %c0_11 = arith.constant 0 : index
    %c0_12 = arith.constant 0 : index
    %c0_13 = arith.constant 0 : index
    %c0_14 = arith.constant 0 : index
    %5 = vector.load %arg2[%c0_11, %c0_12, %c0_13, %c0_14] : memref<1x3x1x1xf32, #tpu.memory_space<vmem>>, vector<1x3x1x1xf32>
    %6 = vector.broadcast %5 : vector<1x3x1x1xf32> to vector<1x3x32x512xf32>
    %7 = arith.mulf %0, %6 : vector<1x3x32x512xf32>
    %c0_15 = arith.constant 0 : index
    %c0_16 = arith.constant 0 : index
    %c0_17 = arith.constant 0 : index
    %c0_18 = arith.constant 0 : index
    %8 = vector.load %arg3[%c0_15, %c0_16, %c0_17, %c0_18] : memref<1x3x1x1xf32, #tpu.memory_space<vmem>>, vector<1x3x1x1xf32>
    %9 = vector.broadcast %8 : vector<1x3x1x1xf32> to vector<1x3x32x512xf32>
    %10 = arith.addf %7, %9 : vector<1x3x32x512xf32>
    %c0_19 = arith.constant 0 : index
    %c0_20 = arith.constant 0 : index
    %c0_21 = arith.constant 0 : index
    %c0_22 = arith.constant 0 : index
    %11 = vector.load %arg8[%c0_19, %c0_20, %c0_21, %c0_22] : memref<1x3x32x512xf32, #tpu.memory_space<vmem>>, vector<1x3x32x512xf32>
    tpu.vector_store %arg8[%c0_19, %c0_20, %c0_21, %c0_22], %10 {strides = array<i32>} : memref<1x3x32x512xf32, #tpu.memory_space<vmem>>, vector<1x3x32x512xf32>,
    %12 = arith.subf %10, %4 : vector<1x3x32x512xf32>
    %13 = vector.broadcast %1 : vector<1x1x32x512xf32> to vector<1x3x32x512xf32>
    %14 = arith.mulf %12, %13 : vector<1x3x32x512xf32>
    %15 = arith.addf %14, %4 : vector<1x3x32x512xf32>
    %c0_23 = arith.constant 0 : index
    %c0_24 = arith.constant 0 : index
    %c0_25 = arith.constant 0 : index
    %c0_26 = arith.constant 0 : index
    %16 = vector.load %arg7[%c0_23, %c0_24, %c0_25, %c0_26] : memref<1x3x32x512xf32, #tpu.memory_space<vmem>>, vector<1x3x32x512xf32>
    tpu.vector_store %arg7[%c0_23, %c0_24, %c0_25, %c0_26], %15 {strides = array<i32>} : memref<1x3x32x512xf32, #tpu.memory_space<vmem>>, vector<1x3x32x512xf32>,
    return
  }
  func.func @transform_0(%arg0: i32, %arg1: i32) -> (i32, i32, i32, i32) {
    %c0_i32 = arith.constant 0 : i32
    %c0_i32_0 = arith.constant 0 : i32
    %c0_i32_1 = arith.constant 0 : i32
    %c0_i32_2 = arith.constant 0 : i32
    return %arg0, %c0_i32, %c0_i32_0, %c0_i32_1 : i32, i32, i32, i32
  }
  func.func @transform_1(%arg0: i32, %arg1: i32) -> (i32, i32, i32, i32) {
    %c0_i32 = arith.constant 0 : i32
    %c0_i32_0 = arith.constant 0 : i32
    %c0_i32_1 = arith.constant 0 : i32
    %c0_i32_2 = arith.constant 0 : i32
    return %arg0, %c0_i32, %c0_i32_0, %c0_i32_1 : i32, i32, i32, i32
  }
  func.func @transform_2(%arg0: i32, %arg1: i32) -> (i32, i32, i32, i32) {
    %c0_i32 = arith.constant 0 : i32
    %c0_i32_0 = arith.constant 0 : i32
    %c0_i32_1 = arith.constant 0 : i32
    return %arg0, %c0_i32, %arg1, %c0_i32_0 : i32, i32, i32, i32
  }
  func.func @transform_3(%arg0: i32, %arg1: i32) -> (i32, i32, i32, i32) {
    %c0_i32 = arith.constant 0 : i32
    %c0_i32_0 = arith.constant 0 : i32
    %c0_i32_1 = arith.constant 0 : i32
    return %arg0, %c0_i32, %arg1, %c0_i32_0 : i32, i32, i32, i32
  }
  func.func @transform_4(%arg0: i32, %arg1: i32) -> (i32, i32, i32, i32) {
    %c0_i32 = arith.constant 0 : i32
    %c0_i32_0 = arith.constant 0 : i32
    %c0_i32_1 = arith.constant 0 : i32
    return %arg0, %c0_i32, %arg1, %c0_i32_0 : i32, i32, i32, i32
  }
  func.func @transform_5(%arg0: i32, %arg1: i32) -> (i32, i32, i32, i32) {
    %c0_i32 = arith.constant 0 : i32
    %c0_i32_0 = arith.constant 0 : i32
    %c0_i32_1 = arith.constant 0 : i32
    return %arg0, %c0_i32, %arg1, %c0_i32_0 : i32, i32, i32, i32
  }
  func.func @transform_6(%arg0: i32, %arg1: i32) -> (i32, i32, i32, i32) {
    %c0_i32 = arith.constant 0 : i32
    %c0_i32_0 = arith.constant 0 : i32
    %c0_i32_1 = arith.constant 0 : i32
    return %arg0, %c0_i32, %arg1, %c0_i32_0 : i32, i32, i32, i32
  }
}

</mosaic_0001>

<llo_original>
// kernel: patched_harmonizer_forward.2
$region0: #{patched_harmonizer_forward.2}
  #allocation0 [shape = 'u32[]', space=smem, size = 0x4, offset = 0x4, fixed_abs, tag = 'smem constant byte address 0x4 - core index']
  #allocation1 [shape = 'u32[144,128]{1,0:T(1,128)}', space=vmem, size = 0x12000, scoped, tag = 'internal scratch']
  %s0 = inlined_call_operand.vmem [shape: f32[2,3,128,512], index: 0, kind: input, shape index: {}]
  %s1 = inlined_call_operand.vmem [shape: f32[2,1,3,512], index: 1, kind: output, shape index: {0}]
  %s2 = inlined_call_operand.vmem [shape: f32[2,1,3,512], index: 2, kind: output, shape index: {1}]
  %3 = xla_tuple %s1, %s2
  %s4 = sld [smem:[#allocation0]]
  $region72: #{patched_harmonizer_forward.2} parent=0
    _
  %s6 = ssub.s32 1, %s4
  %s7 = scalar_select 0, %s6, %s4
  $region1: #{patched_harmonizer_forward.2} parent=0
    #allocation2 [shape = 'u8[786432]{0}', space=vmem, size = 0xc0000, scoped, tag = 'input window, operand 0']
    loop: start=0, step=1, limit=6
    $region2: #{patched_harmonizer_forward.2} parent=1 // loop_pre_header
      _
    $region3: #{patched_harmonizer_forward.2} parent=1 // loop_header
      %s9 = sphi 0, %s13
      %p10 = scmp.ge.s32.totalorder %s9, 6
      %s16 = sphi 0, %s35
      %s17 = sphi 0, %s31
      %s18 = sphi 0, %s27
      %s19 = sphi 0, %s16
      %s20 = sphi 0, %s17
      %s21 = sphi 0, %s18
      %s22 = sphi 0, %s19
      %s23 = sphi 0, %s20
      %s24 = sphi 0, %s21
      %s44 = sphi 0, %s46
      %s47 = sphi 0, %s44
      %s48 = sphi 0, %s47
      %s64 = sphi 0, %s48
      %s72 = sphi 0, %s74
      %s75 = sphi 0, %s72
      %s76 = sphi 0, %s75
      %s92 = sphi 0, %s76
      %s100 = sphi 0, %s102
      %s103 = sphi 0, %s100
      %s104 = sphi 0, %s103
      %s120 = sphi 0, %s104
    $region4: #{patched_harmonizer_forward.2} parent=1 // loop_header_branch
      %12 = sbr.rel (%p10) target = $region8
    $region5: #{patched_harmonizer_forward.2} parent=1 // loop_body
      %s14 = ssub.s32 %s9, 1
      %s15 = ssub.s32 %s9, 2
      %s25 = sadd.s32 1, %s18
      %p26 = scmp.ge.s32.totalorder %s25, 2
      %s27 = scalar_select %p26, 0, %s25
      %s28 = sadd.s32 1, %s17
      %s29 = scalar_select %p26, %s28, %s17
      %p30 = scmp.ge.s32.totalorder %s29, 1
      %s31 = scalar_select %p30, 0, %s29
      %s32 = sadd.s32 1, %s16
      %s33 = scalar_select %p30, %s32, %s16
      %p34 = scmp.ge.s32.totalorder %s33, 2
      %s35 = scalar_select %p34, 0, %s33
      %s36 = smul.u32 %s17, 2
      %s37 = sadd.s32 %s36, %s18
      %s38 = smul.u32 %s31, 2
      %s39 = sadd.s32 %s38, %s27
      %s40 = ssub.s32 %s16, %s35
      %s41 = ssub.s32 %s37, %s39
      %s42 = sor.u32 %s40, %s41
      %p43 = scmp.eq.s32.totalorder %s42, 0
      %s45 = sadd.s32 %s44, 1
      %s46 = scalar_select %p43, %s44, %s45
      %p49 = pneg %p43
      %p50 = scmp.eq.s32.totalorder %s9, 3
      %p51 = por %p49, %p50
      %p52 = scmp.ne.s32.totalorder %s44, %s47
      %p53 = scmp.eq.s32.totalorder %s9, 0
      %p54 = por %p52, %p53
      %p55 = scmp.ne.s32.totalorder %s44, %s47
      %p56 = scmp.eq.s32.totalorder %s14, 3
      %p57 = por %p55, %p56
      %p58 = scmp.ne.s32.totalorder %s47, %s48
      %p59 = scmp.eq.s32.totalorder %s14, 0
      %p60 = por %p58, %p59
      %p61 = scmp.ne.s32.totalorder %s47, %s48
      %p62 = scmp.eq.s32.totalorder %s15, 3
      %p63 = por %p61, %p62
      %p65 = scmp.ne.s32.totalorder %s48, %s64
      %p66 = scmp.eq.s32.totalorder %s15, 0
      %p67 = por %p65, %p66
      %s68 = ssub.s32 %s16, %s35
      %s69 = ssub.s32 %s17, %s31
      %s70 = sor.u32 %s68, %s69
      %p71 = scmp.eq.s32.totalorder %s70, 0
      %s73 = sadd.s32 %s72, 1
      %s74 = scalar_select %p71, %s72, %s73
      %p77 = pneg %p71
      %p78 = scmp.eq.s32.totalorder %s9, 3
      %p79 = por %p77, %p78
      %p80 = scmp.ne.s32.totalorder %s72, %s75
      %p81 = scmp.eq.s32.totalorder %s9, 0
      %p82 = por %p80, %p81
      %p83 = scmp.ne.s32.totalorder %s72, %s75
      %p84 = scmp.eq.s32.totalorder %s14, 3
      %p85 = por %p83, %p84
      %p86 = scmp.ne.s32.totalorder %s75, %s76
      %p87 = scmp.eq.s32.totalorder %s14, 0
      %p88 = por %p86, %p87
      %p89 = scmp.ne.s32.totalorder %s75, %s76
      %p90 = scmp.eq.s32.totalorder %s15, 3
      %p91 = por %p89, %p90
      %p93 = scmp.ne.s32.totalorder %s76, %s92
      %p94 = scmp.eq.s32.totalorder %s15, 0
      %p95 = por %p93, %p94
      %s96 = ssub.s32 %s16, %s35
      %s97 = ssub.s32 %s17, %s31
      %s98 = sor.u32 %s96, %s97
      %p99 = scmp.eq.s32.totalorder %s98, 0
      %s101 = sadd.s32 %s100, 1
      %s102 = scalar_select %p99, %s100, %s101
      %p105 = pneg %p99
      %p106 = scmp.eq.s32.totalorder %s9, 3
      %p107 = por %p105, %p106
      %p108 = scmp.ne.s32.totalorder %s100, %s103
      %p109 = scmp.eq.s32.totalorder %s9, 0
      %p110 = por %p108, %p109
      %p111 = scmp.ne.s32.totalorder %s100, %s103
      %p112 = scmp.eq.s32.totalorder %s14, 3
      %p113 = por %p111, %p112
      %p114 = scmp.ne.s32.totalorder %s103, %s104
      %p115 = scmp.eq.s32.totalorder %s14, 0
      %p116 = por %p114, %p115
      %p117 = scmp.ne.s32.totalorder %s103, %s104
      %p118 = scmp.eq.s32.totalorder %s15, 3
      %p119 = por %p117, %p118
      %p121 = scmp.ne.s32.totalorder %s104, %s120
      %p122 = scmp.eq.s32.totalorder %s15, 0
      %p123 = por %p121, %p122
      %p124 = scmp.le.s32.totalorder 1, %s9
      %p125 = scmp.lt.s32.totalorder %s9, 5
      %p126 = pnand %p124, %p125
      %p127 = pneg %p126
      // Predicated region
      $region9: #{patched_harmonizer_forward.2} parent=5 // pred_check
        _
      $region10: #{patched_harmonizer_forward.2} parent=5 // pred_check_branch
        %129 = sbr.rel (%p126) target = $region12
      $region11: #{patched_harmonizer_forward.2} parent=5 // pred_region
        %s130 = ssub.s32 %s9, 1
      $region12: #{patched_harmonizer_forward.2} parent=5 // pred_fallthru
        _
      %p131 = scmp.lt.s32.totalorder %s9, 4
      // Predicated region
      $region13: #{patched_harmonizer_forward.2} parent=5 // pred_check
        %p132 = pneg %p131
      $region14: #{patched_harmonizer_forward.2} parent=5 // pred_check_branch
        %134 = sbr.rel (%p132) target = $region16
      $region15: #{patched_harmonizer_forward.2} parent=5 // pred_region
        // Predicated region
        $region17: #{patched_harmonizer_forward.2} parent=15 // pred_check
          %p135 = pneg %p54
        $region18: #{patched_harmonizer_forward.2} parent=15 // pred_check_branch
          %137 = sbr.rel (%p135) target = $region20
        $region19: #{patched_harmonizer_forward.2} parent=15 // pred_region
          %s138 = sand.u32 %s44, 1
          %s139 = sand.u32 %s44, 1
          %s140 = smul.addr %s139, 768
          %s141 = scalar_lea.vmem [#allocation2], %s140
          %s142 = smul.u32 %s17, 2
          %s143 = sadd.s32 %s142, %s18
          %s144 = smul.u32 8, %s143
          %s145 = smul.addr %s144, 4
          %s146 = smul.addr %s16, 192
          %s147 = sadd.s32 %s145, %s146
          %s148 = smul.addr %s147, 8
          %s149 = scalar_lea.vmem %s0, %s148
          // Predicated region
          $region21: #{patched_harmonizer_forward.2} parent=19 // pred_check
            _
          $region22: #{patched_harmonizer_forward.2} parent=19 // pred_check_branch
            %151 = sbr.rel (0) target = $region24
          $region23: #{patched_harmonizer_forward.2} parent=19 // pred_region
            // Predicated region
            $region25: #{patched_harmonizer_forward.2} parent=23 // pred_check
              _
            $region26: #{patched_harmonizer_forward.2} parent=23 // pred_check_branch
              %153 = sbr.rel (0) target = $region28
            $region27: #{patched_harmonizer_forward.2} parent=23 // pred_region
              loop: start=0, step=1, limit=1
              $region29: #{patched_harmonizer_forward.2} parent=27 // loop_pre_header
                _
              $region30: #{patched_harmonizer_forward.2} parent=27 // loop_header
                %s155 = sphi 0, %s159
                %p156 = scmp.ge.s32.totalorder %s155, 1
                %s160 = sphi %s149, %s149
                %s161 = sphi %s141, %s141
              $region31: #{patched_harmonizer_forward.2} parent=27 // loop_header_branch
                %158 = sbr.rel (%p156) target = $region35
              $region32: #{patched_harmonizer_forward.2} parent=27 // loop_body
                %v162 = vld [vmem:[%s160] sm:$0xff]
                %163 = vst [vmem:[%s161] sm:$0xff] %v162
                %v164 = vld [vmem:[%s160 + $0x8] sm:$0xff]
                %165 = vst [vmem:[%s161 + $0x8] sm:$0xff] %v164
                %v166 = vld [vmem:[%s160 + $0x10] sm:$0xff]
                %167 = vst [vmem:[%s161 + $0x10] sm:$0xff] %v166
                %v168 = vld [vmem:[%s160 + $0x18] sm:$0xff]
                %169 = vst [vmem:[%s161 + $0x18] sm:$0xff] %v168
                %v170 = vld [vmem:[%s160 + $0x20] sm:$0xff]
                %171 = vst [vmem:[%s161 + $0x20] sm:$0xff] %v170
                %v172 = vld [vmem:[%s160 + $0x28] sm:$0xff]
                %173 = vst [vmem:[%s161 + $0x28] sm:$0xff] %v172
                %v174 = vld [vmem:[%s160 + $0x30] sm:$0xff]
                %175 = vst [vmem:[%s161 + $0x30] sm:$0xff] %v174
                %v176 = vld [vmem:[%s160 + $0x38] sm:$0xff]
                %177 = vst [vmem:[%s161 + $0x38] sm:$0xff] %v176
                %v178 = vld [vmem:[%s160 + $0x40] sm:$0xff]
                %179 = vst [vmem:[%s161 + $0x40] sm:$0xff] %v178
                %v180 = vld [vmem:[%s160 + $0x48] sm:$0xff]
                %181 = vst [vmem:[%s161 + $0x48] sm:$0xff] %v180
                %v182 = vld [vmem:[%s160 + $0x50] sm:$0xff]
                %183 = vst [vmem:[%s161 + $0x50] sm:$0xff] %v182
                %v184 = vld [vmem:[%s160 + $0x58] sm:$0xff]
                %185 = vst [vmem:[%s161 + $0x58] sm:$0xff] %v184
                %v186 = vld [vmem:[%s160 + $0x60] sm:$0xff]
                %187 = vst [vmem:[%s161 + $0x60] sm:$0xff] %v186
                %v188 = vld [vmem:[%s160 + $0x68] sm:$0xff]
                %189 = vst [vmem:[%s161 + $0x68] sm:$0xff] %v188
                %v190 = vld [vmem:[%s160 + $0x70] sm:$0xff]
                %191 = vst [vmem:[%s161 + $0x70] sm:$0xff] %v190
                %v192 = vld [vmem:[%s160 + $0x78] sm:$0xff]
                %193 = vst [vmem:[%s161 + $0x78] sm:$0xff] %v192
                %v194 = vld [vmem:[%s160 + $0x80] sm:$0xff]
                %195 = vst [vmem:[%s161 + $0x80] sm:$0xff] %v194
                %v196 = vld [vmem:[%s160 + $0x88] sm:$0xff]
                %197 = vst [vmem:[%s161 + $0x88] sm:$0xff] %v196
                %v198 = vld [vmem:[%s160 + $0x90] sm:$0xff]
                %199 = vst [vmem:[%s161 + $0x90] sm:$0xff] %v198
                %v200 = vld [vmem:[%s160 + $0x98] sm:$0xff]
                %201 = vst [vmem:[%s161 + $0x98] sm:$0xff] %v200
                %v202 = vld [vmem:[%s160 + $0xa0] sm:$0xff]
                %203 = vst [vmem:[%s161 + $0xa0] sm:$0xff] %v202
                %v204 = vld [vmem:[%s160 + $0xa8] sm:$0xff]
                %205 = vst [vmem:[%s161 + $0xa8] sm:$0xff] %v204
                %v206 = vld [vmem:[%s160 + $0xb0] sm:$0xff]
                %207 = vst [vmem:[%s161 + $0xb0] sm:$0xff] %v206
                %v208 = vld [vmem:[%s160 + $0xb8] sm:$0xff]
                %209 = vst [vmem:[%s161 + $0xb8] sm:$0xff] %v208
                %v210 = vld [vmem:[%s160 + $0xc0] sm:$0xff]
                %211 = vst [vmem:[%s161 + $0xc0] sm:$0xff] %v210
                %v212 = vld [vmem:[%s160 + $0xc8] sm:$0xff]
                %213 = vst [vmem:[%s161 + $0xc8] sm:$0xff] %v212
                %v214 = vld [vmem:[%s160 + $0xd0] sm:$0xff]
                %215 = vst [vmem:[%s161 + $0xd0] sm:$0xff] %v214
                %v216 = vld [vmem:[%s160 + $0xd8] sm:$0xff]
                %217 = vst [vmem:[%s161 + $0xd8] sm:$0xff] %v216
                %v218 = vld [vmem:[%s160 + $0xe0] sm:$0xff]
                %219 = vst [vmem:[%s161 + $0xe0] sm:$0xff] %v218
                %v220 = vld [vmem:[%s160 + $0xe8] sm:$0xff]
                %221 = vst [vmem:[%s161 + $0xe8] sm:$0xff] %v220
                %v222 = vld [vmem:[%s160 + $0xf0] sm:$0xff]
                %223 = vst [vmem:[%s161 + $0xf0] sm:$0xff] %v222
                %v224 = vld [vmem:[%s160 + $0xf8] sm:$0xff]
                %225 = vst [vmem:[%s161 + $0xf8] sm:$0xff] %v224
                %v226 = vld [vmem:[%s160 + $0x200] sm:$0xff]
                %227 = vst [vmem:[%s161 + $0x100] sm:$0xff] %v226
                %v228 = vld [vmem:[%s160 + $0x208] sm:$0xff]
                %229 = vst [vmem:[%s161 + $0x108] sm:$0xff] %v228
                %v230 = vld [vmem:[%s160 + $0x210] sm:$0xff]
                %231 = vst [vmem:[%s161 + $0x110] sm:$0xff] %v230
                %v232 = vld [vmem:[%s160 + $0x218] sm:$0xff]
                %233 = vst [vmem:[%s161 + $0x118] sm:$0xff] %v232
                %v234 = vld [vmem:[%s160 + $0x220] sm:$0xff]
                %235 = vst [vmem:[%s161 + $0x120] sm:$0xff] %v234
                %v236 = vld [vmem:[%s160 + $0x228] sm:$0xff]
                %237 = vst [vmem:[%s161 + $0x128] sm:$0xff] %v236
                %v238 = vld [vmem:[%s160 + $0x230] sm:$0xff]
                %239 = vst [vmem:[%s161 + $0x130] sm:$0xff] %v238
                %v240 = vld [vmem:[%s160 + $0x238] sm:$0xff]
                %241 = vst [vmem:[%s161 + $0x138] sm:$0xff] %v240
                %v242 = vld [vmem:[%s160 + $0x240] sm:$0xff]
                %243 = vst [vmem:[%s161 + $0x140] sm:$0xff] %v242
                %v244 = vld [vmem:[%s160 + $0x248] sm:$0xff]
                %245 = vst [vmem:[%s161 + $0x148] sm:$0xff] %v244
                %v246 = vld [vmem:[%s160 + $0x250] sm:$0xff]
                %247 = vst [vmem:[%s161 + $0x150] sm:$0xff] %v246
                %v248 = vld [vmem:[%s160 + $0x258] sm:$0xff]
                %249 = vst [vmem:[%s161 + $0x158] sm:$0xff] %v248
                %v250 = vld [vmem:[%s160 + $0x260] sm:$0xff]
                %251 = vst [vmem:[%s161 + $0x160] sm:$0xff] %v250
                %v252 = vld [vmem:[%s160 + $0x268] sm:$0xff]
                %253 = vst [vmem:[%s161 + $0x168] sm:$0xff] %v252
                %v254 = vld [vmem:[%s160 + $0x270] sm:$0xff]
                %255 = vst [vmem:[%s161 + $0x170] sm:$0xff] %v254
                %v256 = vld [vmem:[%s160 + $0x278] sm:$0xff]
                %257 = vst [vmem:[%s161 + $0x178] sm:$0xff] %v256
                %v258 = vld [vmem:[%s160 + $0x280] sm:$0xff]
                %259 = vst [vmem:[%s161 + $0x180] sm:$0xff] %v258
                %v260 = vld [vmem:[%s160 + $0x288] sm:$0xff]
                %261 = vst [vmem:[%s161 + $0x188] sm:$0xff] %v260
                %v262 = vld [vmem:[%s160 + $0x290] sm:$0xff]
                %263 = vst [vmem:[%s161 + $0x190] sm:$0xff] %v262
                %v264 = vld [vmem:[%s160 + $0x298] sm:$0xff]
                %265 = vst [vmem:[%s161 + $0x198] sm:$0xff] %v264
                %v266 = vld [vmem:[%s160 + $0x2a0] sm:$0xff]
                %267 = vst [vmem:[%s161 + $0x1a0] sm:$0xff] %v266
                %v268 = vld [vmem:[%s160 + $0x2a8] sm:$0xff]
                %269 = vst [vmem:[%s161 + $0x1a8] sm:$0xff] %v268
                %v270 = vld [vmem:[%s160 + $0x2b0] sm:$0xff]
                %271 = vst [vmem:[%s161 + $0x1b0] sm:$0xff] %v270
                %v272 = vld [vmem:[%s160 + $0x2b8] sm:$0xff]
                %273 = vst [vmem:[%s161 + $0x1b8] sm:$0xff] %v272
                %v274 = vld [vmem:[%s160 + $0x2c0] sm:$0xff]
                %275 = vst [vmem:[%s161 + $0x1c0] sm:$0xff] %v274
                %v276 = vld [vmem:[%s160 + $0x2c8] sm:$0xff]
                %277 = vst [vmem:[%s161 + $0x1c8] sm:$0xff] %v276
                %v278 = vld [vmem:[%s160 + $0x2d0] sm:$0xff]
                %279 = vst [vmem:[%s161 + $0x1d0] sm:$0xff] %v278
                %v280 = vld [vmem:[%s160 + $0x2d8] sm:$0xff]
                %281 = vst [vmem:[%s161 + $0x1d8] sm:$0xff] %v280
                %v282 = vld [vmem:[%s160 + $0x2e0] sm:$0xff]
                %283 = vst [vmem:[%s161 + $0x1e0] sm:$0xff] %v282
                %v284 = vld [vmem:[%s160 + $0x2e8] sm:$0xff]
                %285 = vst [vmem:[%s161 + $0x1e8] sm:$0xff] %v284
                %v286 = vld [vmem:[%s160 + $0x2f0] sm:$0xff]
                %287 = vst [vmem:[%s161 + $0x1f0] sm:$0xff] %v286
                %v288 = vld [vmem:[%s160 + $0x2f8] sm:$0xff]
                %289 = vst [vmem:[%s161 + $0x1f8] sm:$0xff] %v288
                %v290 = vld [vmem:[%s160 + $0x400] sm:$0xff]
                %291 = vst [vmem:[%s161 + $0x200] sm:$0xff] %v290
                %v292 = vld [vmem:[%s160 + $0x408] sm:$0xff]
                %293 = vst [vmem:[%s161 + $0x208] sm:$0xff] %v292
                %v294 = vld [vmem:[%s160 + $0x410] sm:$0xff]
                %295 = vst [vmem:[%s161 + $0x210] sm:$0xff] %v294
                %v296 = vld [vmem:[%s160 + $0x418] sm:$0xff]
                %297 = vst [vmem:[%s161 + $0x218] sm:$0xff] %v296
                %v298 = vld [vmem:[%s160 + $0x420] sm:$0xff]
                %299 = vst [vmem:[%s161 + $0x220] sm:$0xff] %v298
                %v300 = vld [vmem:[%s160 + $0x428] sm:$0xff]
                %301 = vst [vmem:[%s161 + $0x228] sm:$0xff] %v300
                %v302 = vld [vmem:[%s160 + $0x430] sm:$0xff]
                %303 = vst [vmem:[%s161 + $0x230] sm:$0xff] %v302
                %v304 = vld [vmem:[%s160 + $0x438] sm:$0xff]
                %305 = vst [vmem:[%s161 + $0x238] sm:$0xff] %v304
                %v306 = vld [vmem:[%s160 + $0x440] sm:$0xff]
                %307 = vst [vmem:[%s161 + $0x240] sm:$0xff] %v306
                %v308 = vld [vmem:[%s160 + $0x448] sm:$0xff]
                %309 = vst [vmem:[%s161 + $0x248] sm:$0xff] %v308
                %v310 = vld [vmem:[%s160 + $0x450] sm:$0xff]
                %311 = vst [vmem:[%s161 + $0x250] sm:$0xff] %v310
                %v312 = vld [vmem:[%s160 + $0x458] sm:$0xff]
                %313 = vst [vmem:[%s161 + $0x258] sm:$0xff] %v312
                %v314 = vld [vmem:[%s160 + $0x460] sm:$0xff]
                %315 = vst [vmem:[%s161 + $0x260] sm:$0xff] %v314
                %v316 = vld [vmem:[%s160 + $0x468] sm:$0xff]
                %317 = vst [vmem:[%s161 + $0x268] sm:$0xff] %v316
                %v318 = vld [vmem:[%s160 + $0x470] sm:$0xff]
                %319 = vst [vmem:[%s161 + $0x270] sm:$0xff] %v318
                %v320 = vld [vmem:[%s160 + $0x478] sm:$0xff]
                %321 = vst [vmem:[%s161 + $0x278] sm:$0xff] %v320
                %v322 = vld [vmem:[%s160 + $0x480] sm:$0xff]
                %323 = vst [vmem:[%s161 + $0x280] sm:$0xff] %v322
                %v324 = vld [vmem:[%s160 + $0x488] sm:$0xff]
                %325 = vst [vmem:[%s161 + $0x288] sm:$0xff] %v324
                %v326 = vld [vmem:[%s160 + $0x490] sm:$0xff]
                %327 = vst [vmem:[%s161 + $0x290] sm:$0xff] %v326
                %v328 = vld [vmem:[%s160 + $0x498] sm:$0xff]
                %329 = vst [vmem:[%s161 + $0x298] sm:$0xff] %v328
                %v330 = vld [vmem:[%s160 + $0x4a0] sm:$0xff]
                %331 = vst [vmem:[%s161 + $0x2a0] sm:$0xff] %v330
                %v332 = vld [vmem:[%s160 + $0x4a8] sm:$0xff]
                %333 = vst [vmem:[%s161 + $0x2a8] sm:$0xff] %v332
                %v334 = vld [vmem:[%s160 + $0x4b0] sm:$0xff]
                %335 = vst [vmem:[%s161 + $0x2b0] sm:$0xff] %v334
                %v336 = vld [vmem:[%s160 + $0x4b8] sm:$0xff]
                %337 = vst [vmem:[%s161 + $0x2b8] sm:$0xff] %v336
                %v338 = vld [vmem:[%s160 + $0x4c0] sm:$0xff]
                %339 = vst [vmem:[%s161 + $0x2c0] sm:$0xff] %v338
                %v340 = vld [vmem:[%s160 + $0x4c8] sm:$0xff]
                %341 = vst [vmem:[%s161 + $0x2c8] sm:$0xff] %v340
                %v342 = vld [vmem:[%s160 + $0x4d0] sm:$0xff]
                %343 = vst [vmem:[%s161 + $0x2d0] sm:$0xff] %v342
                %v344 = vld [vmem:[%s160 + $0x4d8] sm:$0xff]
                %345 = vst [vmem:[%s161 + $0x2d8] sm:$0xff] %v344
                %v346 = vld [vmem:[%s160 + $0x4e0] sm:$0xff]
                %347 = vst [vmem:[%s161 + $0x2e0] sm:$0xff] %v346
                %v348 = vld [vmem:[%s160 + $0x4e8] sm:$0xff]
                %349 = vst [vmem:[%s161 + $0x2e8] sm:$0xff] %v348
                %v350 = vld [vmem:[%s160 + $0x4f0] sm:$0xff]
                %351 = vst [vmem:[%s161 + $0x2f0] sm:$0xff] %v350
                %v352 = vld [vmem:[%s160 + $0x4f8] sm:$0xff]
                %353 = vst [vmem:[%s161 + $0x2f8] sm:$0xff] %v352
              $region33: #{patched_harmonizer_forward.2} parent=27 // loop_footer
                %s159 = sadd.s32 1, %s155
              $region34: #{patched_harmonizer_forward.2} parent=27 // loop_footer_branch
                %154 = sbr.rel target = $region30
              $region35: #{patched_harmonizer_forward.2} parent=27 // loop_exit
                _
            $region28: #{patched_harmonizer_forward.2} parent=23 // pred_fallthru
              _
            // Predicated region
            $region36: #{patched_harmonizer_forward.2} parent=23 // pred_check
              _
            $region37: #{patched_harmonizer_forward.2} parent=23 // pred_check_branch
              %355 = sbr.rel target = $region39
            $region38: #{patched_harmonizer_forward.2} parent=23 // pred_region
              _
            $region39: #{patched_harmonizer_forward.2} parent=23 // pred_fallthru
              _
          $region24: #{patched_harmonizer_forward.2} parent=19 // pred_fallthru
            _
          %356 = vnop
        $region20: #{patched_harmonizer_forward.2} parent=15 // pred_fallthru
          _
      $region16: #{patched_harmonizer_forward.2} parent=5 // pred_fallthru
        _
      %p357 = scmp.le.s32.totalorder 1, %s9
      %p358 = scmp.lt.s32.totalorder %s9, 5
      %p359 = pnand %p357, %p358
      %p360 = pneg %p359
      // Predicated region
      $region40: #{patched_harmonizer_forward.2} parent=5 // pred_check
        _
      $region41: #{patched_harmonizer_forward.2} parent=5 // pred_check_branch
        %362 = sbr.rel (%p359) target = $region43
      $region42: #{patched_harmonizer_forward.2} parent=5 // pred_region
        %s363 = ssub.s32 %s9, 1
        %s364 = sand.u32 %s47, 1
        %s365 = sand.u32 %s47, 1
        %s366 = smul.addr %s365, 768
        %s367 = scalar_lea.vmem [#allocation2], %s366
        // Predicated region
        $region44: #{patched_harmonizer_forward.2} parent=42 // pred_check
          %p368 = pneg %p60
        $region45: #{patched_harmonizer_forward.2} parent=42 // pred_check_branch
          %370 = sbr.rel (%p368) target = $region47
        $region46: #{patched_harmonizer_forward.2} parent=42 // pred_region
          _
        $region47: #{patched_harmonizer_forward.2} parent=42 // pred_fallthru
          _
        %s371 = sand.u32 %s47, 1
        %s372 = sand.u32 %s47, 1
        %s373 = smul.addr %s372, 768
        %s374 = scalar_lea.vmem [#allocation2], %s373
        %p375 = pneg %p60
        %p376 = pneg %p57
        %p377 = pneg %p88
        %p378 = pneg %p85
        %p379 = scmp.lt.s32.totalorder %s19, 1
        %s380 = scalar_select %p379, %s19, 1
        %p381 = scmp.lt.s32.totalorder %s20, 0
        %s382 = scalar_select %p381, %s20, 0
        %s383 = smul.addr %s382, 4
        %s384 = smul.addr %s380, 4
        %s385 = sadd.s32 %s383, %s384
        %s386 = smul.addr %s385, 4
        %s387 = scalar_lea.vmem %s1, %s386
        %p388 = pneg %p116
        %p389 = pneg %p113
        %p390 = scmp.lt.s32.totalorder %s19, 1
        %s391 = scalar_select %p390, %s19, 1
        %p392 = scmp.lt.s32.totalorder %s20, 0
        %s393 = scalar_select %p392, %s20, 0
        %s394 = smul.addr %s393, 4
        %s395 = smul.addr %s391, 4
        %s396 = sadd.s32 %s394, %s395
        %s397 = smul.addr %s396, 4
        %s398 = scalar_lea.vmem %s2, %s397
        %s399 = smul.u32 %s20, 2
        %s400 = sadd.s32 %s399, %s21
        %s401 = smul.u32 8, %s400
        %p402 = scmp.lt.s32.totalorder %s19, 1
        %s403 = scalar_select %p402, %s19, 1
        %p404 = scmp.lt.s32.totalorder %s20, 0
        %s405 = scalar_select %p404, %s20, 0
        %s406 = smul.addr %s405, 4
        %s407 = smul.addr %s403, 4
        %s408 = sadd.s32 %s406, %s407
        %s409 = smul.addr %s408, 4
        %s410 = scalar_lea.vmem %s1, %s409
        %p411 = scmp.lt.s32.totalorder %s19, 1
        %s412 = scalar_select %p411, %s19, 1
        %p413 = scmp.lt.s32.totalorder %s20, 0
        %s414 = scalar_select %p413, %s20, 0
        %s415 = smul.addr %s414, 4
        %s416 = smul.addr %s412, 4
        %s417 = sadd.s32 %s415, %s416
        %s418 = smul.addr %s417, 4
        %s419 = scalar_lea.vmem %s2, %s418
        %p420 = scmp.eq.s32.totalorder %s21, 0
        // Predicated region
        $region48: #{patched_harmonizer_forward.2} parent=42 // pred_check
          %p421 = pneg %p420
        $region49: #{patched_harmonizer_forward.2} parent=42 // pred_check_branch
          %423 = sbr.rel (%p421) target = $region51
        $region50: #{patched_harmonizer_forward.2} parent=42 // pred_region
          %424 = vst [vmem:[%s410] sm:$0x77] 0.0
          %425 = vst [vmem:[%s410 + $0x8] sm:$0x77] 0.0
          %426 = vst [vmem:[%s419] sm:$0x77] 0.0
          %427 = vst [vmem:[%s419 + $0x8] sm:$0x77] 0.0
        $region51: #{patched_harmonizer_forward.2} parent=42 // pred_fallthru
          _
        %v428 = vld [vmem:[%s367] sm:$0xff]
        %v429 = vld [vmem:[%s367 + $0x8] sm:$0xff]
        %v430 = vld [vmem:[%s367 + $0x10] sm:$0xff]
        %v431 = vld [vmem:[%s367 + $0x18] sm:$0xff]
        %v432 = vld [vmem:[%s367 + $0x20] sm:$0xff]
        %v433 = vld [vmem:[%s367 + $0x28] sm:$0xff]
        %v434 = vld [vmem:[%s367 + $0x30] sm:$0xff]
        %v435 = vld [vmem:[%s367 + $0x38] sm:$0xff]
        %v436 = vld [vmem:[%s367 + $0x40] sm:$0xff]
        %v437 = vld [vmem:[%s367 + $0x48] sm:$0xff]
        %v438 = vld [vmem:[%s367 + $0x50] sm:$0xff]
        %v439 = vld [vmem:[%s367 + $0x58] sm:$0xff]
        %v440 = vld [vmem:[%s367 + $0x60] sm:$0xff]
        %v441 = vld [vmem:[%s367 + $0x68] sm:$0xff]
        %v442 = vld [vmem:[%s367 + $0x70] sm:$0xff]
        %v443 = vld [vmem:[%s367 + $0x78] sm:$0xff]
        %v444 = vld [vmem:[%s367 + $0x80] sm:$0xff]
        %v445 = vld [vmem:[%s367 + $0x88] sm:$0xff]
        %v446 = vld [vmem:[%s367 + $0x90] sm:$0xff]
        %v447 = vld [vmem:[%s367 + $0x98] sm:$0xff]
        %v448 = vld [vmem:[%s367 + $0xa0] sm:$0xff]
        %v449 = vld [vmem:[%s367 + $0xa8] sm:$0xff]
        %v450 = vld [vmem:[%s367 + $0xb0] sm:$0xff]
        %v451 = vld [vmem:[%s367 + $0xb8] sm:$0xff]
        %v452 = vld [vmem:[%s367 + $0xc0] sm:$0xff]
        %v453 = vld [vmem:[%s367 + $0xc8] sm:$0xff]
        %v454 = vld [vmem:[%s367 + $0xd0] sm:$0xff]
        %v455 = vld [vmem:[%s367 + $0xd8] sm:$0xff]
        %v456 = vld [vmem:[%s367 + $0xe0] sm:$0xff]
        %v457 = vld [vmem:[%s367 + $0xe8] sm:$0xff]
        %v458 = vld [vmem:[%s367 + $0xf0] sm:$0xff]
        %v459 = vld [vmem:[%s367 + $0xf8] sm:$0xff]
        %v460 = vld [vmem:[%s367 + $0x100] sm:$0xff]
        %v461 = vld [vmem:[%s367 + $0x108] sm:$0xff]
        %v462 = vld [vmem:[%s367 + $0x110] sm:$0xff]
        %v463 = vld [vmem:[%s367 + $0x118] sm:$0xff]
        %v464 = vld [vmem:[%s367 + $0x120] sm:$0xff]
        %v465 = vld [vmem:[%s367 + $0x128] sm:$0xff]
        %v466 = vld [vmem:[%s367 + $0x130] sm:$0xff]
        %v467 = vld [vmem:[%s367 + $0x138] sm:$0xff]
        %v468 = vld [vmem:[%s367 + $0x140] sm:$0xff]
        %v469 = vld [vmem:[%s367 + $0x148] sm:$0xff]
        %v470 = vld [vmem:[%s367 + $0x150] sm:$0xff]
        %v471 = vld [vmem:[%s367 + $0x158] sm:$0xff]
        %v472 = vld [vmem:[%s367 + $0x160] sm:$0xff]
        %v473 = vld [vmem:[%s367 + $0x168] sm:$0xff]
        %v474 = vld [vmem:[%s367 + $0x170] sm:$0xff]
        %v475 = vld [vmem:[%s367 + $0x178] sm:$0xff]
        %v476 = vld [vmem:[%s367 + $0x180] sm:$0xff]
        %v477 = vld [vmem:[%s367 + $0x188] sm:$0xff]
        %v478 = vld [vmem:[%s367 + $0x190] sm:$0xff]
        %v479 = vld [vmem:[%s367 + $0x198] sm:$0xff]
        %v480 = vld [vmem:[%s367 + $0x1a0] sm:$0xff]
        %v481 = vld [vmem:[%s367 + $0x1a8] sm:$0xff]
        %v482 = vld [vmem:[%s367 + $0x1b0] sm:$0xff]
        %v483 = vld [vmem:[%s367 + $0x1b8] sm:$0xff]
        %v484 = vld [vmem:[%s367 + $0x1c0] sm:$0xff]
        %v485 = vld [vmem:[%s367 + $0x1c8] sm:$0xff]
        %v486 = vld [vmem:[%s367 + $0x1d0] sm:$0xff]
        %v487 = vld [vmem:[%s367 + $0x1d8] sm:$0xff]
        %v488 = vld [vmem:[%s367 + $0x1e0] sm:$0xff]
        %v489 = vld [vmem:[%s367 + $0x1e8] sm:$0xff]
        %v490 = vld [vmem:[%s367 + $0x1f0] sm:$0xff]
        %v491 = vld [vmem:[%s367 + $0x1f8] sm:$0xff]
        %v492 = vld [vmem:[%s367 + $0x200] sm:$0xff]
        %v493 = vld [vmem:[%s367 + $0x208] sm:$0xff]
        %v494 = vld [vmem:[%s367 + $0x210] sm:$0xff]
        %v495 = vld [vmem:[%s367 + $0x218] sm:$0xff]
        %v496 = vld [vmem:[%s367 + $0x220] sm:$0xff]
        %v497 = vld [vmem:[%s367 + $0x228] sm:$0xff]
        %v498 = vld [vmem:[%s367 + $0x230] sm:$0xff]
        %v499 = vld [vmem:[%s367 + $0x238] sm:$0xff]
        %v500 = vld [vmem:[%s367 + $0x240] sm:$0xff]
        %v501 = vld [vmem:[%s367 + $0x248] sm:$0xff]
        %v502 = vld [vmem:[%s367 + $0x250] sm:$0xff]
        %v503 = vld [vmem:[%s367 + $0x258] sm:$0xff]
        %v504 = vld [vmem:[%s367 + $0x260] sm:$0xff]
        %v505 = vld [vmem:[%s367 + $0x268] sm:$0xff]
        %v506 = vld [vmem:[%s367 + $0x270] sm:$0xff]
        %v507 = vld [vmem:[%s367 + $0x278] sm:$0xff]
        %v508 = vld [vmem:[%s367 + $0x280] sm:$0xff]
        %v509 = vld [vmem:[%s367 + $0x288] sm:$0xff]
        %v510 = vld [vmem:[%s367 + $0x290] sm:$0xff]
        %v511 = vld [vmem:[%s367 + $0x298] sm:$0xff]
        %v512 = vld [vmem:[%s367 + $0x2a0] sm:$0xff]
        %v513 = vld [vmem:[%s367 + $0x2a8] sm:$0xff]
        %v514 = vld [vmem:[%s367 + $0x2b0] sm:$0xff]
        %v515 = vld [vmem:[%s367 + $0x2b8] sm:$0xff]
        %v516 = vld [vmem:[%s367 + $0x2c0] sm:$0xff]
        %v517 = vld [vmem:[%s367 + $0x2c8] sm:$0xff]
        %v518 = vld [vmem:[%s367 + $0x2d0] sm:$0xff]
        %v519 = vld [vmem:[%s367 + $0x2d8] sm:$0xff]
        %v520 = vld [vmem:[%s367 + $0x2e0] sm:$0xff]
        %v521 = vld [vmem:[%s367 + $0x2e8] sm:$0xff]
        %v522 = vld [vmem:[%s367 + $0x2f0] sm:$0xff]
        %v523 = vld [vmem:[%s367 + $0x2f8] sm:$0xff]
        %v524 = vsub.f32 %v428, 127.5
        %v525 = vsub.f32 %v429, 127.5
        %v526 = vsub.f32 %v430, 127.5
        %v527 = vsub.f32 %v431, 127.5
        %v528 = vsub.f32 %v432, 127.5
        %v529 = vsub.f32 %v433, 127.5
        %v530 = vsub.f32 %v434, 127.5
        %v531 = vsub.f32 %v435, 127.5
        %v532 = vsub.f32 %v436, 127.5
        %v533 = vsub.f32 %v437, 127.5
        %v534 = vsub.f32 %v438, 127.5
        %v535 = vsub.f32 %v439, 127.5
        %v536 = vsub.f32 %v440, 127.5
        %v537 = vsub.f32 %v441, 127.5
        %v538 = vsub.f32 %v442, 127.5
        %v539 = vsub.f32 %v443, 127.5
        %v540 = vsub.f32 %v444, 127.5
        %v541 = vsub.f32 %v445, 127.5
        %v542 = vsub.f32 %v446, 127.5
        %v543 = vsub.f32 %v447, 127.5
        %v544 = vsub.f32 %v448, 127.5
        %v545 = vsub.f32 %v449, 127.5
        %v546 = vsub.f32 %v450, 127.5
        %v547 = vsub.f32 %v451, 127.5
        %v548 = vsub.f32 %v452, 127.5
        %v549 = vsub.f32 %v453, 127.5
        %v550 = vsub.f32 %v454, 127.5
        %v551 = vsub.f32 %v455, 127.5
        %v552 = vsub.f32 %v456, 127.5
        %v553 = vsub.f32 %v457, 127.5
        %v554 = vsub.f32 %v458, 127.5
        %v555 = vsub.f32 %v459, 127.5
        %v556 = vsub.f32 %v460, 127.5
        %v557 = vsub.f32 %v461, 127.5
        %v558 = vsub.f32 %v462, 127.5
        %v559 = vsub.f32 %v463, 127.5
        %v560 = vsub.f32 %v464, 127.5
        %v561 = vsub.f32 %v465, 127.5
        %v562 = vsub.f32 %v466, 127.5
        %v563 = vsub.f32 %v467, 127.5
        %v564 = vsub.f32 %v468, 127.5
        %v565 = vsub.f32 %v469, 127.5
        %v566 = vsub.f32 %v470, 127.5
        %v567 = vsub.f32 %v471, 127.5
        %v568 = vsub.f32 %v472, 127.5
        %v569 = vsub.f32 %v473, 127.5
        %v570 = vsub.f32 %v474, 127.5
        %v571 = vsub.f32 %v475, 127.5
        %v572 = vsub.f32 %v476, 127.5
        %v573 = vsub.f32 %v477, 127.5
        %v574 = vsub.f32 %v478, 127.5
        %v575 = vsub.f32 %v479, 127.5
        %v576 = vsub.f32 %v480, 127.5
        %v577 = vsub.f32 %v481, 127.5
        %v578 = vsub.f32 %v482, 127.5
        %v579 = vsub.f32 %v483, 127.5
        %v580 = vsub.f32 %v484, 127.5
        %v581 = vsub.f32 %v485, 127.5
        %v582 = vsub.f32 %v486, 127.5
        %v583 = vsub.f32 %v487, 127.5
        %v584 = vsub.f32 %v488, 127.5
        %v585 = vsub.f32 %v489, 127.5
        %v586 = vsub.f32 %v490, 127.5
        %v587 = vsub.f32 %v491, 127.5
        %v588 = vsub.f32 %v492, 127.5
        %v589 = vsub.f32 %v493, 127.5
        %v590 = vsub.f32 %v494, 127.5
        %v591 = vsub.f32 %v495, 127.5
        %v592 = vsub.f32 %v496, 127.5
        %v593 = vsub.f32 %v497, 127.5
        %v594 = vsub.f32 %v498, 127.5
        %v595 = vsub.f32 %v499, 127.5
        %v596 = vsub.f32 %v500, 127.5
        %v597 = vsub.f32 %v501, 127.5
        %v598 = vsub.f32 %v502, 127.5
        %v599 = vsub.f32 %v503, 127.5
        %v600 = vsub.f32 %v504, 127.5
        %v601 = vsub.f32 %v505, 127.5
        %v602 = vsub.f32 %v506, 127.5
        %v603 = vsub.f32 %v507, 127.5
        %v604 = vsub.f32 %v508, 127.5
        %v605 = vsub.f32 %v509, 127.5
        %v606 = vsub.f32 %v510, 127.5
        %v607 = vsub.f32 %v511, 127.5
        %v608 = vsub.f32 %v512, 127.5
        %v609 = vsub.f32 %v513, 127.5
        %v610 = vsub.f32 %v514, 127.5
        %v611 = vsub.f32 %v515, 127.5
        %v612 = vsub.f32 %v516, 127.5
        %v613 = vsub.f32 %v517, 127.5
        %v614 = vsub.f32 %v518, 127.5
        %v615 = vsub.f32 %v519, 127.5
        %v616 = vsub.f32 %v520, 127.5
        %v617 = vsub.f32 %v521, 127.5
        %v618 = vsub.f32 %v522, 127.5
        %v619 = vsub.f32 %v523, 127.5
        %v620 = vld [vmem:[%s410] sm:$0x77]
        %v621 = vld [vmem:[%s410 + $0x8] sm:$0x77]
        %v622 = vadd.f32 %v524, %v528
        %v623 = vadd.f32 %v622, %v532
        %v624 = vadd.f32 %v623, %v536
        %v625 = vadd.f32 %v624, %v540
        %v626 = vadd.f32 %v625, %v544
        %v627 = vadd.f32 %v626, %v548
        %v628 = vadd.f32 %v627, %v552
        %v629 = vrot.slane %v628, 4
        %v630 = vadd.f32 %v628, %v629
        %v631 = vrot.slane %v630, 2
        %v632 = vadd.f32 %v630, %v631
        %v633 = vrot.slane %v632, 1
        %v634 = vadd.f32 %v632, %v633
        %v635 = vadd.f32 %v525, %v529
        %v636 = vadd.f32 %v635, %v533
        %v637 = vadd.f32 %v636, %v537
        %v638 = vadd.f32 %v637, %v541
        %v639 = vadd.f32 %v638, %v545
        %v640 = vadd.f32 %v639, %v549
        %v641 = vadd.f32 %v640, %v553
        %v642 = vrot.slane %v641, 4
        %v643 = vadd.f32 %v641, %v642
        %v644 = vrot.slane %v643, 2
        %v645 = vadd.f32 %v643, %v644
        %v646 = vrot.slane %v645, 1
        %v647 = vadd.f32 %v645, %v646
        %v648 = vadd.f32 %v526, %v530
        %v649 = vadd.f32 %v648, %v534
        %v650 = vadd.f32 %v649, %v538
        %v651 = vadd.f32 %v650, %v542
        %v652 = vadd.f32 %v651, %v546
        %v653 = vadd.f32 %v652, %v550
        %v654 = vadd.f32 %v653, %v554
        %v655 = vrot.slane %v654, 4
        %v656 = vadd.f32 %v654, %v655
        %v657 = vrot.slane %v656, 2
        %v658 = vadd.f32 %v656, %v657
        %v659 = vrot.slane %v658, 1
        %v660 = vadd.f32 %v658, %v659
        %v661 = vadd.f32 %v527, %v531
        %v662 = vadd.f32 %v661, %v535
        %v663 = vadd.f32 %v662, %v539
        %v664 = vadd.f32 %v663, %v543
        %v665 = vadd.f32 %v664, %v547
        %v666 = vadd.f32 %v665, %v551
        %v667 = vadd.f32 %v666, %v555
        %v668 = vrot.slane %v667, 4
        %v669 = vadd.f32 %v667, %v668
        %v670 = vrot.slane %v669, 2
        %v671 = vadd.f32 %v669, %v670
        %v672 = vrot.slane %v671, 1
        %v673 = vadd.f32 %v671, %v672
        %v674 = vadd.f32 %v556, %v560
        %v675 = vadd.f32 %v674, %v564
        %v676 = vadd.f32 %v675, %v568
        %v677 = vadd.f32 %v676, %v572
        %v678 = vadd.f32 %v677, %v576
        %v679 = vadd.f32 %v678, %v580
        %v680 = vadd.f32 %v679, %v584
        %v681 = vrot.slane %v680, 4
        %v682 = vadd.f32 %v680, %v681
        %v683 = vrot.slane %v682, 2
        %v684 = vadd.f32 %v682, %v683
        %v685 = vrot.slane %v684, 1
        %v686 = vadd.f32 %v684, %v685
        %v687 = vadd.f32 %v557, %v561
        %v688 = vadd.f32 %v687, %v565
        %v689 = vadd.f32 %v688, %v569
        %v690 = vadd.f32 %v689, %v573
        %v691 = vadd.f32 %v690, %v577
        %v692 = vadd.f32 %v691, %v581
        %v693 = vadd.f32 %v692, %v585
        %v694 = vrot.slane %v693, 4
        %v695 = vadd.f32 %v693, %v694
        %v696 = vrot.slane %v695, 2
        %v697 = vadd.f32 %v695, %v696
        %v698 = vrot.slane %v697, 1
        %v699 = vadd.f32 %v697, %v698
        %v700 = vadd.f32 %v558, %v562
        %v701 = vadd.f32 %v700, %v566
        %v702 = vadd.f32 %v701, %v570
        %v703 = vadd.f32 %v702, %v574
        %v704 = vadd.f32 %v703, %v578
        %v705 = vadd.f32 %v704, %v582
        %v706 = vadd.f32 %v705, %v586
        %v707 = vrot.slane %v706, 4
        %v708 = vadd.f32 %v706, %v707
        %v709 = vrot.slane %v708, 2
        %v710 = vadd.f32 %v708, %v709
        %v711 = vrot.slane %v710, 1
        %v712 = vadd.f32 %v710, %v711
        %v713 = vadd.f32 %v559, %v563
        %v714 = vadd.f32 %v713, %v567
        %v715 = vadd.f32 %v714, %v571
        %v716 = vadd.f32 %v715, %v575
        %v717 = vadd.f32 %v716, %v579
        %v718 = vadd.f32 %v717, %v583
        %v719 = vadd.f32 %v718, %v587
        %v720 = vrot.slane %v719, 4
        %v721 = vadd.f32 %v719, %v720
        %v722 = vrot.slane %v721, 2
        %v723 = vadd.f32 %v721, %v722
        %v724 = vrot.slane %v723, 1
        %v725 = vadd.f32 %v723, %v724
        %v726 = vadd.f32 %v588, %v592
        %v727 = vadd.f32 %v726, %v596
        %v728 = vadd.f32 %v727, %v600
        %v729 = vadd.f32 %v728, %v604
        %v730 = vadd.f32 %v729, %v608
        %v731 = vadd.f32 %v730, %v612
        %v732 = vadd.f32 %v731, %v616
        %v733 = vrot.slane %v732, 4
        %v734 = vadd.f32 %v732, %v733
        %v735 = vrot.slane %v734, 2
        %v736 = vadd.f32 %v734, %v735
        %v737 = vrot.slane %v736, 1
        %v738 = vadd.f32 %v736, %v737
        %v739 = vadd.f32 %v589, %v593
        %v740 = vadd.f32 %v739, %v597
        %v741 = vadd.f32 %v740, %v601
        %v742 = vadd.f32 %v741, %v605
        %v743 = vadd.f32 %v742, %v609
        %v744 = vadd.f32 %v743, %v613
        %v745 = vadd.f32 %v744, %v617
        %v746 = vrot.slane %v745, 4
        %v747 = vadd.f32 %v745, %v746
        %v748 = vrot.slane %v747, 2
        %v749 = vadd.f32 %v747, %v748
        %v750 = vrot.slane %v749, 1
        %v751 = vadd.f32 %v749, %v750
        %v752 = vadd.f32 %v590, %v594
        %v753 = vadd.f32 %v752, %v598
        %v754 = vadd.f32 %v753, %v602
        %v755 = vadd.f32 %v754, %v606
        %v756 = vadd.f32 %v755, %v610
        %v757 = vadd.f32 %v756, %v614
        %v758 = vadd.f32 %v757, %v618
        %v759 = vrot.slane %v758, 4
        %v760 = vadd.f32 %v758, %v759
        %v761 = vrot.slane %v760, 2
        %v762 = vadd.f32 %v760, %v761
        %v763 = vrot.slane %v762, 1
        %v764 = vadd.f32 %v762, %v763
        %v765 = vadd.f32 %v591, %v595
        %v766 = vadd.f32 %v765, %v599
        %v767 = vadd.f32 %v766, %v603
        %v768 = vadd.f32 %v767, %v607
        %v769 = vadd.f32 %v768, %v611
        %v770 = vadd.f32 %v769, %v615
        %v771 = vadd.f32 %v770, %v619
        %v772 = vrot.slane %v771, 4
        %v773 = vadd.f32 %v771, %v772
        %v774 = vrot.slane %v773, 2
        %v775 = vadd.f32 %v773, %v774
        %v776 = vrot.slane %v775, 1
        %v777 = vadd.f32 %v775, %v776
        %v790 = vcombine.low %v634, %v647
        %v791 = vcombine.low %v660, %v673
        %v792 = vcombine.low %v686, %v699
        %v793 = vcombine.low %v712, %v725
        %v794 = vcombine.low %v738, %v751
        %v795 = vcombine.low %v764, %v777
        %v796 = vrot.slane %v792, 7
        %vm797 = vcmask 1041409
        %v798 = vsel %vm797, %v796, %v790
        %vm799 = vcmask 1045509
        %v800 = vsel %vm799, %v796, %v798
        %v801 = vrot.slane %v794, 6
        %vm802 = vcmask 1042434
        %v803 = vsel %vm802, %v801, %v800
        %vm804 = vcmask 1046534
        %v805 = vsel %vm804, %v801, %v803
        %v806 = vrot.slane %v793, 7
        %v807 = vsel %vm797, %v806, %v791
        %v808 = vsel %vm799, %v806, %v807
        %v809 = vrot.slane %v795, 6
        %v810 = vsel %vm802, %v809, %v808
        %v811 = vsel %vm804, %v809, %v810
        %v814 = vadd.f32 %v620, %v805
        %v815 = vadd.f32 %v621, %v811
        %816 = vst [vmem:[%s410] sm:$0x77] %v814
        %817 = vst [vmem:[%s410 + $0x8] sm:$0x77] %v815
        %v818 = vld [vmem:[%s419] sm:$0x77]
        %v819 = vld [vmem:[%s419 + $0x8] sm:$0x77]
        %v820 = vmul.f32 %v524, %v524
        %v821 = vmul.f32 %v525, %v525
        %v822 = vmul.f32 %v526, %v526
        %v823 = vmul.f32 %v527, %v527
        %v824 = vmul.f32 %v528, %v528
        %v825 = vmul.f32 %v529, %v529
        %v826 = vmul.f32 %v530, %v530
        %v827 = vmul.f32 %v531, %v531
        %v828 = vmul.f32 %v532, %v532
        %v829 = vmul.f32 %v533, %v533
        %v830 = vmul.f32 %v534, %v534
        %v831 = vmul.f32 %v535, %v535
        %v832 = vmul.f32 %v536, %v536
        %v833 = vmul.f32 %v537, %v537
        %v834 = vmul.f32 %v538, %v538
        %v835 = vmul.f32 %v539, %v539
        %v836 = vmul.f32 %v540, %v540
        %v837 = vmul.f32 %v541, %v541
        %v838 = vmul.f32 %v542, %v542
        %v839 = vmul.f32 %v543, %v543
        %v840 = vmul.f32 %v544, %v544
        %v841 = vmul.f32 %v545, %v545
        %v842 = vmul.f32 %v546, %v546
        %v843 = vmul.f32 %v547, %v547
        %v844 = vmul.f32 %v548, %v548
        %v845 = vmul.f32 %v549, %v549
        %v846 = vmul.f32 %v550, %v550
        %v847 = vmul.f32 %v551, %v551
        %v848 = vmul.f32 %v552, %v552
        %v849 = vmul.f32 %v553, %v553
        %v850 = vmul.f32 %v554, %v554
        %v851 = vmul.f32 %v555, %v555
        %v852 = vmul.f32 %v556, %v556
        %v853 = vmul.f32 %v557, %v557
        %v854 = vmul.f32 %v558, %v558
        %v855 = vmul.f32 %v559, %v559
        %v856 = vmul.f32 %v560, %v560
        %v857 = vmul.f32 %v561, %v561
        %v858 = vmul.f32 %v562, %v562
        %v859 = vmul.f32 %v563, %v563
        %v860 = vmul.f32 %v564, %v564
        %v861 = vmul.f32 %v565, %v565
        %v862 = vmul.f32 %v566, %v566
        %v863 = vmul.f32 %v567, %v567
        %v864 = vmul.f32 %v568, %v568
        %v865 = vmul.f32 %v569, %v569
        %v866 = vmul.f32 %v570, %v570
        %v867 = vmul.f32 %v571, %v571
        %v868 = vmul.f32 %v572, %v572
        %v869 = vmul.f32 %v573, %v573
        %v870 = vmul.f32 %v574, %v574
        %v871 = vmul.f32 %v575, %v575
        %v872 = vmul.f32 %v576, %v576
        %v873 = vmul.f32 %v577, %v577
        %v874 = vmul.f32 %v578, %v578
        %v875 = vmul.f32 %v579, %v579
        %v876 = vmul.f32 %v580, %v580
        %v877 = vmul.f32 %v581, %v581
        %v878 = vmul.f32 %v582, %v582
        %v879 = vmul.f32 %v583, %v583
        %v880 = vmul.f32 %v584, %v584
        %v881 = vmul.f32 %v585, %v585
        %v882 = vmul.f32 %v586, %v586
        %v883 = vmul.f32 %v587, %v587
        %v884 = vmul.f32 %v588, %v588
        %v885 = vmul.f32 %v589, %v589
        %v886 = vmul.f32 %v590, %v590
        %v887 = vmul.f32 %v591, %v591
        %v888 = vmul.f32 %v592, %v592
        %v889 = vmul.f32 %v593, %v593
        %v890 = vmul.f32 %v594, %v594
        %v891 = vmul.f32 %v595, %v595
        %v892 = vmul.f32 %v596, %v596
        %v893 = vmul.f32 %v597, %v597
        %v894 = vmul.f32 %v598, %v598
        %v895 = vmul.f32 %v599, %v599
        %v896 = vmul.f32 %v600, %v600
        %v897 = vmul.f32 %v601, %v601
        %v898 = vmul.f32 %v602, %v602
        %v899 = vmul.f32 %v603, %v603
        %v900 = vmul.f32 %v604, %v604
        %v901 = vmul.f32 %v605, %v605
        %v902 = vmul.f32 %v606, %v606
        %v903 = vmul.f32 %v607, %v607
        %v904 = vmul.f32 %v608, %v608
        %v905 = vmul.f32 %v609, %v609
        %v906 = vmul.f32 %v610, %v610
        %v907 = vmul.f32 %v611, %v611
        %v908 = vmul.f32 %v612, %v612
        %v909 = vmul.f32 %v613, %v613
        %v910 = vmul.f32 %v614, %v614
        %v911 = vmul.f32 %v615, %v615
        %v912 = vmul.f32 %v616, %v616
        %v913 = vmul.f32 %v617, %v617
        %v914 = vmul.f32 %v618, %v618
        %v915 = vmul.f32 %v619, %v619
        %v916 = vadd.f32 %v820, %v824
        %v917 = vadd.f32 %v916, %v828
        %v918 = vadd.f32 %v917, %v832
        %v919 = vadd.f32 %v918, %v836
        %v920 = vadd.f32 %v919, %v840
        %v921 = vadd.f32 %v920, %v844
        %v922 = vadd.f32 %v921, %v848
        %v923 = vrot.slane %v922, 4
        %v924 = vadd.f32 %v922, %v923
        %v925 = vrot.slane %v924, 2
        %v926 = vadd.f32 %v924, %v925
        %v927 = vrot.slane %v926, 1
        %v928 = vadd.f32 %v926, %v927
        %v929 = vadd.f32 %v821, %v825
        %v930 = vadd.f32 %v929, %v829
        %v931 = vadd.f32 %v930, %v833
        %v932 = vadd.f32 %v931, %v837
        %v933 = vadd.f32 %v932, %v841
        %v934 = vadd.f32 %v933, %v845
        %v935 = vadd.f32 %v934, %v849
        %v936 = vrot.slane %v935, 4
        %v937 = vadd.f32 %v935, %v936
        %v938 = vrot.slane %v937, 2
        %v939 = vadd.f32 %v937, %v938
        %v940 = vrot.slane %v939, 1
        %v941 = vadd.f32 %v939, %v940
        %v942 = vadd.f32 %v822, %v826
        %v943 = vadd.f32 %v942, %v830
        %v944 = vadd.f32 %v943, %v834
        %v945 = vadd.f32 %v944, %v838
        %v946 = vadd.f32 %v945, %v842
        %v947 = vadd.f32 %v946, %v846
        %v948 = vadd.f32 %v947, %v850
        %v949 = vrot.slane %v948, 4
        %v950 = vadd.f32 %v948, %v949
        %v951 = vrot.slane %v950, 2
        %v952 = vadd.f32 %v950, %v951
        %v953 = vrot.slane %v952, 1
        %v954 = vadd.f32 %v952, %v953
        %v955 = vadd.f32 %v823, %v827
        %v956 = vadd.f32 %v955, %v831
        %v957 = vadd.f32 %v956, %v835
        %v958 = vadd.f32 %v957, %v839
        %v959 = vadd.f32 %v958, %v843
        %v960 = vadd.f32 %v959, %v847
        %v961 = vadd.f32 %v960, %v851
        %v962 = vrot.slane %v961, 4
        %v963 = vadd.f32 %v961, %v962
        %v964 = vrot.slane %v963, 2
        %v965 = vadd.f32 %v963, %v964
        %v966 = vrot.slane %v965, 1
        %v967 = vadd.f32 %v965, %v966
        %v968 = vadd.f32 %v852, %v856
        %v969 = vadd.f32 %v968, %v860
        %v970 = vadd.f32 %v969, %v864
        %v971 = vadd.f32 %v970, %v868
        %v972 = vadd.f32 %v971, %v872
        %v973 = vadd.f32 %v972, %v876
        %v974 = vadd.f32 %v973, %v880
        %v975 = vrot.slane %v974, 4
        %v976 = vadd.f32 %v974, %v975
        %v977 = vrot.slane %v976, 2
        %v978 = vadd.f32 %v976, %v977
        %v979 = vrot.slane %v978, 1
        %v980 = vadd.f32 %v978, %v979
        %v981 = vadd.f32 %v853, %v857
        %v982 = vadd.f32 %v981, %v861
        %v983 = vadd.f32 %v982, %v865
        %v984 = vadd.f32 %v983, %v869
        %v985 = vadd.f32 %v984, %v873
        %v986 = vadd.f32 %v985, %v877
        %v987 = vadd.f32 %v986, %v881
        %v988 = vrot.slane %v987, 4
        %v989 = vadd.f32 %v987, %v988
        %v990 = vrot.slane %v989, 2
        %v991 = vadd.f32 %v989, %v990
        %v992 = vrot.slane %v991, 1
        %v993 = vadd.f32 %v991, %v992
        %v994 = vadd.f32 %v854, %v858
        %v995 = vadd.f32 %v994, %v862
        %v996 = vadd.f32 %v995, %v866
        %v997 = vadd.f32 %v996, %v870
        %v998 = vadd.f32 %v997, %v874
        %v999 = vadd.f32 %v998, %v878
        %v1000 = vadd.f32 %v999, %v882
        %v1001 = vrot.slane %v1000, 4
        %v1002 = vadd.f32 %v1000, %v1001
        %v1003 = vrot.slane %v1002, 2
        %v1004 = vadd.f32 %v1002, %v1003
        %v1005 = vrot.slane %v1004, 1
        %v1006 = vadd.f32 %v1004, %v1005
        %v1007 = vadd.f32 %v855, %v859
        %v1008 = vadd.f32 %v1007, %v863
        %v1009 = vadd.f32 %v1008, %v867
        %v1010 = vadd.f32 %v1009, %v871
        %v1011 = vadd.f32 %v1010, %v875
        %v1012 = vadd.f32 %v1011, %v879
        %v1013 = vadd.f32 %v1012, %v883
        %v1014 = vrot.slane %v1013, 4
        %v1015 = vadd.f32 %v1013, %v1014
        %v1016 = vrot.slane %v1015, 2
        %v1017 = vadd.f32 %v1015, %v1016
        %v1018 = vrot.slane %v1017, 1
        %v1019 = vadd.f32 %v1017, %v1018
        %v1020 = vadd.f32 %v884, %v888
        %v1021 = vadd.f32 %v1020, %v892
        %v1022 = vadd.f32 %v1021, %v896
        %v1023 = vadd.f32 %v1022, %v900
        %v1024 = vadd.f32 %v1023, %v904
        %v1025 = vadd.f32 %v1024, %v908
        %v1026 = vadd.f32 %v1025, %v912
        %v1027 = vrot.slane %v1026, 4
        %v1028 = vadd.f32 %v1026, %v1027
        %v1029 = vrot.slane %v1028, 2
        %v1030 = vadd.f32 %v1028, %v1029
        %v1031 = vrot.slane %v1030, 1
        %v1032 = vadd.f32 %v1030, %v1031
        %v1033 = vadd.f32 %v885, %v889
        %v1034 = vadd.f32 %v1033, %v893
        %v1035 = vadd.f32 %v1034, %v897
        %v1036 = vadd.f32 %v1035, %v901
        %v1037 = vadd.f32 %v1036, %v905
        %v1038 = vadd.f32 %v1037, %v909
        %v1039 = vadd.f32 %v1038, %v913
        %v1040 = vrot.slane %v1039, 4
        %v1041 = vadd.f32 %v1039, %v1040
        %v1042 = vrot.slane %v1041, 2
        %v1043 = vadd.f32 %v1041, %v1042
        %v1044 = vrot.slane %v1043, 1
        %v1045 = vadd.f32 %v1043, %v1044
        %v1046 = vadd.f32 %v886, %v890
        %v1047 = vadd.f32 %v1046, %v894
        %v1048 = vadd.f32 %v1047, %v898
        %v1049 = vadd.f32 %v1048, %v902
        %v1050 = vadd.f32 %v1049, %v906
        %v1051 = vadd.f32 %v1050, %v910
        %v1052 = vadd.f32 %v1051, %v914
        %v1053 = vrot.slane %v1052, 4
        %v1054 = vadd.f32 %v1052, %v1053
        %v1055 = vrot.slane %v1054, 2
        %v1056 = vadd.f32 %v1054, %v1055
        %v1057 = vrot.slane %v1056, 1
        %v1058 = vadd.f32 %v1056, %v1057
        %v1059 = vadd.f32 %v887, %v891
        %v1060 = vadd.f32 %v1059, %v895
        %v1061 = vadd.f32 %v1060, %v899
        %v1062 = vadd.f32 %v1061, %v903
        %v1063 = vadd.f32 %v1062, %v907
        %v1064 = vadd.f32 %v1063, %v911
        %v1065 = vadd.f32 %v1064, %v915
        %v1066 = vrot.slane %v1065, 4
        %v1067 = vadd.f32 %v1065, %v1066
        %v1068 = vrot.slane %v1067, 2
        %v1069 = vadd.f32 %v1067, %v1068
        %v1070 = vrot.slane %v1069, 1
        %v1071 = vadd.f32 %v1069, %v1070
        %v1084 = vcombine.low %v928, %v941
        %v1085 = vcombine.low %v954, %v967
        %v1086 = vcombine.low %v980, %v993
        %v1087 = vcombine.low %v1006, %v1019
        %v1088 = vcombine.low %v1032, %v1045
        %v1089 = vcombine.low %v1058, %v1071
        %v1090 = vrot.slane %v1086, 7
        %v1091 = vsel %vm797, %v1090, %v1084
        %v1092 = vsel %vm799, %v1090, %v1091
        %v1093 = vrot.slane %v1088, 6
        %v1094 = vsel %vm802, %v1093, %v1092
        %v1095 = vsel %vm804, %v1093, %v1094
        %v1096 = vrot.slane %v1087, 7
        %v1097 = vsel %vm797, %v1096, %v1085
        %v1098 = vsel %vm799, %v1096, %v1097
        %v1099 = vrot.slane %v1089, 6
        %v1100 = vsel %vm802, %v1099, %v1098
        %v1101 = vsel %vm804, %v1099, %v1100
        %v1104 = vadd.f32 %v818, %v1095
        %v1105 = vadd.f32 %v819, %v1101
        %1106 = vst [vmem:[%s419] sm:$0x77] %v1104
        %1107 = vst [vmem:[%s419 + $0x8] sm:$0x77] %v1105
        %p1108 = scmp.lt.s32.totalorder %s19, 1
        %s1109 = scalar_select %p1108, %s19, 1
        %p1110 = scmp.lt.s32.totalorder %s20, 0
        %s1111 = scalar_select %p1110, %s20, 0
        %s1112 = smul.addr %s1111, 4
        %s1113 = smul.addr %s1109, 4
        %s1114 = sadd.s32 %s1112, %s1113
        %s1115 = smul.addr %s1114, 4
        %s1116 = scalar_lea.vmem %s1, %s1115
        %p1117 = scmp.lt.s32.totalorder %s19, 1
        %s1118 = scalar_select %p1117, %s19, 1
        %p1119 = scmp.lt.s32.totalorder %s20, 0
        %s1120 = scalar_select %p1119, %s20, 0
        %s1121 = smul.addr %s1120, 4
        %s1122 = smul.addr %s1118, 4
        %s1123 = sadd.s32 %s1121, %s1122
        %s1124 = smul.addr %s1123, 4
        %s1125 = scalar_lea.vmem %s2, %s1124
        // Predicated region
        $region52: #{patched_harmonizer_forward.2} parent=42 // pred_check
          %p1126 = pneg %p85
        $region53: #{patched_harmonizer_forward.2} parent=42 // pred_check_branch
          %1128 = sbr.rel (%p1126) target = $region55
        $region54: #{patched_harmonizer_forward.2} parent=42 // pred_region
          _
        $region55: #{patched_harmonizer_forward.2} parent=42 // pred_fallthru
          _
        // Predicated region
        $region56: #{patched_harmonizer_forward.2} parent=42 // pred_check
          %p1129 = pneg %p113
        $region57: #{patched_harmonizer_forward.2} parent=42 // pred_check_branch
          %1131 = sbr.rel (%p1129) target = $region59
        $region58: #{patched_harmonizer_forward.2} parent=42 // pred_region
          _
        $region59: #{patched_harmonizer_forward.2} parent=42 // pred_fallthru
          _
      $region43: #{patched_harmonizer_forward.2} parent=5 // pred_fallthru
        _
      %p1132 = scmp.le.s32.totalorder 2, %s9
      // Predicated region
      $region60: #{patched_harmonizer_forward.2} parent=5 // pred_check
        %p1133 = pneg %p1132
      $region61: #{patched_harmonizer_forward.2} parent=5 // pred_check_branch
        %1135 = sbr.rel (%p1133) target = $region63
      $region62: #{patched_harmonizer_forward.2} parent=5 // pred_region
        %s1136 = ssub.s32 %s9, 2
        // Predicated region
        $region64: #{patched_harmonizer_forward.2} parent=62 // pred_check
          %p1137 = pneg %p91
        $region65: #{patched_harmonizer_forward.2} parent=62 // pred_check_branch
          %1139 = sbr.rel (%p1137) target = $region67
        $region66: #{patched_harmonizer_forward.2} parent=62 // pred_region
          %p1140 = scmp.lt.s32.totalorder %s22, 1
          %s1141 = scalar_select %p1140, %s22, 1
          %p1142 = scmp.lt.s32.totalorder %s23, 0
          %s1143 = scalar_select %p1142, %s23, 0
          %s1144 = smul.addr %s1143, 4
          %s1145 = smul.addr %s1141, 4
          %s1146 = sadd.s32 %s1144, %s1145
          %s1147 = smul.addr %s1146, 4
          %s1148 = scalar_lea.vmem %s1, %s1147
        $region67: #{patched_harmonizer_forward.2} parent=62 // pred_fallthru
          _
        // Predicated region
        $region68: #{patched_harmonizer_forward.2} parent=62 // pred_check
          %p1149 = pneg %p119
        $region69: #{patched_harmonizer_forward.2} parent=62 // pred_check_branch
          %1151 = sbr.rel (%p1149) target = $region71
        $region70: #{patched_harmonizer_forward.2} parent=62 // pred_region
          %p1152 = scmp.lt.s32.totalorder %s22, 1
          %s1153 = scalar_select %p1152, %s22, 1
          %p1154 = scmp.lt.s32.totalorder %s23, 0
          %s1155 = scalar_select %p1154, %s23, 0
          %s1156 = smul.addr %s1155, 4
          %s1157 = smul.addr %s1153, 4
          %s1158 = sadd.s32 %s1156, %s1157
          %s1159 = smul.addr %s1158, 4
          %s1160 = scalar_lea.vmem %s2, %s1159
        $region71: #{patched_harmonizer_forward.2} parent=62 // pred_fallthru
          _
      $region63: #{patched_harmonizer_forward.2} parent=5 // pred_fallthru
        _
    $region6: #{patched_harmonizer_forward.2} parent=1 // loop_footer
      %s13 = sadd.s32 1, %s9
    $region7: #{patched_harmonizer_forward.2} parent=1 // loop_footer_branch
      %8 = sbr.rel target = $region3
    $region8: #{patched_harmonizer_forward.2} parent=1 // loop_exit
      _

// kernel: patched_harmonizer_forward.3
$region0: #{patched_harmonizer_forward.3}
  #allocation0 [shape = 'u32[]', space=smem, size = 0x4, offset = 0x4, fixed_abs, tag = 'smem constant byte address 0x4 - core index']
  #allocation1 [shape = 'u32[144,128]{1,0:T(1,128)}', space=vmem, size = 0x12000, scoped, tag = 'internal scratch']
  %s0 = inlined_call_operand.vmem [shape: f32[2,3,1,1], index: 0, kind: input, shape index: {}]
  %s1 = inlined_call_operand.vmem [shape: f32[2,3,1,1], index: 1, kind: input, shape index: {}]
  %s2 = inlined_call_operand.vmem [shape: f32[2,3,128,512], index: 2, kind: input, shape index: {}]
  %s3 = inlined_call_operand.vmem [shape: f32[2,3,128,512], index: 3, kind: input, shape index: {}]
  %s4 = inlined_call_operand.vmem [shape: f32[2,1,128,512], index: 4, kind: input, shape index: {}]
  %s5 = inlined_call_operand.vmem [shape: f32[2,3,128,512], index: 5, kind: output, shape index: {0}]
  %s6 = inlined_call_operand.vmem [shape: f32[2,3,128,512], index: 6, kind: output, shape index: {1}]
  %7 = xla_tuple %s5, %s6
  %s8 = sld [smem:[#allocation0]]
  $region145: #{patched_harmonizer_forward.3} parent=0
    _
  %s10 = ssub.s32 1, %s8
  %s11 = scalar_select 0, %s10, %s8
  $region1: #{patched_harmonizer_forward.3} parent=0
    #allocation2 [shape = 'u8[393216]{0}', space=vmem, size = 0x60000, scoped, tag = 'input window, operand 2']
    #allocation3 [shape = 'u8[393216]{0}', space=vmem, size = 0x60000, scoped, tag = 'input window, operand 3']
    #allocation4 [shape = 'u8[393216]{0}', space=vmem, size = 0x60000, scoped, tag = 'output window, operand 0']
    #allocation5 [shape = 'u8[393216]{0}', space=vmem, size = 0x60000, scoped, tag = 'output window, operand 1']
    loop: start=0, step=1, limit=10
    $region2: #{patched_harmonizer_forward.3} parent=1 // loop_pre_header
      _
    $region3: #{patched_harmonizer_forward.3} parent=1 // loop_header
      %s13 = sphi 0, %s17
      %p14 = scmp.ge.s32.totalorder %s13, 10
      %s20 = sphi 0, %s32
      %s21 = sphi 0, %s28
      %s22 = sphi 0, %s20
      %s23 = sphi 0, %s21
      %s24 = sphi 0, %s22
      %s25 = sphi 0, %s23
      %s35 = sphi 0, %s37
      %s38 = sphi 0, %s35
      %s39 = sphi 0, %s38
      %s55 = sphi 0, %s39
      %s61 = sphi 0, %s63
      %s64 = sphi 0, %s61
      %s65 = sphi 0, %s64
      %s81 = sphi 0, %s65
      %s89 = sphi 0, %s91
      %s92 = sphi 0, %s89
      %s93 = sphi 0, %s92
      %s109 = sphi 0, %s93
      %s117 = sphi 0, %s119
      %s120 = sphi 0, %s117
      %s121 = sphi 0, %s120
      %s137 = sphi 0, %s121
      %s145 = sphi 0, %s147
      %s148 = sphi 0, %s145
      %s149 = sphi 0, %s148
      %s165 = sphi 0, %s149
      %s173 = sphi 0, %s175
      %s176 = sphi 0, %s173
      %s177 = sphi 0, %s176
      %s193 = sphi 0, %s177
      %s201 = sphi 0, %s203
      %s204 = sphi 0, %s201
      %s205 = sphi 0, %s204
      %s221 = sphi 0, %s205
    $region4: #{patched_harmonizer_forward.3} parent=1 // loop_header_branch
      %16 = sbr.rel (%p14) target = $region8
    $region5: #{patched_harmonizer_forward.3} parent=1 // loop_body
      %s18 = ssub.s32 %s13, 1
      %s19 = ssub.s32 %s13, 2
      %s26 = sadd.s32 1, %s21
      %p27 = scmp.ge.s32.totalorder %s26, 4
      %s28 = scalar_select %p27, 0, %s26
      %s29 = sadd.s32 1, %s20
      %s30 = scalar_select %p27, %s29, %s20
      %p31 = scmp.ge.s32.totalorder %s30, 2
      %s32 = scalar_select %p31, 0, %s30
      %s33 = ssub.s32 %s20, %s32
      %p34 = scmp.eq.s32.totalorder %s33, 0
      %s36 = sadd.s32 %s35, 1
      %s37 = scalar_select %p34, %s35, %s36
      %p40 = pneg %p34
      %p41 = scmp.eq.s32.totalorder %s13, 7
      %p42 = por %p40, %p41
      %p43 = scmp.ne.s32.totalorder %s35, %s38
      %p44 = scmp.eq.s32.totalorder %s13, 0
      %p45 = por %p43, %p44
      %p46 = scmp.ne.s32.totalorder %s35, %s38
      %p47 = scmp.eq.s32.totalorder %s18, 7
      %p48 = por %p46, %p47
      %p49 = scmp.ne.s32.totalorder %s38, %s39
      %p50 = scmp.eq.s32.totalorder %s18, 0
      %p51 = por %p49, %p50
      %p52 = scmp.ne.s32.totalorder %s38, %s39
      %p53 = scmp.eq.s32.totalorder %s19, 7
      %p54 = por %p52, %p53
      %p56 = scmp.ne.s32.totalorder %s39, %s55
      %p57 = scmp.eq.s32.totalorder %s19, 0
      %p58 = por %p56, %p57
      %s59 = ssub.s32 %s20, %s32
      %p60 = scmp.eq.s32.totalorder %s59, 0
      %s62 = sadd.s32 %s61, 1
      %s63 = scalar_select %p60, %s61, %s62
      %p66 = pneg %p60
      %p67 = scmp.eq.s32.totalorder %s13, 7
      %p68 = por %p66, %p67
      %p69 = scmp.ne.s32.totalorder %s61, %s64
      %p70 = scmp.eq.s32.totalorder %s13, 0
      %p71 = por %p69, %p70
      %p72 = scmp.ne.s32.totalorder %s61, %s64
      %p73 = scmp.eq.s32.totalorder %s18, 7
      %p74 = por %p72, %p73
      %p75 = scmp.ne.s32.totalorder %s64, %s65
      %p76 = scmp.eq.s32.totalorder %s18, 0
      %p77 = por %p75, %p76
      %p78 = scmp.ne.s32.totalorder %s64, %s65
      %p79 = scmp.eq.s32.totalorder %s19, 7
      %p80 = por %p78, %p79
      %p82 = scmp.ne.s32.totalorder %s65, %s81
      %p83 = scmp.eq.s32.totalorder %s19, 0
      %p84 = por %p82, %p83
      %s85 = ssub.s32 %s20, %s32
      %s86 = ssub.s32 %s21, %s28
      %s87 = sor.u32 %s85, %s86
      %p88 = scmp.eq.s32.totalorder %s87, 0
      %s90 = sadd.s32 %s89, 1
      %s91 = scalar_select %p88, %s89, %s90
      %p94 = pneg %p88
      %p95 = scmp.eq.s32.totalorder %s13, 7
      %p96 = por %p94, %p95
      %p97 = scmp.ne.s32.totalorder %s89, %s92
      %p98 = scmp.eq.s32.totalorder %s13, 0
      %p99 = por %p97, %p98
      %p100 = scmp.ne.s32.totalorder %s89, %s92
      %p101 = scmp.eq.s32.totalorder %s18, 7
      %p102 = por %p100, %p101
      %p103 = scmp.ne.s32.totalorder %s92, %s93
      %p104 = scmp.eq.s32.totalorder %s18, 0
      %p105 = por %p103, %p104
      %p106 = scmp.ne.s32.totalorder %s92, %s93
      %p107 = scmp.eq.s32.totalorder %s19, 7
      %p108 = por %p106, %p107
      %p110 = scmp.ne.s32.totalorder %s93, %s109
      %p111 = scmp.eq.s32.totalorder %s19, 0
      %p112 = por %p110, %p111
      %s113 = ssub.s32 %s20, %s32
      %s114 = ssub.s32 %s21, %s28
      %s115 = sor.u32 %s113, %s114
      %p116 = scmp.eq.s32.totalorder %s115, 0
      %s118 = sadd.s32 %s117, 1
      %s119 = scalar_select %p116, %s117, %s118
      %p122 = pneg %p116
      %p123 = scmp.eq.s32.totalorder %s13, 7
      %p124 = por %p122, %p123
      %p125 = scmp.ne.s32.totalorder %s117, %s120
      %p126 = scmp.eq.s32.totalorder %s13, 0
      %p127 = por %p125, %p126
      %p128 = scmp.ne.s32.totalorder %s117, %s120
      %p129 = scmp.eq.s32.totalorder %s18, 7
      %p130 = por %p128, %p129
      %p131 = scmp.ne.s32.totalorder %s120, %s121
      %p132 = scmp.eq.s32.totalorder %s18, 0
      %p133 = por %p131, %p132
      %p134 = scmp.ne.s32.totalorder %s120, %s121
      %p135 = scmp.eq.s32.totalorder %s19, 7
      %p136 = por %p134, %p135
      %p138 = scmp.ne.s32.totalorder %s121, %s137
      %p139 = scmp.eq.s32.totalorder %s19, 0
      %p140 = por %p138, %p139
      %s141 = ssub.s32 %s20, %s32
      %s142 = ssub.s32 %s21, %s28
      %s143 = sor.u32 %s141, %s142
      %p144 = scmp.eq.s32.totalorder %s143, 0
      %s146 = sadd.s32 %s145, 1
      %s147 = scalar_select %p144, %s145, %s146
      %p150 = pneg %p144
      %p151 = scmp.eq.s32.totalorder %s13, 7
      %p152 = por %p150, %p151
      %p153 = scmp.ne.s32.totalorder %s145, %s148
      %p154 = scmp.eq.s32.totalorder %s13, 0
      %p155 = por %p153, %p154
      %p156 = scmp.ne.s32.totalorder %s145, %s148
      %p157 = scmp.eq.s32.totalorder %s18, 7
      %p158 = por %p156, %p157
      %p159 = scmp.ne.s32.totalorder %s148, %s149
      %p160 = scmp.eq.s32.totalorder %s18, 0
      %p161 = por %p159, %p160
      %p162 = scmp.ne.s32.totalorder %s148, %s149
      %p163 = scmp.eq.s32.totalorder %s19, 7
      %p164 = por %p162, %p163
      %p166 = scmp.ne.s32.totalorder %s149, %s165
      %p167 = scmp.eq.s32.totalorder %s19, 0
      %p168 = por %p166, %p167
      %s169 = ssub.s32 %s20, %s32
      %s170 = ssub.s32 %s21, %s28
      %s171 = sor.u32 %s169, %s170
      %p172 = scmp.eq.s32.totalorder %s171, 0
      %s174 = sadd.s32 %s173, 1
      %s175 = scalar_select %p172, %s173, %s174
      %p178 = pneg %p172
      %p179 = scmp.eq.s32.totalorder %s13, 7
      %p180 = por %p178, %p179
      %p181 = scmp.ne.s32.totalorder %s173, %s176
      %p182 = scmp.eq.s32.totalorder %s13, 0
      %p183 = por %p181, %p182
      %p184 = scmp.ne.s32.totalorder %s173, %s176
      %p185 = scmp.eq.s32.totalorder %s18, 7
      %p186 = por %p184, %p185
      %p187 = scmp.ne.s32.totalorder %s176, %s177
      %p188 = scmp.eq.s32.totalorder %s18, 0
      %p189 = por %p187, %p188
      %p190 = scmp.ne.s32.totalorder %s176, %s177
      %p191 = scmp.eq.s32.totalorder %s19, 7
      %p192 = por %p190, %p191
      %p194 = scmp.ne.s32.totalorder %s177, %s193
      %p195 = scmp.eq.s32.totalorder %s19, 0
      %p196 = por %p194, %p195
      %s197 = ssub.s32 %s20, %s32
      %s198 = ssub.s32 %s21, %s28
      %s199 = sor.u32 %s197, %s198
      %p200 = scmp.eq.s32.totalorder %s199, 0
      %s202 = sadd.s32 %s201, 1
      %s203 = scalar_select %p200, %s201, %s202
      %p206 = pneg %p200
      %p207 = scmp.eq.s32.totalorder %s13, 7
      %p208 = por %p206, %p207
      %p209 = scmp.ne.s32.totalorder %s201, %s204
      %p210 = scmp.eq.s32.totalorder %s13, 0
      %p211 = por %p209, %p210
      %p212 = scmp.ne.s32.totalorder %s201, %s204
      %p213 = scmp.eq.s32.totalorder %s18, 7
      %p214 = por %p212, %p213
      %p215 = scmp.ne.s32.totalorder %s204, %s205
      %p216 = scmp.eq.s32.totalorder %s18, 0
      %p217 = por %p215, %p216
      %p218 = scmp.ne.s32.totalorder %s204, %s205
      %p219 = scmp.eq.s32.totalorder %s19, 7
      %p220 = por %p218, %p219
      %p222 = scmp.ne.s32.totalorder %s205, %s221
      %p223 = scmp.eq.s32.totalorder %s19, 0
      %p224 = por %p222, %p223
      %p225 = scmp.le.s32.totalorder 1, %s13
      %p226 = scmp.lt.s32.totalorder %s13, 9
      %p227 = pnand %p225, %p226
      %p228 = pneg %p227
      // Predicated region
      $region9: #{patched_harmonizer_forward.3} parent=5 // pred_check
        _
      $region10: #{patched_harmonizer_forward.3} parent=5 // pred_check_branch
        %230 = sbr.rel (%p227) target = $region12
      $region11: #{patched_harmonizer_forward.3} parent=5 // pred_region
        %s231 = ssub.s32 %s13, 1
      $region12: #{patched_harmonizer_forward.3} parent=5 // pred_fallthru
        _
      %p232 = scmp.lt.s32.totalorder %s13, 8
      // Predicated region
      $region13: #{patched_harmonizer_forward.3} parent=5 // pred_check
        %p233 = pneg %p232
      $region14: #{patched_harmonizer_forward.3} parent=5 // pred_check_branch
        %235 = sbr.rel (%p233) target = $region16
      $region15: #{patched_harmonizer_forward.3} parent=5 // pred_region
        // Predicated region
        $region17: #{patched_harmonizer_forward.3} parent=15 // pred_check
          %p236 = pneg %p45
        $region18: #{patched_harmonizer_forward.3} parent=15 // pred_check_branch
          %238 = sbr.rel (%p236) target = $region20
        $region19: #{patched_harmonizer_forward.3} parent=15 // pred_region
          %p239 = scmp.lt.s32.totalorder %s20, 1
          %s240 = scalar_select %p239, %s20, 1
          %s241 = smul.addr %s240, 3
          %s242 = scalar_lea.vmem %s0, %s241
        $region20: #{patched_harmonizer_forward.3} parent=15 // pred_fallthru
          _
        // Predicated region
        $region21: #{patched_harmonizer_forward.3} parent=15 // pred_check
          %p243 = pneg %p71
        $region22: #{patched_harmonizer_forward.3} parent=15 // pred_check_branch
          %245 = sbr.rel (%p243) target = $region24
        $region23: #{patched_harmonizer_forward.3} parent=15 // pred_region
          %p246 = scmp.lt.s32.totalorder %s20, 1
          %s247 = scalar_select %p246, %s20, 1
          %s248 = smul.addr %s247, 3
          %s249 = scalar_lea.vmem %s1, %s248
        $region24: #{patched_harmonizer_forward.3} parent=15 // pred_fallthru
          _
        // Predicated region
        $region25: #{patched_harmonizer_forward.3} parent=15 // pred_check
          %p250 = pneg %p99
        $region26: #{patched_harmonizer_forward.3} parent=15 // pred_check_branch
          %252 = sbr.rel (%p250) target = $region28
        $region27: #{patched_harmonizer_forward.3} parent=15 // pred_region
          %s253 = sand.u32 %s89, 1
          %s254 = sand.u32 %s89, 1
          %s255 = smul.addr %s254, 384
          %s256 = scalar_lea.vmem [#allocation2], %s255
          %s257 = smul.u32 4, %s21
          %s258 = smul.addr %s257, 4
          %s259 = smul.addr %s20, 192
          %s260 = sadd.s32 %s258, %s259
          %s261 = smul.addr %s260, 8
          %s262 = scalar_lea.vmem %s2, %s261
          // Predicated region
          $region29: #{patched_harmonizer_forward.3} parent=27 // pred_check
            _
          $region30: #{patched_harmonizer_forward.3} parent=27 // pred_check_branch
            %264 = sbr.rel (0) target = $region32
          $region31: #{patched_harmonizer_forward.3} parent=27 // pred_region
            // Predicated region
            $region33: #{patched_harmonizer_forward.3} parent=31 // pred_check
              _
            $region34: #{patched_harmonizer_forward.3} parent=31 // pred_check_branch
              %266 = sbr.rel (0) target = $region36
            $region35: #{patched_harmonizer_forward.3} parent=31 // pred_region
              loop: start=0, step=1, limit=1
              $region37: #{patched_harmonizer_forward.3} parent=35 // loop_pre_header
                _
              $region38: #{patched_harmonizer_forward.3} parent=35 // loop_header
                %s268 = sphi 0, %s272
                %p269 = scmp.ge.s32.totalorder %s268, 1
                %s273 = sphi %s262, %s262
                %s274 = sphi %s256, %s256
              $region39: #{patched_harmonizer_forward.3} parent=35 // loop_header_branch
                %271 = sbr.rel (%p269) target = $region43
              $region40: #{patched_harmonizer_forward.3} parent=35 // loop_body
                %v275 = vld [vmem:[%s273] sm:$0xff]
                %276 = vst [vmem:[%s274] sm:$0xff] %v275
                %v277 = vld [vmem:[%s273 + $0x8] sm:$0xff]
                %278 = vst [vmem:[%s274 + $0x8] sm:$0xff] %v277
                %v279 = vld [vmem:[%s273 + $0x10] sm:$0xff]
                %280 = vst [vmem:[%s274 + $0x10] sm:$0xff] %v279
                %v281 = vld [vmem:[%s273 + $0x18] sm:$0xff]
                %282 = vst [vmem:[%s274 + $0x18] sm:$0xff] %v281
                %v283 = vld [vmem:[%s273 + $0x20] sm:$0xff]
                %284 = vst [vmem:[%s274 + $0x20] sm:$0xff] %v283
                %v285 = vld [vmem:[%s273 + $0x28] sm:$0xff]
                %286 = vst [vmem:[%s274 + $0x28] sm:$0xff] %v285
                %v287 = vld [vmem:[%s273 + $0x30] sm:$0xff]
                %288 = vst [vmem:[%s274 + $0x30] sm:$0xff] %v287
                %v289 = vld [vmem:[%s273 + $0x38] sm:$0xff]
                %290 = vst [vmem:[%s274 + $0x38] sm:$0xff] %v289
                %v291 = vld [vmem:[%s273 + $0x40] sm:$0xff]
                %292 = vst [vmem:[%s274 + $0x40] sm:$0xff] %v291
                %v293 = vld [vmem:[%s273 + $0x48] sm:$0xff]
                %294 = vst [vmem:[%s274 + $0x48] sm:$0xff] %v293
                %v295 = vld [vmem:[%s273 + $0x50] sm:$0xff]
                %296 = vst [vmem:[%s274 + $0x50] sm:$0xff] %v295
                %v297 = vld [vmem:[%s273 + $0x58] sm:$0xff]
                %298 = vst [vmem:[%s274 + $0x58] sm:$0xff] %v297
                %v299 = vld [vmem:[%s273 + $0x60] sm:$0xff]
                %300 = vst [vmem:[%s274 + $0x60] sm:$0xff] %v299
                %v301 = vld [vmem:[%s273 + $0x68] sm:$0xff]
                %302 = vst [vmem:[%s274 + $0x68] sm:$0xff] %v301
                %v303 = vld [vmem:[%s273 + $0x70] sm:$0xff]
                %304 = vst [vmem:[%s274 + $0x70] sm:$0xff] %v303
                %v305 = vld [vmem:[%s273 + $0x78] sm:$0xff]
                %306 = vst [vmem:[%s274 + $0x78] sm:$0xff] %v305
                %v307 = vld [vmem:[%s273 + $0x200] sm:$0xff]
                %308 = vst [vmem:[%s274 + $0x80] sm:$0xff] %v307
                %v309 = vld [vmem:[%s273 + $0x208] sm:$0xff]
                %310 = vst [vmem:[%s274 + $0x88] sm:$0xff] %v309
                %v311 = vld [vmem:[%s273 + $0x210] sm:$0xff]
                %312 = vst [vmem:[%s274 + $0x90] sm:$0xff] %v311
                %v313 = vld [vmem:[%s273 + $0x218] sm:$0xff]
                %314 = vst [vmem:[%s274 + $0x98] sm:$0xff] %v313
                %v315 = vld [vmem:[%s273 + $0x220] sm:$0xff]
                %316 = vst [vmem:[%s274 + $0xa0] sm:$0xff] %v315
                %v317 = vld [vmem:[%s273 + $0x228] sm:$0xff]
                %318 = vst [vmem:[%s274 + $0xa8] sm:$0xff] %v317
                %v319 = vld [vmem:[%s273 + $0x230] sm:$0xff]
                %320 = vst [vmem:[%s274 + $0xb0] sm:$0xff] %v319
                %v321 = vld [vmem:[%s273 + $0x238] sm:$0xff]
                %322 = vst [vmem:[%s274 + $0xb8] sm:$0xff] %v321
                %v323 = vld [vmem:[%s273 + $0x240] sm:$0xff]
                %324 = vst [vmem:[%s274 + $0xc0] sm:$0xff] %v323
                %v325 = vld [vmem:[%s273 + $0x248] sm:$0xff]
                %326 = vst [vmem:[%s274 + $0xc8] sm:$0xff] %v325
                %v327 = vld [vmem:[%s273 + $0x250] sm:$0xff]
                %328 = vst [vmem:[%s274 + $0xd0] sm:$0xff] %v327
                %v329 = vld [vmem:[%s273 + $0x258] sm:$0xff]
                %330 = vst [vmem:[%s274 + $0xd8] sm:$0xff] %v329
                %v331 = vld [vmem:[%s273 + $0x260] sm:$0xff]
                %332 = vst [vmem:[%s274 + $0xe0] sm:$0xff] %v331
                %v333 = vld [vmem:[%s273 + $0x268] sm:$0xff]
                %334 = vst [vmem:[%s274 + $0xe8] sm:$0xff] %v333
                %v335 = vld [vmem:[%s273 + $0x270] sm:$0xff]
                %336 = vst [vmem:[%s274 + $0xf0] sm:$0xff] %v335
                %v337 = vld [vmem:[%s273 + $0x278] sm:$0xff]
                %338 = vst [vmem:[%s274 + $0xf8] sm:$0xff] %v337
                %v339 = vld [vmem:[%s273 + $0x400] sm:$0xff]
                %340 = vst [vmem:[%s274 + $0x100] sm:$0xff] %v339
                %v341 = vld [vmem:[%s273 + $0x408] sm:$0xff]
                %342 = vst [vmem:[%s274 + $0x108] sm:$0xff] %v341
                %v343 = vld [vmem:[%s273 + $0x410] sm:$0xff]
                %344 = vst [vmem:[%s274 + $0x110] sm:$0xff] %v343
                %v345 = vld [vmem:[%s273 + $0x418] sm:$0xff]
                %346 = vst [vmem:[%s274 + $0x118] sm:$0xff] %v345
                %v347 = vld [vmem:[%s273 + $0x420] sm:$0xff]
                %348 = vst [vmem:[%s274 + $0x120] sm:$0xff] %v347
                %v349 = vld [vmem:[%s273 + $0x428] sm:$0xff]
                %350 = vst [vmem:[%s274 + $0x128] sm:$0xff] %v349
                %v351 = vld [vmem:[%s273 + $0x430] sm:$0xff]
                %352 = vst [vmem:[%s274 + $0x130] sm:$0xff] %v351
                %v353 = vld [vmem:[%s273 + $0x438] sm:$0xff]
                %354 = vst [vmem:[%s274 + $0x138] sm:$0xff] %v353
                %v355 = vld [vmem:[%s273 + $0x440] sm:$0xff]
                %356 = vst [vmem:[%s274 + $0x140] sm:$0xff] %v355
                %v357 = vld [vmem:[%s273 + $0x448] sm:$0xff]
                %358 = vst [vmem:[%s274 + $0x148] sm:$0xff] %v357
                %v359 = vld [vmem:[%s273 + $0x450] sm:$0xff]
                %360 = vst [vmem:[%s274 + $0x150] sm:$0xff] %v359
                %v361 = vld [vmem:[%s273 + $0x458] sm:$0xff]
                %362 = vst [vmem:[%s274 + $0x158] sm:$0xff] %v361
                %v363 = vld [vmem:[%s273 + $0x460] sm:$0xff]
                %364 = vst [vmem:[%s274 + $0x160] sm:$0xff] %v363
                %v365 = vld [vmem:[%s273 + $0x468] sm:$0xff]
                %366 = vst [vmem:[%s274 + $0x168] sm:$0xff] %v365
                %v367 = vld [vmem:[%s273 + $0x470] sm:$0xff]
                %368 = vst [vmem:[%s274 + $0x170] sm:$0xff] %v367
                %v369 = vld [vmem:[%s273 + $0x478] sm:$0xff]
                %370 = vst [vmem:[%s274 + $0x178] sm:$0xff] %v369
              $region41: #{patched_harmonizer_forward.3} parent=35 // loop_footer
                %s272 = sadd.s32 1, %s268
              $region42: #{patched_harmonizer_forward.3} parent=35 // loop_footer_branch
                %267 = sbr.rel target = $region38
              $region43: #{patched_harmonizer_forward.3} parent=35 // loop_exit
                _
            $region36: #{patched_harmonizer_forward.3} parent=31 // pred_fallthru
              _
            // Predicated region
            $region44: #{patched_harmonizer_forward.3} parent=31 // pred_check
              _
            $region45: #{patched_harmonizer_forward.3} parent=31 // pred_check_branch
              %372 = sbr.rel target = $region47
            $region46: #{patched_harmonizer_forward.3} parent=31 // pred_region
              _
            $region47: #{patched_harmonizer_forward.3} parent=31 // pred_fallthru
              _
          $region32: #{patched_harmonizer_forward.3} parent=27 // pred_fallthru
            _
          %373 = vnop
        $region28: #{patched_harmonizer_forward.3} parent=15 // pred_fallthru
          _
        // Predicated region
        $region48: #{patched_harmonizer_forward.3} parent=15 // pred_check
          %p374 = pneg %p127
        $region49: #{patched_harmonizer_forward.3} parent=15 // pred_check_branch
          %376 = sbr.rel (%p374) target = $region51
        $region50: #{patched_harmonizer_forward.3} parent=15 // pred_region
          %s377 = sand.u32 %s117, 1
          %s378 = sand.u32 %s117, 1
          %s379 = smul.addr %s378, 384
          %s380 = scalar_lea.vmem [#allocation3], %s379
          %s381 = smul.u32 4, %s21
          %s382 = smul.addr %s381, 4
          %s383 = smul.addr %s20, 192
          %s384 = sadd.s32 %s382, %s383
          %s385 = smul.addr %s384, 8
          %s386 = scalar_lea.vmem %s3, %s385
          // Predicated region
          $region52: #{patched_harmonizer_forward.3} parent=50 // pred_check
            _
          $region53: #{patched_harmonizer_forward.3} parent=50 // pred_check_branch
            %388 = sbr.rel (0) target = $region55
          $region54: #{patched_harmonizer_forward.3} parent=50 // pred_region
            // Predicated region
            $region56: #{patched_harmonizer_forward.3} parent=54 // pred_check
              _
            $region57: #{patched_harmonizer_forward.3} parent=54 // pred_check_branch
              %390 = sbr.rel (0) target = $region59
            $region58: #{patched_harmonizer_forward.3} parent=54 // pred_region
              loop: start=0, step=1, limit=1
              $region60: #{patched_harmonizer_forward.3} parent=58 // loop_pre_header
                _
              $region61: #{patched_harmonizer_forward.3} parent=58 // loop_header
                %s392 = sphi 0, %s396
                %p393 = scmp.ge.s32.totalorder %s392, 1
                %s397 = sphi %s386, %s386
                %s398 = sphi %s380, %s380
              $region62: #{patched_harmonizer_forward.3} parent=58 // loop_header_branch
                %395 = sbr.rel (%p393) target = $region66
              $region63: #{patched_harmonizer_forward.3} parent=58 // loop_body
                %v399 = vld [vmem:[%s397] sm:$0xff]
                %400 = vst [vmem:[%s398] sm:$0xff] %v399
                %v401 = vld [vmem:[%s397 + $0x8] sm:$0xff]
                %402 = vst [vmem:[%s398 + $0x8] sm:$0xff] %v401
                %v403 = vld [vmem:[%s397 + $0x10] sm:$0xff]
                %404 = vst [vmem:[%s398 + $0x10] sm:$0xff] %v403
                %v405 = vld [vmem:[%s397 + $0x18] sm:$0xff]
                %406 = vst [vmem:[%s398 + $0x18] sm:$0xff] %v405
                %v407 = vld [vmem:[%s397 + $0x20] sm:$0xff]
                %408 = vst [vmem:[%s398 + $0x20] sm:$0xff] %v407
                %v409 = vld [vmem:[%s397 + $0x28] sm:$0xff]
                %410 = vst [vmem:[%s398 + $0x28] sm:$0xff] %v409
                %v411 = vld [vmem:[%s397 + $0x30] sm:$0xff]
                %412 = vst [vmem:[%s398 + $0x30] sm:$0xff] %v411
                %v413 = vld [vmem:[%s397 + $0x38] sm:$0xff]
                %414 = vst [vmem:[%s398 + $0x38] sm:$0xff] %v413
                %v415 = vld [vmem:[%s397 + $0x40] sm:$0xff]
                %416 = vst [vmem:[%s398 + $0x40] sm:$0xff] %v415
                %v417 = vld [vmem:[%s397 + $0x48] sm:$0xff]
                %418 = vst [vmem:[%s398 + $0x48] sm:$0xff] %v417
                %v419 = vld [vmem:[%s397 + $0x50] sm:$0xff]
                %420 = vst [vmem:[%s398 + $0x50] sm:$0xff] %v419
                %v421 = vld [vmem:[%s397 + $0x58] sm:$0xff]
                %422 = vst [vmem:[%s398 + $0x58] sm:$0xff] %v421
                %v423 = vld [vmem:[%s397 + $0x60] sm:$0xff]
                %424 = vst [vmem:[%s398 + $0x60] sm:$0xff] %v423
                %v425 = vld [vmem:[%s397 + $0x68] sm:$0xff]
                %426 = vst [vmem:[%s398 + $0x68] sm:$0xff] %v425
                %v427 = vld [vmem:[%s397 + $0x70] sm:$0xff]
                %428 = vst [vmem:[%s398 + $0x70] sm:$0xff] %v427
                %v429 = vld [vmem:[%s397 + $0x78] sm:$0xff]
                %430 = vst [vmem:[%s398 + $0x78] sm:$0xff] %v429
                %v431 = vld [vmem:[%s397 + $0x200] sm:$0xff]
                %432 = vst [vmem:[%s398 + $0x80] sm:$0xff] %v431
                %v433 = vld [vmem:[%s397 + $0x208] sm:$0xff]
                %434 = vst [vmem:[%s398 + $0x88] sm:$0xff] %v433
                %v435 = vld [vmem:[%s397 + $0x210] sm:$0xff]
                %436 = vst [vmem:[%s398 + $0x90] sm:$0xff] %v435
                %v437 = vld [vmem:[%s397 + $0x218] sm:$0xff]
                %438 = vst [vmem:[%s398 + $0x98] sm:$0xff] %v437
                %v439 = vld [vmem:[%s397 + $0x220] sm:$0xff]
                %440 = vst [vmem:[%s398 + $0xa0] sm:$0xff] %v439
                %v441 = vld [vmem:[%s397 + $0x228] sm:$0xff]
                %442 = vst [vmem:[%s398 + $0xa8] sm:$0xff] %v441
                %v443 = vld [vmem:[%s397 + $0x230] sm:$0xff]
                %444 = vst [vmem:[%s398 + $0xb0] sm:$0xff] %v443
                %v445 = vld [vmem:[%s397 + $0x238] sm:$0xff]
                %446 = vst [vmem:[%s398 + $0xb8] sm:$0xff] %v445
                %v447 = vld [vmem:[%s397 + $0x240] sm:$0xff]
                %448 = vst [vmem:[%s398 + $0xc0] sm:$0xff] %v447
                %v449 = vld [vmem:[%s397 + $0x248] sm:$0xff]
                %450 = vst [vmem:[%s398 + $0xc8] sm:$0xff] %v449
                %v451 = vld [vmem:[%s397 + $0x250] sm:$0xff]
                %452 = vst [vmem:[%s398 + $0xd0] sm:$0xff] %v451
                %v453 = vld [vmem:[%s397 + $0x258] sm:$0xff]
                %454 = vst [vmem:[%s398 + $0xd8] sm:$0xff] %v453
                %v455 = vld [vmem:[%s397 + $0x260] sm:$0xff]
                %456 = vst [vmem:[%s398 + $0xe0] sm:$0xff] %v455
                %v457 = vld [vmem:[%s397 + $0x268] sm:$0xff]
                %458 = vst [vmem:[%s398 + $0xe8] sm:$0xff] %v457
                %v459 = vld [vmem:[%s397 + $0x270] sm:$0xff]
                %460 = vst [vmem:[%s398 + $0xf0] sm:$0xff] %v459
                %v461 = vld [vmem:[%s397 + $0x278] sm:$0xff]
                %462 = vst [vmem:[%s398 + $0xf8] sm:$0xff] %v461
                %v463 = vld [vmem:[%s397 + $0x400] sm:$0xff]
                %464 = vst [vmem:[%s398 + $0x100] sm:$0xff] %v463
                %v465 = vld [vmem:[%s397 + $0x408] sm:$0xff]
                %466 = vst [vmem:[%s398 + $0x108] sm:$0xff] %v465
                %v467 = vld [vmem:[%s397 + $0x410] sm:$0xff]
                %468 = vst [vmem:[%s398 + $0x110] sm:$0xff] %v467
                %v469 = vld [vmem:[%s397 + $0x418] sm:$0xff]
                %470 = vst [vmem:[%s398 + $0x118] sm:$0xff] %v469
                %v471 = vld [vmem:[%s397 + $0x420] sm:$0xff]
                %472 = vst [vmem:[%s398 + $0x120] sm:$0xff] %v471
                %v473 = vld [vmem:[%s397 + $0x428] sm:$0xff]
                %474 = vst [vmem:[%s398 + $0x128] sm:$0xff] %v473
                %v475 = vld [vmem:[%s397 + $0x430] sm:$0xff]
                %476 = vst [vmem:[%s398 + $0x130] sm:$0xff] %v475
                %v477 = vld [vmem:[%s397 + $0x438] sm:$0xff]
                %478 = vst [vmem:[%s398 + $0x138] sm:$0xff] %v477
                %v479 = vld [vmem:[%s397 + $0x440] sm:$0xff]
                %480 = vst [vmem:[%s398 + $0x140] sm:$0xff] %v479
                %v481 = vld [vmem:[%s397 + $0x448] sm:$0xff]
                %482 = vst [vmem:[%s398 + $0x148] sm:$0xff] %v481
                %v483 = vld [vmem:[%s397 + $0x450] sm:$0xff]
                %484 = vst [vmem:[%s398 + $0x150] sm:$0xff] %v483
                %v485 = vld [vmem:[%s397 + $0x458] sm:$0xff]
                %486 = vst [vmem:[%s398 + $0x158] sm:$0xff] %v485
                %v487 = vld [vmem:[%s397 + $0x460] sm:$0xff]
                %488 = vst [vmem:[%s398 + $0x160] sm:$0xff] %v487
                %v489 = vld [vmem:[%s397 + $0x468] sm:$0xff]
                %490 = vst [vmem:[%s398 + $0x168] sm:$0xff] %v489
                %v491 = vld [vmem:[%s397 + $0x470] sm:$0xff]
                %492 = vst [vmem:[%s398 + $0x170] sm:$0xff] %v491
                %v493 = vld [vmem:[%s397 + $0x478] sm:$0xff]
                %494 = vst [vmem:[%s398 + $0x178] sm:$0xff] %v493
              $region64: #{patched_harmonizer_forward.3} parent=58 // loop_footer
                %s396 = sadd.s32 1, %s392
              $region65: #{patched_harmonizer_forward.3} parent=58 // loop_footer_branch
                %391 = sbr.rel target = $region61
              $region66: #{patched_harmonizer_forward.3} parent=58 // loop_exit
                _
            $region59: #{patched_harmonizer_forward.3} parent=54 // pred_fallthru
              _
            // Predicated region
            $region67: #{patched_harmonizer_forward.3} parent=54 // pred_check
              _
            $region68: #{patched_harmonizer_forward.3} parent=54 // pred_check_branch
              %496 = sbr.rel target = $region70
            $region69: #{patched_harmonizer_forward.3} parent=54 // pred_region
              _
            $region70: #{patched_harmonizer_forward.3} parent=54 // pred_fallthru
              _
          $region55: #{patched_harmonizer_forward.3} parent=50 // pred_fallthru
            _
          %497 = vnop
        $region51: #{patched_harmonizer_forward.3} parent=15 // pred_fallthru
          _
        // Predicated region
        $region71: #{patched_harmonizer_forward.3} parent=15 // pred_check
          %p498 = pneg %p155
        $region72: #{patched_harmonizer_forward.3} parent=15 // pred_check_branch
          %500 = sbr.rel (%p498) target = $region74
        $region73: #{patched_harmonizer_forward.3} parent=15 // pred_region
          %s501 = smul.u32 4, %s21
          %p502 = scmp.lt.s32.totalorder %s20, 1
          %s503 = scalar_select %p502, %s20, 1
          %p504 = scmp.lt.s32.totalorder %s501, 15
          %s505 = scalar_select %p504, %s501, 15
          %s506 = smul.addr %s505, 4
          %s507 = smul.addr %s503, 64
          %s508 = sadd.s32 %s506, %s507
          %s509 = smul.addr %s508, 8
          %s510 = scalar_lea.vmem %s4, %s509
          %s511 = smul.u32 4, %s21
        $region74: #{patched_harmonizer_forward.3} parent=15 // pred_fallthru
          _
      $region16: #{patched_harmonizer_forward.3} parent=5 // pred_fallthru
        _
      %p512 = scmp.le.s32.totalorder 1, %s13
      %p513 = scmp.lt.s32.totalorder %s13, 9
      %p514 = pnand %p512, %p513
      %p515 = pneg %p514
      // Predicated region
      $region75: #{patched_harmonizer_forward.3} parent=5 // pred_check
        _
      $region76: #{patched_harmonizer_forward.3} parent=5 // pred_check_branch
        %517 = sbr.rel (%p514) target = $region78
      $region77: #{patched_harmonizer_forward.3} parent=5 // pred_region
        %s518 = ssub.s32 %s13, 1
        %s519 = sand.u32 %s92, 1
        %s520 = sand.u32 %s92, 1
        %s521 = smul.addr %s520, 384
        %s522 = scalar_lea.vmem [#allocation2], %s521
        // Predicated region
        $region79: #{patched_harmonizer_forward.3} parent=77 // pred_check
          %p523 = pneg %p105
        $region80: #{patched_harmonizer_forward.3} parent=77 // pred_check_branch
          %525 = sbr.rel (%p523) target = $region82
        $region81: #{patched_harmonizer_forward.3} parent=77 // pred_region
          _
        $region82: #{patched_harmonizer_forward.3} parent=77 // pred_fallthru
          _
        %s526 = sand.u32 %s120, 1
        %s527 = sand.u32 %s120, 1
        %s528 = smul.addr %s527, 384
        %s529 = scalar_lea.vmem [#allocation3], %s528
        // Predicated region
        $region83: #{patched_harmonizer_forward.3} parent=77 // pred_check
          %p530 = pneg %p133
        $region84: #{patched_harmonizer_forward.3} parent=77 // pred_check_branch
          %532 = sbr.rel (%p530) target = $region86
        $region85: #{patched_harmonizer_forward.3} parent=77 // pred_region
          _
        $region86: #{patched_harmonizer_forward.3} parent=77 // pred_fallthru
          _
        %p533 = scmp.lt.s32.totalorder %s22, 1
        %s534 = scalar_select %p533, %s22, 1
        %s535 = smul.addr %s534, 3
        %s536 = scalar_lea.vmem %s0, %s535
        %p537 = pneg %p51
        %p538 = pneg %p48
        %p539 = scmp.lt.s32.totalorder %s22, 1
        %s540 = scalar_select %p539, %s22, 1
        %s541 = smul.addr %s540, 3
        %s542 = scalar_lea.vmem %s1, %s541
        %p543 = pneg %p77
        %p544 = pneg %p74
        %s545 = sand.u32 %s92, 1
        %s546 = sand.u32 %s92, 1
        %s547 = smul.addr %s546, 384
        %s548 = scalar_lea.vmem [#allocation2], %s547
        %p549 = pneg %p105
        %p550 = pneg %p102
        %s551 = sand.u32 %s120, 1
        %s552 = sand.u32 %s120, 1
        %s553 = smul.addr %s552, 384
        %s554 = scalar_lea.vmem [#allocation3], %s553
        %p555 = pneg %p133
        %p556 = pneg %p130
        %s557 = smul.u32 4, %s23
        %p558 = scmp.lt.s32.totalorder %s22, 1
        %s559 = scalar_select %p558, %s22, 1
        %p560 = scmp.lt.s32.totalorder %s557, 15
        %s561 = scalar_select %p560, %s557, 15
        %s562 = smul.addr %s561, 4
        %s563 = smul.addr %s559, 64
        %s564 = sadd.s32 %s562, %s563
        %s565 = smul.addr %s564, 8
        %s566 = scalar_lea.vmem %s4, %s565
        %p567 = pneg %p161
        %p568 = pneg %p158
        %p569 = pneg %p189
        %p570 = pneg %p186
        %s571 = sand.u32 %s176, 1
        %s572 = sand.u32 %s176, 1
        %s573 = smul.addr %s572, 384
        %s574 = scalar_lea.vmem [#allocation4], %s573
        %p575 = pneg %p217
        %p576 = pneg %p214
        %s577 = sand.u32 %s204, 1
        %s578 = sand.u32 %s204, 1
        %s579 = smul.addr %s578, 384
        %s580 = scalar_lea.vmem [#allocation5], %s579
        %p581 = scmp.lt.s32.totalorder %s22, 1
        %s582 = scalar_select %p581, %s22, 1
        %s583 = smul.addr %s582, 3
        %s584 = scalar_lea.vmem %s0, %s583
        %p585 = scmp.lt.s32.totalorder %s22, 1
        %s586 = scalar_select %p585, %s22, 1
        %s587 = smul.addr %s586, 3
        %s588 = scalar_lea.vmem %s1, %s587
        %s589 = smul.u32 4, %s23
        %s590 = smul.u32 4, %s23
        %s591 = smul.u32 4, %s23
        %p592 = scmp.lt.s32.totalorder %s22, 1
        %s593 = scalar_select %p592, %s22, 1
        %p594 = scmp.lt.s32.totalorder %s591, 15
        %s595 = scalar_select %p594, %s591, 15
        %s596 = smul.addr %s595, 4
        %s597 = smul.addr %s593, 64
        %s598 = sadd.s32 %s596, %s597
        %s599 = smul.addr %s598, 8
        %s600 = scalar_lea.vmem %s4, %s599
        %s601 = smul.u32 4, %s23
        %s602 = smul.u32 4, %s23
        %s603 = smul.u32 4, %s23
        %v604 = vld [vmem:[%s522] sm:$0xff]
        %v605 = vld [vmem:[%s522 + $0x8] sm:$0xff]
        %v606 = vld [vmem:[%s522 + $0x10] sm:$0xff]
        %v607 = vld [vmem:[%s522 + $0x18] sm:$0xff]
        %v608 = vld [vmem:[%s522 + $0x20] sm:$0xff]
        %v609 = vld [vmem:[%s522 + $0x28] sm:$0xff]
        %v610 = vld [vmem:[%s522 + $0x30] sm:$0xff]
        %v611 = vld [vmem:[%s522 + $0x38] sm:$0xff]
        %v612 = vld [vmem:[%s522 + $0x40] sm:$0xff]
        %v613 = vld [vmem:[%s522 + $0x48] sm:$0xff]
        %v614 = vld [vmem:[%s522 + $0x50] sm:$0xff]
        %v615 = vld [vmem:[%s522 + $0x58] sm:$0xff]
        %v616 = vld [vmem:[%s522 + $0x60] sm:$0xff]
        %v617 = vld [vmem:[%s522 + $0x68] sm:$0xff]
        %v618 = vld [vmem:[%s522 + $0x70] sm:$0xff]
        %v619 = vld [vmem:[%s522 + $0x78] sm:$0xff]
        %v620 = vld [vmem:[%s522 + $0x80] sm:$0xff]
        %v621 = vld [vmem:[%s522 + $0x88] sm:$0xff]
        %v622 = vld [vmem:[%s522 + $0x90] sm:$0xff]
        %v623 = vld [vmem:[%s522 + $0x98] sm:$0xff]
        %v624 = vld [vmem:[%s522 + $0xa0] sm:$0xff]
        %v625 = vld [vmem:[%s522 + $0xa8] sm:$0xff]
        %v626 = vld [vmem:[%s522 + $0xb0] sm:$0xff]
        %v627 = vld [vmem:[%s522 + $0xb8] sm:$0xff]
        %v628 = vld [vmem:[%s522 + $0xc0] sm:$0xff]
        %v629 = vld [vmem:[%s522 + $0xc8] sm:$0xff]
        %v630 = vld [vmem:[%s522 + $0xd0] sm:$0xff]
        %v631 = vld [vmem:[%s522 + $0xd8] sm:$0xff]
        %v632 = vld [vmem:[%s522 + $0xe0] sm:$0xff]
        %v633 = vld [vmem:[%s522 + $0xe8] sm:$0xff]
        %v634 = vld [vmem:[%s522 + $0xf0] sm:$0xff]
        %v635 = vld [vmem:[%s522 + $0xf8] sm:$0xff]
        %v636 = vld [vmem:[%s522 + $0x100] sm:$0xff]
        %v637 = vld [vmem:[%s522 + $0x108] sm:$0xff]
        %v638 = vld [vmem:[%s522 + $0x110] sm:$0xff]
        %v639 = vld [vmem:[%s522 + $0x118] sm:$0xff]
        %v640 = vld [vmem:[%s522 + $0x120] sm:$0xff]
        %v641 = vld [vmem:[%s522 + $0x128] sm:$0xff]
        %v642 = vld [vmem:[%s522 + $0x130] sm:$0xff]
        %v643 = vld [vmem:[%s522 + $0x138] sm:$0xff]
        %v644 = vld [vmem:[%s522 + $0x140] sm:$0xff]
        %v645 = vld [vmem:[%s522 + $0x148] sm:$0xff]
        %v646 = vld [vmem:[%s522 + $0x150] sm:$0xff]
        %v647 = vld [vmem:[%s522 + $0x158] sm:$0xff]
        %v648 = vld [vmem:[%s522 + $0x160] sm:$0xff]
        %v649 = vld [vmem:[%s522 + $0x168] sm:$0xff]
        %v650 = vld [vmem:[%s522 + $0x170] sm:$0xff]
        %v651 = vld [vmem:[%s522 + $0x178] sm:$0xff]
        %v652 = vld [vmem:[%s600] sm:$0xff]
        %v653 = vld [vmem:[%s600 + $0x8] sm:$0xff]
        %v654 = vld [vmem:[%s600 + $0x10] sm:$0xff]
        %v655 = vld [vmem:[%s600 + $0x18] sm:$0xff]
        %v656 = vld [vmem:[%s600 + $0x20] sm:$0xff]
        %v657 = vld [vmem:[%s600 + $0x28] sm:$0xff]
        %v658 = vld [vmem:[%s600 + $0x30] sm:$0xff]
        %v659 = vld [vmem:[%s600 + $0x38] sm:$0xff]
        %v660 = vld [vmem:[%s600 + $0x40] sm:$0xff]
        %v661 = vld [vmem:[%s600 + $0x48] sm:$0xff]
        %v662 = vld [vmem:[%s600 + $0x50] sm:$0xff]
        %v663 = vld [vmem:[%s600 + $0x58] sm:$0xff]
        %v664 = vld [vmem:[%s600 + $0x60] sm:$0xff]
        %v665 = vld [vmem:[%s600 + $0x68] sm:$0xff]
        %v666 = vld [vmem:[%s600 + $0x70] sm:$0xff]
        %v667 = vld [vmem:[%s600 + $0x78] sm:$0xff]
        %v668 = vld [vmem:[%s529] sm:$0xff]
        %v669 = vld [vmem:[%s529 + $0x8] sm:$0xff]
        %v670 = vld [vmem:[%s529 + $0x10] sm:$0xff]
        %v671 = vld [vmem:[%s529 + $0x18] sm:$0xff]
        %v672 = vld [vmem:[%s529 + $0x20] sm:$0xff]
        %v673 = vld [vmem:[%s529 + $0x28] sm:$0xff]
        %v674 = vld [vmem:[%s529 + $0x30] sm:$0xff]
        %v675 = vld [vmem:[%s529 + $0x38] sm:$0xff]
        %v676 = vld [vmem:[%s529 + $0x40] sm:$0xff]
        %v677 = vld [vmem:[%s529 + $0x48] sm:$0xff]
        %v678 = vld [vmem:[%s529 + $0x50] sm:$0xff]
        %v679 = vld [vmem:[%s529 + $0x58] sm:$0xff]
        %v680 = vld [vmem:[%s529 + $0x60] sm:$0xff]
        %v681 = vld [vmem:[%s529 + $0x68] sm:$0xff]
        %v682 = vld [vmem:[%s529 + $0x70] sm:$0xff]
        %v683 = vld [vmem:[%s529 + $0x78] sm:$0xff]
        %v684 = vld [vmem:[%s529 + $0x80] sm:$0xff]
        %v685 = vld [vmem:[%s529 + $0x88] sm:$0xff]
        %v686 = vld [vmem:[%s529 + $0x90] sm:$0xff]
        %v687 = vld [vmem:[%s529 + $0x98] sm:$0xff]
        %v688 = vld [vmem:[%s529 + $0xa0] sm:$0xff]
        %v689 = vld [vmem:[%s529 + $0xa8] sm:$0xff]
        %v690 = vld [vmem:[%s529 + $0xb0] sm:$0xff]
        %v691 = vld [vmem:[%s529 + $0xb8] sm:$0xff]
        %v692 = vld [vmem:[%s529 + $0xc0] sm:$0xff]
        %v693 = vld [vmem:[%s529 + $0xc8] sm:$0xff]
        %v694 = vld [vmem:[%s529 + $0xd0] sm:$0xff]
        %v695 = vld [vmem:[%s529 + $0xd8] sm:$0xff]
        %v696 = vld [vmem:[%s529 + $0xe0] sm:$0xff]
        %v697 = vld [vmem:[%s529 + $0xe8] sm:$0xff]
        %v698 = vld [vmem:[%s529 + $0xf0] sm:$0xff]
        %v699 = vld [vmem:[%s529 + $0xf8] sm:$0xff]
        %v700 = vld [vmem:[%s529 + $0x100] sm:$0xff]
        %v701 = vld [vmem:[%s529 + $0x108] sm:$0xff]
        %v702 = vld [vmem:[%s529 + $0x110] sm:$0xff]
        %v703 = vld [vmem:[%s529 + $0x118] sm:$0xff]
        %v704 = vld [vmem:[%s529 + $0x120] sm:$0xff]
        %v705 = vld [vmem:[%s529 + $0x128] sm:$0xff]
        %v706 = vld [vmem:[%s529 + $0x130] sm:$0xff]
        %v707 = vld [vmem:[%s529 + $0x138] sm:$0xff]
        %v708 = vld [vmem:[%s529 + $0x140] sm:$0xff]
        %v709 = vld [vmem:[%s529 + $0x148] sm:$0xff]
        %v710 = vld [vmem:[%s529 + $0x150] sm:$0xff]
        %v711 = vld [vmem:[%s529 + $0x158] sm:$0xff]
        %v712 = vld [vmem:[%s529 + $0x160] sm:$0xff]
        %v713 = vld [vmem:[%s529 + $0x168] sm:$0xff]
        %v714 = vld [vmem:[%s529 + $0x170] sm:$0xff]
        %v715 = vld [vmem:[%s529 + $0x178] sm:$0xff]
        %v716 = vmul.f32 %v668, 0.003921569
        %v717 = vmul.f32 %v669, 0.003921569
        %v718 = vmul.f32 %v670, 0.003921569
        %v719 = vmul.f32 %v671, 0.003921569
        %v720 = vmul.f32 %v672, 0.003921569
        %v721 = vmul.f32 %v673, 0.003921569
        %v722 = vmul.f32 %v674, 0.003921569
        %v723 = vmul.f32 %v675, 0.003921569
        %v724 = vmul.f32 %v676, 0.003921569
        %v725 = vmul.f32 %v677, 0.003921569
        %v726 = vmul.f32 %v678, 0.003921569
        %v727 = vmul.f32 %v679, 0.003921569
        %v728 = vmul.f32 %v680, 0.003921569
        %v729 = vmul.f32 %v681, 0.003921569
        %v730 = vmul.f32 %v682, 0.003921569
        %v731 = vmul.f32 %v683, 0.003921569
        %v732 = vmul.f32 %v684, 0.003921569
        %v733 = vmul.f32 %v685, 0.003921569
        %v734 = vmul.f32 %v686, 0.003921569
        %v735 = vmul.f32 %v687, 0.003921569
        %v736 = vmul.f32 %v688, 0.003921569
        %v737 = vmul.f32 %v689, 0.003921569
        %v738 = vmul.f32 %v690, 0.003921569
        %v739 = vmul.f32 %v691, 0.003921569
        %v740 = vmul.f32 %v692, 0.003921569
        %v741 = vmul.f32 %v693, 0.003921569
        %v742 = vmul.f32 %v694, 0.003921569
        %v743 = vmul.f32 %v695, 0.003921569
        %v744 = vmul.f32 %v696, 0.003921569
        %v745 = vmul.f32 %v697, 0.003921569
        %v746 = vmul.f32 %v698, 0.003921569
        %v747 = vmul.f32 %v699, 0.003921569
        %v748 = vmul.f32 %v700, 0.003921569
        %v749 = vmul.f32 %v701, 0.003921569
        %v750 = vmul.f32 %v702, 0.003921569
        %v751 = vmul.f32 %v703, 0.003921569
        %v752 = vmul.f32 %v704, 0.003921569
        %v753 = vmul.f32 %v705, 0.003921569
        %v754 = vmul.f32 %v706, 0.003921569
        %v755 = vmul.f32 %v707, 0.003921569
        %v756 = vmul.f32 %v708, 0.003921569
        %v757 = vmul.f32 %v709, 0.003921569
        %v758 = vmul.f32 %v710, 0.003921569
        %v759 = vmul.f32 %v711, 0.003921569
        %v760 = vmul.f32 %v712, 0.003921569
        %v761 = vmul.f32 %v713, 0.003921569
        %v762 = vmul.f32 %v714, 0.003921569
        %v763 = vmul.f32 %v715, 0.003921569
        %v764 = vld [vmem:[%s584] sm:$0x1]
        %v765 = vld [vmem:[%s584 + $0x1] sm:$0x1]
        %v766 = vld [vmem:[%s584 + $0x2] sm:$0x1]
        %v770 = vlaneseq
        %v771 = vshrl.u32 %v770, 7
        %v772 = vsub.s32 0, %v771
        %v773 = vrot.slane %v764, %v772
        %v774 = vlaneseq
        %v775 = vshrl.u32 %v774, 7
        %v776 = vsub.s32 0, %v775
        %v777 = vrot.slane %v765, %v776
        %v778 = vlaneseq
        %v779 = vshrl.u32 %v778, 7
        %v780 = vsub.s32 0, %v779
        %v781 = vrot.slane %v766, %v780
        %782 = vset.pattern.permute.xlu0 0
        %783 = vperm.xlu0 %782, %v773
        %v784 = vpop.permute.xlu0 %783
        %786 = vset.pattern.permute.xlu0 0
        %787 = vperm.xlu0 %786, %v777
        %v788 = vpop.permute.xlu0 %787
        %790 = vset.pattern.permute.xlu0 0
        %791 = vperm.xlu0 %790, %v781
        %v792 = vpop.permute.xlu0 %791
        %v794 = vmul.f32 %v604, %v784
        %v795 = vmul.f32 %v605, %v784
        %v796 = vmul.f32 %v606, %v784
        %v797 = vmul.f32 %v607, %v784
        %v798 = vmul.f32 %v608, %v784
        %v799 = vmul.f32 %v609, %v784
        %v800 = vmul.f32 %v610, %v784
        %v801 = vmul.f32 %v611, %v784
        %v802 = vmul.f32 %v612, %v784
        %v803 = vmul.f32 %v613, %v784
        %v804 = vmul.f32 %v614, %v784
        %v805 = vmul.f32 %v615, %v784
        %v806 = vmul.f32 %v616, %v784
        %v807 = vmul.f32 %v617, %v784
        %v808 = vmul.f32 %v618, %v784
        %v809 = vmul.f32 %v619, %v784
        %v810 = vmul.f32 %v620, %v788
        %v811 = vmul.f32 %v621, %v788
        %v812 = vmul.f32 %v622, %v788
        %v813 = vmul.f32 %v623, %v788
        %v814 = vmul.f32 %v624, %v788
        %v815 = vmul.f32 %v625, %v788
        %v816 = vmul.f32 %v626, %v788
        %v817 = vmul.f32 %v627, %v788
        %v818 = vmul.f32 %v628, %v788
        %v819 = vmul.f32 %v629, %v788
        %v820 = vmul.f32 %v630, %v788
        %v821 = vmul.f32 %v631, %v788
        %v822 = vmul.f32 %v632, %v788
        %v823 = vmul.f32 %v633, %v788
        %v824 = vmul.f32 %v634, %v788
        %v825 = vmul.f32 %v635, %v788
        %v826 = vmul.f32 %v636, %v792
        %v827 = vmul.f32 %v637, %v792
        %v828 = vmul.f32 %v638, %v792
        %v829 = vmul.f32 %v639, %v792
        %v830 = vmul.f32 %v640, %v792
        %v831 = vmul.f32 %v641, %v792
        %v832 = vmul.f32 %v642, %v792
        %v833 = vmul.f32 %v643, %v792
        %v834 = vmul.f32 %v644, %v792
        %v835 = vmul.f32 %v645, %v792
        %v836 = vmul.f32 %v646, %v792
        %v837 = vmul.f32 %v647, %v792
        %v838 = vmul.f32 %v648, %v792
        %v839 = vmul.f32 %v649, %v792
        %v840 = vmul.f32 %v650, %v792
        %v841 = vmul.f32 %v651, %v792
        %v842 = vld [vmem:[%s588] sm:$0x1]
        %v843 = vld [vmem:[%s588 + $0x1] sm:$0x1]
        %v844 = vld [vmem:[%s588 + $0x2] sm:$0x1]
        %v848 = vlaneseq
        %v849 = vshrl.u32 %v848, 7
        %v850 = vsub.s32 0, %v849
        %v851 = vrot.slane %v842, %v850
        %v852 = vlaneseq
        %v853 = vshrl.u32 %v852, 7
        %v854 = vsub.s32 0, %v853
        %v855 = vrot.slane %v843, %v854
        %v856 = vlaneseq
        %v857 = vshrl.u32 %v856, 7
        %v858 = vsub.s32 0, %v857
        %v859 = vrot.slane %v844, %v858
        %860 = vset.pattern.permute.xlu0 0
        %861 = vperm.xlu0 %860, %v851
        %v862 = vpop.permute.xlu0 %861
        %864 = vset.pattern.permute.xlu0 0
        %865 = vperm.xlu0 %864, %v855
        %v866 = vpop.permute.xlu0 %865
        %868 = vset.pattern.permute.xlu0 0
        %869 = vperm.xlu0 %868, %v859
        %v870 = vpop.permute.xlu0 %869
        %v872 = vadd.f32 %v794, %v862
        %v873 = vadd.f32 %v795, %v862
        %v874 = vadd.f32 %v796, %v862
        %v875 = vadd.f32 %v797, %v862
        %v876 = vadd.f32 %v798, %v862
        %v877 = vadd.f32 %v799, %v862
        %v878 = vadd.f32 %v800, %v862
        %v879 = vadd.f32 %v801, %v862
        %v880 = vadd.f32 %v802, %v862
        %v881 = vadd.f32 %v803, %v862
        %v882 = vadd.f32 %v804, %v862
        %v883 = vadd.f32 %v805, %v862
        %v884 = vadd.f32 %v806, %v862
        %v885 = vadd.f32 %v807, %v862
        %v886 = vadd.f32 %v808, %v862
        %v887 = vadd.f32 %v809, %v862
        %v888 = vadd.f32 %v810, %v866
        %v889 = vadd.f32 %v811, %v866
        %v890 = vadd.f32 %v812, %v866
        %v891 = vadd.f32 %v813, %v866
        %v892 = vadd.f32 %v814, %v866
        %v893 = vadd.f32 %v815, %v866
        %v894 = vadd.f32 %v816, %v866
        %v895 = vadd.f32 %v817, %v866
        %v896 = vadd.f32 %v818, %v866
        %v897 = vadd.f32 %v819, %v866
        %v898 = vadd.f32 %v820, %v866
        %v899 = vadd.f32 %v821, %v866
        %v900 = vadd.f32 %v822, %v866
        %v901 = vadd.f32 %v823, %v866
        %v902 = vadd.f32 %v824, %v866
        %v903 = vadd.f32 %v825, %v866
        %v904 = vadd.f32 %v826, %v870
        %v905 = vadd.f32 %v827, %v870
        %v906 = vadd.f32 %v828, %v870
        %v907 = vadd.f32 %v829, %v870
        %v908 = vadd.f32 %v830, %v870
        %v909 = vadd.f32 %v831, %v870
        %v910 = vadd.f32 %v832, %v870
        %v911 = vadd.f32 %v833, %v870
        %v912 = vadd.f32 %v834, %v870
        %v913 = vadd.f32 %v835, %v870
        %v914 = vadd.f32 %v836, %v870
        %v915 = vadd.f32 %v837, %v870
        %v916 = vadd.f32 %v838, %v870
        %v917 = vadd.f32 %v839, %v870
        %v918 = vadd.f32 %v840, %v870
        %v919 = vadd.f32 %v841, %v870
        %920 = vst [vmem:[%s580] sm:$0xff] %v872
        %921 = vst [vmem:[%s580 + $0x8] sm:$0xff] %v873
        %922 = vst [vmem:[%s580 + $0x10] sm:$0xff] %v874
        %923 = vst [vmem:[%s580 + $0x18] sm:$0xff] %v875
        %924 = vst [vmem:[%s580 + $0x20] sm:$0xff] %v876
        %925 = vst [vmem:[%s580 + $0x28] sm:$0xff] %v877
        %926 = vst [vmem:[%s580 + $0x30] sm:$0xff] %v878
        %927 = vst [vmem:[%s580 + $0x38] sm:$0xff] %v879
        %928 = vst [vmem:[%s580 + $0x40] sm:$0xff] %v880
        %929 = vst [vmem:[%s580 + $0x48] sm:$0xff] %v881
        %930 = vst [vmem:[%s580 + $0x50] sm:$0xff] %v882
        %931 = vst [vmem:[%s580 + $0x58] sm:$0xff] %v883
        %932 = vst [vmem:[%s580 + $0x60] sm:$0xff] %v884
        %933 = vst [vmem:[%s580 + $0x68] sm:$0xff] %v885
        %934 = vst [vmem:[%s580 + $0x70] sm:$0xff] %v886
        %935 = vst [vmem:[%s580 + $0x78] sm:$0xff] %v887
        %936 = vst [vmem:[%s580 + $0x80] sm:$0xff] %v888
        %937 = vst [vmem:[%s580 + $0x88] sm:$0xff] %v889
        %938 = vst [vmem:[%s580 + $0x90] sm:$0xff] %v890
        %939 = vst [vmem:[%s580 + $0x98] sm:$0xff] %v891
        %940 = vst [vmem:[%s580 + $0xa0] sm:$0xff] %v892
        %941 = vst [vmem:[%s580 + $0xa8] sm:$0xff] %v893
        %942 = vst [vmem:[%s580 + $0xb0] sm:$0xff] %v894
        %943 = vst [vmem:[%s580 + $0xb8] sm:$0xff] %v895
        %944 = vst [vmem:[%s580 + $0xc0] sm:$0xff] %v896
        %945 = vst [vmem:[%s580 + $0xc8] sm:$0xff] %v897
        %946 = vst [vmem:[%s580 + $0xd0] sm:$0xff] %v898
        %947 = vst [vmem:[%s580 + $0xd8] sm:$0xff] %v899
        %948 = vst [vmem:[%s580 + $0xe0] sm:$0xff] %v900
        %949 = vst [vmem:[%s580 + $0xe8] sm:$0xff] %v901
        %950 = vst [vmem:[%s580 + $0xf0] sm:$0xff] %v902
        %951 = vst [vmem:[%s580 + $0xf8] sm:$0xff] %v903
        %952 = vst [vmem:[%s580 + $0x100] sm:$0xff] %v904
        %953 = vst [vmem:[%s580 + $0x108] sm:$0xff] %v905
        %954 = vst [vmem:[%s580 + $0x110] sm:$0xff] %v906
        %955 = vst [vmem:[%s580 + $0x118] sm:$0xff] %v907
        %956 = vst [vmem:[%s580 + $0x120] sm:$0xff] %v908
        %957 = vst [vmem:[%s580 + $0x128] sm:$0xff] %v909
        %958 = vst [vmem:[%s580 + $0x130] sm:$0xff] %v910
        %959 = vst [vmem:[%s580 + $0x138] sm:$0xff] %v911
        %960 = vst [vmem:[%s580 + $0x140] sm:$0xff] %v912
        %961 = vst [vmem:[%s580 + $0x148] sm:$0xff] %v913
        %962 = vst [vmem:[%s580 + $0x150] sm:$0xff] %v914
        %963 = vst [vmem:[%s580 + $0x158] sm:$0xff] %v915
        %964 = vst [vmem:[%s580 + $0x160] sm:$0xff] %v916
        %965 = vst [vmem:[%s580 + $0x168] sm:$0xff] %v917
        %966 = vst [vmem:[%s580 + $0x170] sm:$0xff] %v918
        %967 = vst [vmem:[%s580 + $0x178] sm:$0xff] %v919
        %v968 = vsub.f32 %v872, %v716
        %v969 = vsub.f32 %v873, %v717
        %v970 = vsub.f32 %v874, %v718
        %v971 = vsub.f32 %v875, %v719
        %v972 = vsub.f32 %v876, %v720
        %v973 = vsub.f32 %v877, %v721
        %v974 = vsub.f32 %v878, %v722
        %v975 = vsub.f32 %v879, %v723
        %v976 = vsub.f32 %v880, %v724
        %v977 = vsub.f32 %v881, %v725
        %v978 = vsub.f32 %v882, %v726
        %v979 = vsub.f32 %v883, %v727
        %v980 = vsub.f32 %v884, %v728
        %v981 = vsub.f32 %v885, %v729
        %v982 = vsub.f32 %v886, %v730
        %v983 = vsub.f32 %v887, %v731
        %v984 = vsub.f32 %v888, %v732
        %v985 = vsub.f32 %v889, %v733
        %v986 = vsub.f32 %v890, %v734
        %v987 = vsub.f32 %v891, %v735
        %v988 = vsub.f32 %v892, %v736
        %v989 = vsub.f32 %v893, %v737
        %v990 = vsub.f32 %v894, %v738
        %v991 = vsub.f32 %v895, %v739
        %v992 = vsub.f32 %v896, %v740
        %v993 = vsub.f32 %v897, %v741
        %v994 = vsub.f32 %v898, %v742
        %v995 = vsub.f32 %v899, %v743
        %v996 = vsub.f32 %v900, %v744
        %v997 = vsub.f32 %v901, %v745
        %v998 = vsub.f32 %v902, %v746
        %v999 = vsub.f32 %v903, %v747
        %v1000 = vsub.f32 %v904, %v748
        %v1001 = vsub.f32 %v905, %v749
        %v1002 = vsub.f32 %v906, %v750
        %v1003 = vsub.f32 %v907, %v751
        %v1004 = vsub.f32 %v908, %v752
        %v1005 = vsub.f32 %v909, %v753
        %v1006 = vsub.f32 %v910, %v754
        %v1007 = vsub.f32 %v911, %v755
        %v1008 = vsub.f32 %v912, %v756
        %v1009 = vsub.f32 %v913, %v757
        %v1010 = vsub.f32 %v914, %v758
        %v1011 = vsub.f32 %v915, %v759
        %v1012 = vsub.f32 %v916, %v760
        %v1013 = vsub.f32 %v917, %v761
        %v1014 = vsub.f32 %v918, %v762
        %v1015 = vsub.f32 %v919, %v763
        %v1016 = vmul.f32 %v968, %v652
        %v1017 = vmul.f32 %v969, %v653
        %v1018 = vmul.f32 %v970, %v654
        %v1019 = vmul.f32 %v971, %v655
        %v1020 = vmul.f32 %v972, %v656
        %v1021 = vmul.f32 %v973, %v657
        %v1022 = vmul.f32 %v974, %v658
        %v1023 = vmul.f32 %v975, %v659
        %v1024 = vmul.f32 %v976, %v660
        %v1025 = vmul.f32 %v977, %v661
        %v1026 = vmul.f32 %v978, %v662
        %v1027 = vmul.f32 %v979, %v663
        %v1028 = vmul.f32 %v980, %v664
        %v1029 = vmul.f32 %v981, %v665
        %v1030 = vmul.f32 %v982, %v666
        %v1031 = vmul.f32 %v983, %v667
        %v1032 = vmul.f32 %v984, %v652
        %v1033 = vmul.f32 %v985, %v653
        %v1034 = vmul.f32 %v986, %v654
        %v1035 = vmul.f32 %v987, %v655
        %v1036 = vmul.f32 %v988, %v656
        %v1037 = vmul.f32 %v989, %v657
        %v1038 = vmul.f32 %v990, %v658
        %v1039 = vmul.f32 %v991, %v659
        %v1040 = vmul.f32 %v992, %v660
        %v1041 = vmul.f32 %v993, %v661
        %v1042 = vmul.f32 %v994, %v662
        %v1043 = vmul.f32 %v995, %v663
        %v1044 = vmul.f32 %v996, %v664
        %v1045 = vmul.f32 %v997, %v665
        %v1046 = vmul.f32 %v998, %v666
        %v1047 = vmul.f32 %v999, %v667
        %v1048 = vmul.f32 %v1000, %v652
        %v1049 = vmul.f32 %v1001, %v653
        %v1050 = vmul.f32 %v1002, %v654
        %v1051 = vmul.f32 %v1003, %v655
        %v1052 = vmul.f32 %v1004, %v656
        %v1053 = vmul.f32 %v1005, %v657
        %v1054 = vmul.f32 %v1006, %v658
        %v1055 = vmul.f32 %v1007, %v659
        %v1056 = vmul.f32 %v1008, %v660
        %v1057 = vmul.f32 %v1009, %v661
        %v1058 = vmul.f32 %v1010, %v662
        %v1059 = vmul.f32 %v1011, %v663
        %v1060 = vmul.f32 %v1012, %v664
        %v1061 = vmul.f32 %v1013, %v665
        %v1062 = vmul.f32 %v1014, %v666
        %v1063 = vmul.f32 %v1015, %v667
        %v1064 = vadd.f32 %v1016, %v716
        %v1065 = vadd.f32 %v1017, %v717
        %v1066 = vadd.f32 %v1018, %v718
        %v1067 = vadd.f32 %v1019, %v719
        %v1068 = vadd.f32 %v1020, %v720
        %v1069 = vadd.f32 %v1021, %v721
        %v1070 = vadd.f32 %v1022, %v722
        %v1071 = vadd.f32 %v1023, %v723
        %v1072 = vadd.f32 %v1024, %v724
        %v1073 = vadd.f32 %v1025, %v725
        %v1074 = vadd.f32 %v1026, %v726
        %v1075 = vadd.f32 %v1027, %v727
        %v1076 = vadd.f32 %v1028, %v728
        %v1077 = vadd.f32 %v1029, %v729
        %v1078 = vadd.f32 %v1030, %v730
        %v1079 = vadd.f32 %v1031, %v731
        %v1080 = vadd.f32 %v1032, %v732
        %v1081 = vadd.f32 %v1033, %v733
        %v1082 = vadd.f32 %v1034, %v734
        %v1083 = vadd.f32 %v1035, %v735
        %v1084 = vadd.f32 %v1036, %v736
        %v1085 = vadd.f32 %v1037, %v737
        %v1086 = vadd.f32 %v1038, %v738
        %v1087 = vadd.f32 %v1039, %v739
        %v1088 = vadd.f32 %v1040, %v740
        %v1089 = vadd.f32 %v1041, %v741
        %v1090 = vadd.f32 %v1042, %v742
        %v1091 = vadd.f32 %v1043, %v743
        %v1092 = vadd.f32 %v1044, %v744
        %v1093 = vadd.f32 %v1045, %v745
        %v1094 = vadd.f32 %v1046, %v746
        %v1095 = vadd.f32 %v1047, %v747
        %v1096 = vadd.f32 %v1048, %v748
        %v1097 = vadd.f32 %v1049, %v749
        %v1098 = vadd.f32 %v1050, %v750
        %v1099 = vadd.f32 %v1051, %v751
        %v1100 = vadd.f32 %v1052, %v752
        %v1101 = vadd.f32 %v1053, %v753
        %v1102 = vadd.f32 %v1054, %v754
        %v1103 = vadd.f32 %v1055, %v755
        %v1104 = vadd.f32 %v1056, %v756
        %v1105 = vadd.f32 %v1057, %v757
        %v1106 = vadd.f32 %v1058, %v758
        %v1107 = vadd.f32 %v1059, %v759
        %v1108 = vadd.f32 %v1060, %v760
        %v1109 = vadd.f32 %v1061, %v761
        %v1110 = vadd.f32 %v1062, %v762
        %v1111 = vadd.f32 %v1063, %v763
        %1112 = vst [vmem:[%s574] sm:$0xff] %v1064
        %1113 = vst [vmem:[%s574 + $0x8] sm:$0xff] %v1065
        %1114 = vst [vmem:[%s574 + $0x10] sm:$0xff] %v1066
        %1115 = vst [vmem:[%s574 + $0x18] sm:$0xff] %v1067
        %1116 = vst [vmem:[%s574 + $0x20] sm:$0xff] %v1068
        %1117 = vst [vmem:[%s574 + $0x28] sm:$0xff] %v1069
        %1118 = vst [vmem:[%s574 + $0x30] sm:$0xff] %v1070
        %1119 = vst [vmem:[%s574 + $0x38] sm:$0xff] %v1071
        %1120 = vst [vmem:[%s574 + $0x40] sm:$0xff] %v1072
        %1121 = vst [vmem:[%s574 + $0x48] sm:$0xff] %v1073
        %1122 = vst [vmem:[%s574 + $0x50] sm:$0xff] %v1074
        %1123 = vst [vmem:[%s574 + $0x58] sm:$0xff] %v1075
        %1124 = vst [vmem:[%s574 + $0x60] sm:$0xff] %v1076
        %1125 = vst [vmem:[%s574 + $0x68] sm:$0xff] %v1077
        %1126 = vst [vmem:[%s574 + $0x70] sm:$0xff] %v1078
        %1127 = vst [vmem:[%s574 + $0x78] sm:$0xff] %v1079
        %1128 = vst [vmem:[%s574 + $0x80] sm:$0xff] %v1080
        %1129 = vst [vmem:[%s574 + $0x88] sm:$0xff] %v1081
        %1130 = vst [vmem:[%s574 + $0x90] sm:$0xff] %v1082
        %1131 = vst [vmem:[%s574 + $0x98] sm:$0xff] %v1083
        %1132 = vst [vmem:[%s574 + $0xa0] sm:$0xff] %v1084
        %1133 = vst [vmem:[%s574 + $0xa8] sm:$0xff] %v1085
        %1134 = vst [vmem:[%s574 + $0xb0] sm:$0xff] %v1086
        %1135 = vst [vmem:[%s574 + $0xb8] sm:$0xff] %v1087
        %1136 = vst [vmem:[%s574 + $0xc0] sm:$0xff] %v1088
        %1137 = vst [vmem:[%s574 + $0xc8] sm:$0xff] %v1089
        %1138 = vst [vmem:[%s574 + $0xd0] sm:$0xff] %v1090
        %1139 = vst [vmem:[%s574 + $0xd8] sm:$0xff] %v1091
        %1140 = vst [vmem:[%s574 + $0xe0] sm:$0xff] %v1092
        %1141 = vst [vmem:[%s574 + $0xe8] sm:$0xff] %v1093
        %1142 = vst [vmem:[%s574 + $0xf0] sm:$0xff] %v1094
        %1143 = vst [vmem:[%s574 + $0xf8] sm:$0xff] %v1095
        %1144 = vst [vmem:[%s574 + $0x100] sm:$0xff] %v1096
        %1145 = vst [vmem:[%s574 + $0x108] sm:$0xff] %v1097
        %1146 = vst [vmem:[%s574 + $0x110] sm:$0xff] %v1098
        %1147 = vst [vmem:[%s574 + $0x118] sm:$0xff] %v1099
        %1148 = vst [vmem:[%s574 + $0x120] sm:$0xff] %v1100
        %1149 = vst [vmem:[%s574 + $0x128] sm:$0xff] %v1101
        %1150 = vst [vmem:[%s574 + $0x130] sm:$0xff] %v1102
        %1151 = vst [vmem:[%s574 + $0x138] sm:$0xff] %v1103
        %1152 = vst [vmem:[%s574 + $0x140] sm:$0xff] %v1104
        %1153 = vst [vmem:[%s574 + $0x148] sm:$0xff] %v1105
        %1154 = vst [vmem:[%s574 + $0x150] sm:$0xff] %v1106
        %1155 = vst [vmem:[%s574 + $0x158] sm:$0xff] %v1107
        %1156 = vst [vmem:[%s574 + $0x160] sm:$0xff] %v1108
        %1157 = vst [vmem:[%s574 + $0x168] sm:$0xff] %v1109
        %1158 = vst [vmem:[%s574 + $0x170] sm:$0xff] %v1110
        %1159 = vst [vmem:[%s574 + $0x178] sm:$0xff] %v1111
        %s1160 = sand.u32 %s176, 1
        %s1161 = sand.u32 %s176, 1
        %s1162 = smul.addr %s1161, 384
        %s1163 = scalar_lea.vmem [#allocation4], %s1162
        %s1164 = sand.u32 %s204, 1
        %s1165 = sand.u32 %s204, 1
        %s1166 = smul.addr %s1165, 384
        %s1167 = scalar_lea.vmem [#allocation5], %s1166
        // Predicated region
        $region87: #{patched_harmonizer_forward.3} parent=77 // pred_check
          %p1168 = pneg %p186
        $region88: #{patched_harmonizer_forward.3} parent=77 // pred_check_branch
          %1170 = sbr.rel (%p1168) target = $region90
        $region89: #{patched_harmonizer_forward.3} parent=77 // pred_region
          %s1171 = smul.u32 4, %s23
          %s1172 = smul.addr %s1171, 4
          %s1173 = smul.addr %s22, 192
          %s1174 = sadd.s32 %s1172, %s1173
          %s1175 = smul.addr %s1174, 8
          %s1176 = scalar_lea.vmem %s5, %s1175
          // Predicated region
          $region91: #{patched_harmonizer_forward.3} parent=89 // pred_check
            _
          $region92: #{patched_harmonizer_forward.3} parent=89 // pred_check_branch
            %1178 = sbr.rel (0) target = $region94
          $region93: #{patched_harmonizer_forward.3} parent=89 // pred_region
            // Predicated region
            $region95: #{patched_harmonizer_forward.3} parent=93 // pred_check
              _
            $region96: #{patched_harmonizer_forward.3} parent=93 // pred_check_branch
              %1180 = sbr.rel (0) target = $region98
            $region97: #{patched_harmonizer_forward.3} parent=93 // pred_region
              loop: start=0, step=1, limit=1
              $region99: #{patched_harmonizer_forward.3} parent=97 // loop_pre_header
                _
              $region100: #{patched_harmonizer_forward.3} parent=97 // loop_header
                %s1182 = sphi 0, %s1186
                %p1183 = scmp.ge.s32.totalorder %s1182, 1
                %s1187 = sphi %s1163, %s1163
                %s1188 = sphi %s1176, %s1176
              $region101: #{patched_harmonizer_forward.3} parent=97 // loop_header_branch
                %1185 = sbr.rel (%p1183) target = $region105
              $region102: #{patched_harmonizer_forward.3} parent=97 // loop_body
                %v1189 = vld [vmem:[%s1187] sm:$0xff]
                %1190 = vst [vmem:[%s1188] sm:$0xff] %v1189
                %v1191 = vld [vmem:[%s1187 + $0x8] sm:$0xff]
                %1192 = vst [vmem:[%s1188 + $0x8] sm:$0xff] %v1191
                %v1193 = vld [vmem:[%s1187 + $0x10] sm:$0xff]
                %1194 = vst [vmem:[%s1188 + $0x10] sm:$0xff] %v1193
                %v1195 = vld [vmem:[%s1187 + $0x18] sm:$0xff]
                %1196 = vst [vmem:[%s1188 + $0x18] sm:$0xff] %v1195
                %v1197 = vld [vmem:[%s1187 + $0x20] sm:$0xff]
                %1198 = vst [vmem:[%s1188 + $0x20] sm:$0xff] %v1197
                %v1199 = vld [vmem:[%s1187 + $0x28] sm:$0xff]
                %1200 = vst [vmem:[%s1188 + $0x28] sm:$0xff] %v1199
                %v1201 = vld [vmem:[%s1187 + $0x30] sm:$0xff]
                %1202 = vst [vmem:[%s1188 + $0x30] sm:$0xff] %v1201
                %v1203 = vld [vmem:[%s1187 + $0x38] sm:$0xff]
                %1204 = vst [vmem:[%s1188 + $0x38] sm:$0xff] %v1203
                %v1205 = vld [vmem:[%s1187 + $0x40] sm:$0xff]
                %1206 = vst [vmem:[%s1188 + $0x40] sm:$0xff] %v1205
                %v1207 = vld [vmem:[%s1187 + $0x48] sm:$0xff]
                %1208 = vst [vmem:[%s1188 + $0x48] sm:$0xff] %v1207
                %v1209 = vld [vmem:[%s1187 + $0x50] sm:$0xff]
                %1210 = vst [vmem:[%s1188 + $0x50] sm:$0xff] %v1209
                %v1211 = vld [vmem:[%s1187 + $0x58] sm:$0xff]
                %1212 = vst [vmem:[%s1188 + $0x58] sm:$0xff] %v1211
                %v1213 = vld [vmem:[%s1187 + $0x60] sm:$0xff]
                %1214 = vst [vmem:[%s1188 + $0x60] sm:$0xff] %v1213
                %v1215 = vld [vmem:[%s1187 + $0x68] sm:$0xff]
                %1216 = vst [vmem:[%s1188 + $0x68] sm:$0xff] %v1215
                %v1217 = vld [vmem:[%s1187 + $0x70] sm:$0xff]
                %1218 = vst [vmem:[%s1188 + $0x70] sm:$0xff] %v1217
                %v1219 = vld [vmem:[%s1187 + $0x78] sm:$0xff]
                %1220 = vst [vmem:[%s1188 + $0x78] sm:$0xff] %v1219
                %v1221 = vld [vmem:[%s1187 + $0x80] sm:$0xff]
                %1222 = vst [vmem:[%s1188 + $0x200] sm:$0xff] %v1221
                %v1223 = vld [vmem:[%s1187 + $0x88] sm:$0xff]
                %1224 = vst [vmem:[%s1188 + $0x208] sm:$0xff] %v1223
                %v1225 = vld [vmem:[%s1187 + $0x90] sm:$0xff]
                %1226 = vst [vmem:[%s1188 + $0x210] sm:$0xff] %v1225
                %v1227 = vld [vmem:[%s1187 + $0x98] sm:$0xff]
                %1228 = vst [vmem:[%s1188 + $0x218] sm:$0xff] %v1227
                %v1229 = vld [vmem:[%s1187 + $0xa0] sm:$0xff]
                %1230 = vst [vmem:[%s1188 + $0x220] sm:$0xff] %v1229
                %v1231 = vld [vmem:[%s1187 + $0xa8] sm:$0xff]
                %1232 = vst [vmem:[%s1188 + $0x228] sm:$0xff] %v1231
                %v1233 = vld [vmem:[%s1187 + $0xb0] sm:$0xff]
                %1234 = vst [vmem:[%s1188 + $0x230] sm:$0xff] %v1233
                %v1235 = vld [vmem:[%s1187 + $0xb8] sm:$0xff]
                %1236 = vst [vmem:[%s1188 + $0x238] sm:$0xff] %v1235
                %v1237 = vld [vmem:[%s1187 + $0xc0] sm:$0xff]
                %1238 = vst [vmem:[%s1188 + $0x240] sm:$0xff] %v1237
                %v1239 = vld [vmem:[%s1187 + $0xc8] sm:$0xff]
                %1240 = vst [vmem:[%s1188 + $0x248] sm:$0xff] %v1239
                %v1241 = vld [vmem:[%s1187 + $0xd0] sm:$0xff]
                %1242 = vst [vmem:[%s1188 + $0x250] sm:$0xff] %v1241
                %v1243 = vld [vmem:[%s1187 + $0xd8] sm:$0xff]
                %1244 = vst [vmem:[%s1188 + $0x258] sm:$0xff] %v1243
                %v1245 = vld [vmem:[%s1187 + $0xe0] sm:$0xff]
                %1246 = vst [vmem:[%s1188 + $0x260] sm:$0xff] %v1245
                %v1247 = vld [vmem:[%s1187 + $0xe8] sm:$0xff]
                %1248 = vst [vmem:[%s1188 + $0x268] sm:$0xff] %v1247
                %v1249 = vld [vmem:[%s1187 + $0xf0] sm:$0xff]
                %1250 = vst [vmem:[%s1188 + $0x270] sm:$0xff] %v1249
                %v1251 = vld [vmem:[%s1187 + $0xf8] sm:$0xff]
                %1252 = vst [vmem:[%s1188 + $0x278] sm:$0xff] %v1251
                %v1253 = vld [vmem:[%s1187 + $0x100] sm:$0xff]
                %1254 = vst [vmem:[%s1188 + $0x400] sm:$0xff] %v1253
                %v1255 = vld [vmem:[%s1187 + $0x108] sm:$0xff]
                %1256 = vst [vmem:[%s1188 + $0x408] sm:$0xff] %v1255
                %v1257 = vld [vmem:[%s1187 + $0x110] sm:$0xff]
                %1258 = vst [vmem:[%s1188 + $0x410] sm:$0xff] %v1257
                %v1259 = vld [vmem:[%s1187 + $0x118] sm:$0xff]
                %1260 = vst [vmem:[%s1188 + $0x418] sm:$0xff] %v1259
                %v1261 = vld [vmem:[%s1187 + $0x120] sm:$0xff]
                %1262 = vst [vmem:[%s1188 + $0x420] sm:$0xff] %v1261
                %v1263 = vld [vmem:[%s1187 + $0x128] sm:$0xff]
                %1264 = vst [vmem:[%s1188 + $0x428] sm:$0xff] %v1263
                %v1265 = vld [vmem:[%s1187 + $0x130] sm:$0xff]
                %1266 = vst [vmem:[%s1188 + $0x430] sm:$0xff] %v1265
                %v1267 = vld [vmem:[%s1187 + $0x138] sm:$0xff]
                %1268 = vst [vmem:[%s1188 + $0x438] sm:$0xff] %v1267
                %v1269 = vld [vmem:[%s1187 + $0x140] sm:$0xff]
                %1270 = vst [vmem:[%s1188 + $0x440] sm:$0xff] %v1269
                %v1271 = vld [vmem:[%s1187 + $0x148] sm:$0xff]
                %1272 = vst [vmem:[%s1188 + $0x448] sm:$0xff] %v1271
                %v1273 = vld [vmem:[%s1187 + $0x150] sm:$0xff]
                %1274 = vst [vmem:[%s1188 + $0x450] sm:$0xff] %v1273
                %v1275 = vld [vmem:[%s1187 + $0x158] sm:$0xff]
                %1276 = vst [vmem:[%s1188 + $0x458] sm:$0xff] %v1275
                %v1277 = vld [vmem:[%s1187 + $0x160] sm:$0xff]
                %1278 = vst [vmem:[%s1188 + $0x460] sm:$0xff] %v1277
                %v1279 = vld [vmem:[%s1187 + $0x168] sm:$0xff]
                %1280 = vst [vmem:[%s1188 + $0x468] sm:$0xff] %v1279
                %v1281 = vld [vmem:[%s1187 + $0x170] sm:$0xff]
                %1282 = vst [vmem:[%s1188 + $0x470] sm:$0xff] %v1281
                %v1283 = vld [vmem:[%s1187 + $0x178] sm:$0xff]
                %1284 = vst [vmem:[%s1188 + $0x478] sm:$0xff] %v1283
              $region103: #{patched_harmonizer_forward.3} parent=97 // loop_footer
                %s1186 = sadd.s32 1, %s1182
              $region104: #{patched_harmonizer_forward.3} parent=97 // loop_footer_branch
                %1181 = sbr.rel target = $region100
              $region105: #{patched_harmonizer_forward.3} parent=97 // loop_exit
                _
            $region98: #{patched_harmonizer_forward.3} parent=93 // pred_fallthru
              _
            // Predicated region
            $region106: #{patched_harmonizer_forward.3} parent=93 // pred_check
              _
            $region107: #{patched_harmonizer_forward.3} parent=93 // pred_check_branch
              %1286 = sbr.rel target = $region109
            $region108: #{patched_harmonizer_forward.3} parent=93 // pred_region
              _
            $region109: #{patched_harmonizer_forward.3} parent=93 // pred_fallthru
              _
          $region94: #{patched_harmonizer_forward.3} parent=89 // pred_fallthru
            _
          %1287 = vnop
        $region90: #{patched_harmonizer_forward.3} parent=77 // pred_fallthru
          _
        // Predicated region
        $region110: #{patched_harmonizer_forward.3} parent=77 // pred_check
          %p1288 = pneg %p214
        $region111: #{patched_harmonizer_forward.3} parent=77 // pred_check_branch
          %1290 = sbr.rel (%p1288) target = $region113
        $region112: #{patched_harmonizer_forward.3} parent=77 // pred_region
          %s1291 = smul.u32 4, %s23
          %s1292 = smul.addr %s1291, 4
          %s1293 = smul.addr %s22, 192
          %s1294 = sadd.s32 %s1292, %s1293
          %s1295 = smul.addr %s1294, 8
          %s1296 = scalar_lea.vmem %s6, %s1295
          // Predicated region
          $region114: #{patched_harmonizer_forward.3} parent=112 // pred_check
            _
          $region115: #{patched_harmonizer_forward.3} parent=112 // pred_check_branch
            %1298 = sbr.rel (0) target = $region117
          $region116: #{patched_harmonizer_forward.3} parent=112 // pred_region
            // Predicated region
            $region118: #{patched_harmonizer_forward.3} parent=116 // pred_check
              _
            $region119: #{patched_harmonizer_forward.3} parent=116 // pred_check_branch
              %1300 = sbr.rel (0) target = $region121
            $region120: #{patched_harmonizer_forward.3} parent=116 // pred_region
              loop: start=0, step=1, limit=1
              $region122: #{patched_harmonizer_forward.3} parent=120 // loop_pre_header
                _
              $region123: #{patched_harmonizer_forward.3} parent=120 // loop_header
                %s1302 = sphi 0, %s1306
                %p1303 = scmp.ge.s32.totalorder %s1302, 1
                %s1307 = sphi %s1167, %s1167
                %s1308 = sphi %s1296, %s1296
              $region124: #{patched_harmonizer_forward.3} parent=120 // loop_header_branch
                %1305 = sbr.rel (%p1303) target = $region128
              $region125: #{patched_harmonizer_forward.3} parent=120 // loop_body
                %v1309 = vld [vmem:[%s1307] sm:$0xff]
                %1310 = vst [vmem:[%s1308] sm:$0xff] %v1309
                %v1311 = vld [vmem:[%s1307 + $0x8] sm:$0xff]
                %1312 = vst [vmem:[%s1308 + $0x8] sm:$0xff] %v1311
                %v1313 = vld [vmem:[%s1307 + $0x10] sm:$0xff]
                %1314 = vst [vmem:[%s1308 + $0x10] sm:$0xff] %v1313
                %v1315 = vld [vmem:[%s1307 + $0x18] sm:$0xff]
                %1316 = vst [vmem:[%s1308 + $0x18] sm:$0xff] %v1315
                %v1317 = vld [vmem:[%s1307 + $0x20] sm:$0xff]
                %1318 = vst [vmem:[%s1308 + $0x20] sm:$0xff] %v1317
                %v1319 = vld [vmem:[%s1307 + $0x28] sm:$0xff]
                %1320 = vst [vmem:[%s1308 + $0x28] sm:$0xff] %v1319
                %v1321 = vld [vmem:[%s1307 + $0x30] sm:$0xff]
                %1322 = vst [vmem:[%s1308 + $0x30] sm:$0xff] %v1321
                %v1323 = vld [vmem:[%s1307 + $0x38] sm:$0xff]
                %1324 = vst [vmem:[%s1308 + $0x38] sm:$0xff] %v1323
                %v1325 = vld [vmem:[%s1307 + $0x40] sm:$0xff]
                %1326 = vst [vmem:[%s1308 + $0x40] sm:$0xff] %v1325
                %v1327 = vld [vmem:[%s1307 + $0x48] sm:$0xff]
                %1328 = vst [vmem:[%s1308 + $0x48] sm:$0xff] %v1327
                %v1329 = vld [vmem:[%s1307 + $0x50] sm:$0xff]
                %1330 = vst [vmem:[%s1308 + $0x50] sm:$0xff] %v1329
                %v1331 = vld [vmem:[%s1307 + $0x58] sm:$0xff]
                %1332 = vst [vmem:[%s1308 + $0x58] sm:$0xff] %v1331
                %v1333 = vld [vmem:[%s1307 + $0x60] sm:$0xff]
                %1334 = vst [vmem:[%s1308 + $0x60] sm:$0xff] %v1333
                %v1335 = vld [vmem:[%s1307 + $0x68] sm:$0xff]
                %1336 = vst [vmem:[%s1308 + $0x68] sm:$0xff] %v1335
                %v1337 = vld [vmem:[%s1307 + $0x70] sm:$0xff]
                %1338 = vst [vmem:[%s1308 + $0x70] sm:$0xff] %v1337
                %v1339 = vld [vmem:[%s1307 + $0x78] sm:$0xff]
                %1340 = vst [vmem:[%s1308 + $0x78] sm:$0xff] %v1339
                %v1341 = vld [vmem:[%s1307 + $0x80] sm:$0xff]
                %1342 = vst [vmem:[%s1308 + $0x200] sm:$0xff] %v1341
                %v1343 = vld [vmem:[%s1307 + $0x88] sm:$0xff]
                %1344 = vst [vmem:[%s1308 + $0x208] sm:$0xff] %v1343
                %v1345 = vld [vmem:[%s1307 + $0x90] sm:$0xff]
                %1346 = vst [vmem:[%s1308 + $0x210] sm:$0xff] %v1345
                %v1347 = vld [vmem:[%s1307 + $0x98] sm:$0xff]
                %1348 = vst [vmem:[%s1308 + $0x218] sm:$0xff] %v1347
                %v1349 = vld [vmem:[%s1307 + $0xa0] sm:$0xff]
                %1350 = vst [vmem:[%s1308 + $0x220] sm:$0xff] %v1349
                %v1351 = vld [vmem:[%s1307 + $0xa8] sm:$0xff]
                %1352 = vst [vmem:[%s1308 + $0x228] sm:$0xff] %v1351
                %v1353 = vld [vmem:[%s1307 + $0xb0] sm:$0xff]
                %1354 = vst [vmem:[%s1308 + $0x230] sm:$0xff] %v1353
                %v1355 = vld [vmem:[%s1307 + $0xb8] sm:$0xff]
                %1356 = vst [vmem:[%s1308 + $0x238] sm:$0xff] %v1355
                %v1357 = vld [vmem:[%s1307 + $0xc0] sm:$0xff]
                %1358 = vst [vmem:[%s1308 + $0x240] sm:$0xff] %v1357
                %v1359 = vld [vmem:[%s1307 + $0xc8] sm:$0xff]
                %1360 = vst [vmem:[%s1308 + $0x248] sm:$0xff] %v1359
                %v1361 = vld [vmem:[%s1307 + $0xd0] sm:$0xff]
                %1362 = vst [vmem:[%s1308 + $0x250] sm:$0xff] %v1361
                %v1363 = vld [vmem:[%s1307 + $0xd8] sm:$0xff]
                %1364 = vst [vmem:[%s1308 + $0x258] sm:$0xff] %v1363
                %v1365 = vld [vmem:[%s1307 + $0xe0] sm:$0xff]
                %1366 = vst [vmem:[%s1308 + $0x260] sm:$0xff] %v1365
                %v1367 = vld [vmem:[%s1307 + $0xe8] sm:$0xff]
                %1368 = vst [vmem:[%s1308 + $0x268] sm:$0xff] %v1367
                %v1369 = vld [vmem:[%s1307 + $0xf0] sm:$0xff]
                %1370 = vst [vmem:[%s1308 + $0x270] sm:$0xff] %v1369
                %v1371 = vld [vmem:[%s1307 + $0xf8] sm:$0xff]
                %1372 = vst [vmem:[%s1308 + $0x278] sm:$0xff] %v1371
                %v1373 = vld [vmem:[%s1307 + $0x100] sm:$0xff]
                %1374 = vst [vmem:[%s1308 + $0x400] sm:$0xff] %v1373
                %v1375 = vld [vmem:[%s1307 + $0x108] sm:$0xff]
                %1376 = vst [vmem:[%s1308 + $0x408] sm:$0xff] %v1375
                %v1377 = vld [vmem:[%s1307 + $0x110] sm:$0xff]
                %1378 = vst [vmem:[%s1308 + $0x410] sm:$0xff] %v1377
                %v1379 = vld [vmem:[%s1307 + $0x118] sm:$0xff]
                %1380 = vst [vmem:[%s1308 + $0x418] sm:$0xff] %v1379
                %v1381 = vld [vmem:[%s1307 + $0x120] sm:$0xff]
                %1382 = vst [vmem:[%s1308 + $0x420] sm:$0xff] %v1381
                %v1383 = vld [vmem:[%s1307 + $0x128] sm:$0xff]
                %1384 = vst [vmem:[%s1308 + $0x428] sm:$0xff] %v1383
                %v1385 = vld [vmem:[%s1307 + $0x130] sm:$0xff]
                %1386 = vst [vmem:[%s1308 + $0x430] sm:$0xff] %v1385
                %v1387 = vld [vmem:[%s1307 + $0x138] sm:$0xff]
                %1388 = vst [vmem:[%s1308 + $0x438] sm:$0xff] %v1387
                %v1389 = vld [vmem:[%s1307 + $0x140] sm:$0xff]
                %1390 = vst [vmem:[%s1308 + $0x440] sm:$0xff] %v1389
                %v1391 = vld [vmem:[%s1307 + $0x148] sm:$0xff]
                %1392 = vst [vmem:[%s1308 + $0x448] sm:$0xff] %v1391
                %v1393 = vld [vmem:[%s1307 + $0x150] sm:$0xff]
                %1394 = vst [vmem:[%s1308 + $0x450] sm:$0xff] %v1393
                %v1395 = vld [vmem:[%s1307 + $0x158] sm:$0xff]
                %1396 = vst [vmem:[%s1308 + $0x458] sm:$0xff] %v1395
                %v1397 = vld [vmem:[%s1307 + $0x160] sm:$0xff]
                %1398 = vst [vmem:[%s1308 + $0x460] sm:$0xff] %v1397
                %v1399 = vld [vmem:[%s1307 + $0x168] sm:$0xff]
                %1400 = vst [vmem:[%s1308 + $0x468] sm:$0xff] %v1399
                %v1401 = vld [vmem:[%s1307 + $0x170] sm:$0xff]
                %1402 = vst [vmem:[%s1308 + $0x470] sm:$0xff] %v1401
                %v1403 = vld [vmem:[%s1307 + $0x178] sm:$0xff]
                %1404 = vst [vmem:[%s1308 + $0x478] sm:$0xff] %v1403
              $region126: #{patched_harmonizer_forward.3} parent=120 // loop_footer
                %s1306 = sadd.s32 1, %s1302
              $region127: #{patched_harmonizer_forward.3} parent=120 // loop_footer_branch
                %1301 = sbr.rel target = $region123
              $region128: #{patched_harmonizer_forward.3} parent=120 // loop_exit
                _
            $region121: #{patched_harmonizer_forward.3} parent=116 // pred_fallthru
              _
            // Predicated region
            $region129: #{patched_harmonizer_forward.3} parent=116 // pred_check
              _
            $region130: #{patched_harmonizer_forward.3} parent=116 // pred_check_branch
              %1406 = sbr.rel target = $region132
            $region131: #{patched_harmonizer_forward.3} parent=116 // pred_region
              _
            $region132: #{patched_harmonizer_forward.3} parent=116 // pred_fallthru
              _
          $region117: #{patched_harmonizer_forward.3} parent=112 // pred_fallthru
            _
          %1407 = vnop
        $region113: #{patched_harmonizer_forward.3} parent=77 // pred_fallthru
          _
      $region78: #{patched_harmonizer_forward.3} parent=5 // pred_fallthru
        _
      %p1408 = scmp.le.s32.totalorder 2, %s13
      // Predicated region
      $region133: #{patched_harmonizer_forward.3} parent=5 // pred_check
        %p1409 = pneg %p1408
      $region134: #{patched_harmonizer_forward.3} parent=5 // pred_check_branch
        %1411 = sbr.rel (%p1409) target = $region136
      $region135: #{patched_harmonizer_forward.3} parent=5 // pred_region
        %s1412 = ssub.s32 %s13, 2
        // Predicated region
        $region137: #{patched_harmonizer_forward.3} parent=135 // pred_check
          %p1413 = pneg %p192
        $region138: #{patched_harmonizer_forward.3} parent=135 // pred_check_branch
          %1415 = sbr.rel (%p1413) target = $region140
        $region139: #{patched_harmonizer_forward.3} parent=135 // pred_region
          %s1416 = sand.u32 %s177, 1
          %s1417 = sand.u32 %s177, 1
          %s1418 = smul.addr %s1417, 384
          %s1419 = scalar_lea.vmem [#allocation4], %s1418
        $region140: #{patched_harmonizer_forward.3} parent=135 // pred_fallthru
          _
        // Predicated region
        $region141: #{patched_harmonizer_forward.3} parent=135 // pred_check
          %p1420 = pneg %p220
        $region142: #{patched_harmonizer_forward.3} parent=135 // pred_check_branch
          %1422 = sbr.rel (%p1420) target = $region144
        $region143: #{patched_harmonizer_forward.3} parent=135 // pred_region
          %s1423 = sand.u32 %s205, 1
          %s1424 = sand.u32 %s205, 1
          %s1425 = smul.addr %s1424, 384
          %s1426 = scalar_lea.vmem [#allocation5], %s1425
        $region144: #{patched_harmonizer_forward.3} parent=135 // pred_fallthru
          _
      $region136: #{patched_harmonizer_forward.3} parent=5 // pred_fallthru
        _
    $region6: #{patched_harmonizer_forward.3} parent=1 // loop_footer
      %s17 = sadd.s32 1, %s13
    $region7: #{patched_harmonizer_forward.3} parent=1 // loop_footer_branch
      %12 = sbr.rel target = $region3
    $region8: #{patched_harmonizer_forward.3} parent=1 // loop_exit
      _

</llo_original>
